<compile_context>
chip_gen: v6e
topology: v6e:2x2x1
jax: 0.10.0
libtpu: 0.0.40
codegen_flags: <defaults>
</compile_context>

<pallas_src>
import functools

import numpy as np
import jax
import jax.numpy as jnp
from jax import lax
from jax.experimental import pallas as pl
from jax.experimental.pallas import tpu as pltpu

_VMEM = pl.BlockSpec(memory_space=pltpu.MemorySpace.VMEM)

H = W = 4
HW = H * W            # 16 spatial positions
CIN = 5               # input channels
CC = 7                # conv channels
LANES = 128
OUT_ROWS = 8          # rows of the head/output tiles (supports batch <= 8)
NTAPS = 9             # 3x3 taps, t = (dh+1)*3 + (dw+1)
NGROUPS = 16          # channel-replication lane groups (7*16 = 112 lanes)


# ------------------------------ fused kernel ---------------------------------

def fused_cnn_kernel(x_ref, shift_ref, sel_ref, wconv_ref, bconv_ref,
                     w1_ref, w2_ref, w3_ref, w4_ref, hb_ref, out_ref, *, rows):
    f32, bf16 = jnp.float32, jnp.bfloat16
    lane_r = lax.broadcasted_iota(jnp.int32, (rows, LANES), 1)
    lane_o = lax.broadcasted_iota(jnp.int32, (OUT_ROWS, LANES), 1)

    # --- three 3x3 "same" convs, each ending in ONE bf16 MXU matmul ---------
    # im2col LHS: lane 7*t + ci holds the tap-t-shifted, border-masked input
    # channel ci.  shift_ref[t] is a constant 0/1 [rows, rows] matrix encoding
    # both the spatial shift and the padding/border validity of tap t.
    act = x_ref[...]                                        # [rows, 128] f32
    for layer in range(3):
        actb = act.astype(bf16)
        packed = jnp.zeros((rows, LANES), f32)
        for t in range(NTAPS):
            sh = jnp.dot(shift_ref[t], actb, preferred_element_type=f32)
            keep = (lane_r >= CC * t) & (lane_r < CC * (t + 1))
            packed = packed + jnp.where(keep, sh, 0.0)
        y = jnp.dot(packed.astype(bf16), wconv_ref[layer],
                    preferred_element_type=f32)
        act = jnp.maximum(y + bconv_ref[layer:layer + 1, :], 0.0)

    # --- flatten (torch NCHW feature order is folded into the W1 packing) ---
    # compact[8*s + b, :] = act3[16*b + s, :]   (one tiny selection matmul)
    compact = jnp.dot(sel_ref[...], act.astype(bf16),
                      preferred_element_type=f32)           # [128, 128]
    xflat = jnp.zeros((OUT_ROWS, LANES), f32)
    for s in range(HW):
        keep = (lane_o >= CC * s) & (lane_o < CC * (s + 1))
        xflat = xflat + jnp.where(keep, compact[8 * s:8 * s + 8, :], 0.0)

    # --- fused policy|value MLP ----------------------------------------------
    h = jnp.dot(xflat.astype(bf16), w1_ref[...], preferred_element_type=f32)
    h = jnp.maximum(h + hb_ref[0:1, :], 0.0)                # [8, 256]
    h = jnp.dot(h.astype(bf16), w2_ref[...], preferred_element_type=f32)
    h = jnp.maximum(h + hb_ref[1:2, 0:LANES], 0.0)          # [8, 128]
    h = jnp.dot(h.astype(bf16), w3_ref[...], preferred_element_type=f32)
    h = jnp.maximum(h + hb_ref[2:3, 0:LANES], 0.0)          # [8, 128]
    z = jnp.dot(h.astype(bf16), w4_ref[...], preferred_element_type=f32)
    z = z + hb_ref[3:4, 0:LANES]                            # [8, 128]

    # policy softmax over lanes 0..5; value = relu(z[:, 64])
    logits = jnp.where(lane_o < 6, z, -1e30)
    m = jnp.max(logits, axis=1, keepdims=True)
    e = jnp.exp(logits - m)
    denom = jnp.sum(e, axis=1, keepdims=True)
    probs = e / denom
    out_ref[...] = jnp.where(lane_o < 6, probs, jnp.maximum(z, 0.0))


# -------------------------- constant matrix builders -------------------------

def _build_shift_mats(rows):
    """S[t, r, r'] = 1 iff tap t at output row r reads input row r' (valid)."""
    S = np.zeros((NTAPS, rows, rows), np.float32)
    t = 0
    for dh in (-1, 0, 1):
        for dw in (-1, 0, 1):
            off = dh * W + dw
            for r in range(rows):
                sp = r % HW
                hh, ww = sp // W, sp % W
                if 0 <= hh + dh < H and 0 <= ww + dw < W:
                    S[t, r, r + off] = 1.0
            t += 1
    return S


def _build_sel(rows, batch):
    """sel[8*s + b, 16*b + s] = 1  (row-compaction for the flatten)."""
    Sm = np.zeros((LANES, rows), np.float32)
    for s in range(HW):
        for b in range(batch):
            Sm[8 * s + b, HW * b + s] = 1.0
    return Sm


# ------------------------------ JAX wrapper -----------------------------------

def cnn_forward(x, packed):
    """Equivalent of CNN.forward -> (action_probs [B, 6], state_value [B, 1])."""
    wconv, bconv, w1, w2, w3, w4, hb = packed
    B, C, Hi, Wi = x.shape
    assert Hi == H and Wi == W and C == CIN and 1 <= B <= OUT_ROWS
    rows = B * HW

    # input tile: row = b*16 + h*4 + w, channels replicated at lane groups
    # 7*g + c so every conv tap can read its own lane group.
    xr = jnp.transpose(x, (0, 2, 3, 1)).reshape(rows, C).astype(jnp.float32)
    blk = jnp.zeros((rows, CC), jnp.float32).at[:, :C].set(xr)     # [rows, 7]
    rep = jnp.tile(blk, (1, NTAPS))                                # [rows, 63]
    x_in = jnp.zeros((rows, LANES), jnp.float32).at[:, :CC * NTAPS].set(rep)

    shifts = jnp.asarray(_build_shift_mats(rows), jnp.bfloat16)    # [9,rows,rows]
    sel = jnp.asarray(_build_sel(rows, B), jnp.bfloat16)           # [128,rows]

    cost = pl.CostEstimate(
        flops=(2 * NTAPS * 3 * rows * rows * LANES        # im2col shift matmuls
               + 2 * 3 * rows * LANES * LANES             # conv matmuls
               + 2 * LANES * rows * LANES                 # flatten compaction
               + 2 * OUT_ROWS * (128 * 256 + 256 * 128 + 2 * 128 * 128)),
        transcendentals=OUT_ROWS * LANES,
        bytes_accessed=(rows * LANES * 4 + NTAPS * rows * rows * 2
                        + LANES * rows * 2 + 3 * LANES * LANES * 2
                        + 8 * LANES * 4
                        + (128 * 256 + 256 * 128 + 2 * 128 * 128) * 2
                        + 8 * 256 * 4 + OUT_ROWS * LANES * 4))

    out = pl.pallas_call(
        functools.partial(fused_cnn_kernel, rows=rows),
        out_shape=jax.ShapeDtypeStruct((OUT_ROWS, LANES), jnp.float32),
        in_specs=[_VMEM] * 10,
        out_specs=_VMEM,
        cost_estimate=cost,
    )(x_in, shifts, sel, wconv, bconv, w1, w2, w3, w4, hb)
    return out[:B, :6], out[:B, 64:65]


# ---------------------------- parameter handling ------------------------------

def init_params(key):
    """Deterministic synthetic parameters matching the PyTorch module shapes."""
    def w(k, shape, scale=0.1):
        return scale * jax.random.normal(k, shape, dtype=jnp.float32)

    ks = jax.random.split(key, 21)
    p = {}
    # convs: weight [Cout, Cin, 3, 3], bias [Cout]
    p["c1_w"] = w(ks[0], (7, 5, 3, 3)); p["c1_b"] = w(ks[1], (7,))
    p["c2_w"] = w(ks[2], (7, 7, 3, 3)); p["c2_b"] = w(ks[3], (7,))
    p["c3_w"] = w(ks[4], (7, 7, 3, 3)); p["c3_b"] = w(ks[5], (7,))
    # linear weights stored as [in, out]; biases as [1, out]
    p["p_w1"] = w(ks[6], (112, 80)); p["p_b1"] = w(ks[7], (1, 80))
    p["p_w2"] = w(ks[8], (80, 40));  p["p_b2"] = w(ks[9], (1, 40))
    p["p_w3"] = w(ks[10], (40, 20)); p["p_b3"] = w(ks[11], (1, 20))
    p["p_w4"] = w(ks[12], (20, 6))   # no bias
    p["v_w1"] = w(ks[13], (112, 80)); p["v_b1"] = w(ks[14], (1, 80))
    p["v_w2"] = w(ks[15], (80, 40));  p["v_b2"] = w(ks[16], (1, 40))
    p["v_w3"] = w(ks[17], (40, 20));  p["v_b3"] = w(ks[18], (1, 20))
    p["v_w4"] = w(ks[19], (20, 1));   p["v_b4"] = w(ks[20], (1, 1))
    return p


def pack_params(p):
    """One-time repack of PyTorch-shaped params into compact bf16 VMEM slabs."""
    n = lambda a: np.asarray(a, np.float32)

    # conv slabs: input rows 7*t + ci (tap-packed), output cols replicated at
    # 16 lane groups 7*g + co so downstream stages can read any group.
    wconv = np.zeros((3, LANES, LANES), np.float32)
    bconv = np.zeros((8, LANES), np.float32)
    for li, (wk, bk) in enumerate((("c1_w", "c1_b"), ("c2_w", "c2_b"),
                                   ("c3_w", "c3_b"))):
        cw = n(p[wk])                                   # [cout, cin, 3, 3]
        cout, cin = cw.shape[0], cw.shape[1]
        slab = np.transpose(cw, (2, 3, 1, 0)).reshape(9, cin, cout)  # [t,ci,co]
        for t in range(NTAPS):
            for g in range(NGROUPS):
                wconv[li, CC * t:CC * t + cin, CC * g:CC * g + cout] = slab[t]
        for g in range(NGROUPS):
            bconv[li, CC * g:CC * g + cout] = n(p[bk])

    # first Linear: kernel feature order is 7*s + c, torch flatten is c*16 + s
    perm = np.array([c * 16 + s for s in range(HW) for c in range(CC)],
                    dtype=np.int32)
    w1 = np.zeros((LANES, 256), np.float32)
    w1[:112, 0:80] = n(p["p_w1"])[perm, :]
    w1[:112, 128:208] = n(p["v_w1"])[perm, :]
    # layers 2-4: 128-lane slabs, policy at lanes 0.., value at lanes 64..
    w2 = np.zeros((256, LANES), np.float32)
    w2[0:80, 0:40] = n(p["p_w2"]); w2[128:208, 64:104] = n(p["v_w2"])
    w3 = np.zeros((LANES, LANES), np.float32)
    w3[0:40, 0:20] = n(p["p_w3"]); w3[64:104, 64:84] = n(p["v_w3"])
    w4 = np.zeros((LANES, LANES), np.float32)
    w4[0:20, 0:6] = n(p["p_w4"]); w4[64:84, 64:65] = n(p["v_w4"])
    # biases, one row per layer (policy final layer has no bias)
    hb = np.zeros((8, 256), np.float32)
    hb[0, 0:80] = n(p["p_b1"])[0]; hb[0, 128:208] = n(p["v_b1"])[0]
    hb[1, 0:40] = n(p["p_b2"])[0]; hb[1, 64:104] = n(p["v_b2"])[0]
    hb[2, 0:20] = n(p["p_b3"])[0]; hb[2, 64:84] = n(p["v_b3"])[0]
    hb[3, 64] = n(p["v_b4"])[0, 0]

    bf = jnp.bfloat16
    return (jnp.asarray(wconv, bf), jnp.asarray(bconv, jnp.float32),
            jnp.asarray(w1, bf), jnp.asarray(w2, bf),
            jnp.asarray(w3, bf), jnp.asarray(w4, bf),
            jnp.asarray(hb, jnp.float32))


# ------------------------ pure-JAX reference (XLA) ----------------------------

def ref_forward(x, p):
    """Replica of the PyTorch module using XLA ops, for correctness checking."""
    hi = lax.Precision.HIGHEST

    def conv(h, w, b):
        y = lax.conv_general_dilated(h, w, (1, 1), ((1, 1), (1, 1)),
                                     dimension_numbers=("NCHW", "OIHW", "NCHW"),
                                     precision=hi)
        return jnp.maximum(y + b[None, :, None, None], 0.0)

    h = conv(x, p["c1_w"], p["c1_b"])
    h = conv(h, p["c2_w"], p["c2_b"])
    h = conv(h, p["c3_w"], p["c3_b"])
    f = h.reshape(h.shape[0], -1)          # NCHW flatten == torch nn.Flatten

    def dense(a, w, b=None):
        y = jnp.dot(a, w, precision=hi)
        return y if b is None else y + b

    hp = jnp.maximum(dense(f, p["p_w1"], p["p_b1"]), 0.0)
    hp = jnp.maximum(dense(hp, p["p_w2"], p["p_b2"]), 0.0)
    hp = jnp.maximum(dense(hp, p["p_w3"], p["p_b3"]), 0.0)
    probs = jax.nn.softmax(dense(hp, p["p_w4"]), axis=1)

    hv = jnp.maximum(dense(f, p["v_w1"], p["v_b1"]), 0.0)
    hv = jnp.maximum(dense(hv, p["v_w2"], p["v_b2"]), 0.0)
    hv = jnp.maximum(dense(hv, p["v_w3"], p["v_b3"]), 0.0)
    val = jnp.maximum(dense(hv, p["v_w4"], p["v_b4"]), 0.0)
    return probs, val


# ----------------------------------- main -------------------------------------

if __name__ == "__main__":
    key = jax.random.PRNGKey(0)
    k_params, k_x = jax.random.split(key)
    params = init_params(k_params)
    packed = pack_params(params)          # one-time weight repack (outside jit)

    # input matches the module: [B, 5, 4, 4] (flatten gives 4*4*7 = 112)
    x = jax.random.normal(k_x, (2, 5, 4, 4), dtype=jnp.float32)

    fwd = jax.jit(cnn_forward)
    action_probs, state_value = fwd(x, packed)
    jax.block_until_ready((action_probs, state_value))

    assert action_probs.shape == (2, 6)
    assert state_value.shape == (2, 1)
    # softmax rows must sum to 1
    assert bool(jnp.all(jnp.abs(jnp.sum(action_probs, axis=1) - 1.0) < 1e-3))

    # numerical check against a pure-JAX replica of the PyTorch module
    # (bf16 MXU operands with f32 accumulation -> tolerance 2e-2)
    ref_probs, ref_val = ref_forward(x, params)
    assert bool(jnp.allclose(action_probs, ref_probs, atol=2e-2, rtol=2e-2))
    assert bool(jnp.allclose(state_value, ref_val, atol=2e-2, rtol=2e-2))

    print("KERNEL_OK")
</pallas_src>

<mosaic_0001>
module attributes {stable_mosaic.version = 11 : i64} {
  func.func @fused_cnn_kernel(%arg0: memref<32x128xf32, #tpu.memory_space<vmem>>, %arg1: memref<9x32x32xbf16, #tpu.memory_space<vmem>>, %arg2: memref<128x32xbf16, #tpu.memory_space<vmem>>, %arg3: memref<3x128x128xbf16, #tpu.memory_space<vmem>>, %arg4: memref<8x128xf32, #tpu.memory_space<vmem>>, %arg5: memref<128x256xbf16, #tpu.memory_space<vmem>>, %arg6: memref<256x128xbf16, #tpu.memory_space<vmem>>, %arg7: memref<128x128xbf16, #tpu.memory_space<vmem>>, %arg8: memref<128x128xbf16, #tpu.memory_space<vmem>>, %arg9: memref<8x256xf32, #tpu.memory_space<vmem>>, %arg10: memref<8x128xf32, #tpu.memory_space<vmem>>) attributes {dimension_semantics = [], scalar_prefetch = 0 : i64, scratch_operands = 0 : i64, tpu.core_type = #tpu.core_type<tc>} {
    %0 = tpu.iota {dimensions = array<i32: 1>} : vector<32x128xi32>
    %1 = tpu.iota {dimensions = array<i32: 1>} : vector<8x128xi32>
    %c0 = arith.constant 0 : index
    %c0_0 = arith.constant 0 : index
    %2 = vector.load %arg0[%c0, %c0_0] : memref<32x128xf32, #tpu.memory_space<vmem>>, vector<32x128xf32>
    %3 = arith.truncf %2 : vector<32x128xf32> to vector<32x128xbf16>
    %cst = arith.constant 0.000000e+00 : f32
    %4 = vector.broadcast %cst : f32 to vector<32x128xf32>
    %c0_1 = arith.constant 0 : index
    %c0_2 = arith.constant 0 : index
    %c0_3 = arith.constant 0 : index
    %5 = vector.load %arg1[%c0_1, %c0_2, %c0_3] : memref<9x32x32xbf16, #tpu.memory_space<vmem>>, vector<1x32x32xbf16>
    %6 = vector.shape_cast %5 : vector<1x32x32xbf16> to vector<32x32xbf16>
    %cst_4 = arith.constant dense<0.000000e+00> : vector<32x128xf32>
    %7 = tpu.matmul %6, %3, %cst_4 {dimension_numbers = #tpu.dot_dimension_numbers<[1], [0], [0], [1], [0, 0, 1, 1], [], []>} : vector<32x32xbf16>, vector<32x128xbf16>, vector<32x128xf32> -> vector<32x128xf32>
    %c0_i32 = arith.constant 0 : i32
    %8 = vector.broadcast %c0_i32 : i32 to vector<32x128xi32>
    %9 = arith.cmpi sge, %0, %8 : vector<32x128xi32>
    %c7_i32 = arith.constant 7 : i32
    %10 = vector.broadcast %c7_i32 : i32 to vector<32x128xi32>
    %11 = arith.cmpi slt, %0, %10 : vector<32x128xi32>
    %12 = arith.andi %9, %11 : vector<32x128xi1>
    %cst_5 = arith.constant 0.000000e+00 : f32
    %13 = vector.broadcast %cst_5 : f32 to vector<32x128xf32>
    %14 = arith.select %12, %7, %13 : vector<32x128xi1>, vector<32x128xf32>
    %15 = arith.addf %4, %14 : vector<32x128xf32>
    %c1 = arith.constant 1 : index
    %c0_6 = arith.constant 0 : index
    %c0_7 = arith.constant 0 : index
    %16 = vector.load %arg1[%c1, %c0_6, %c0_7] : memref<9x32x32xbf16, #tpu.memory_space<vmem>>, vector<1x32x32xbf16>
    %17 = vector.shape_cast %16 : vector<1x32x32xbf16> to vector<32x32xbf16>
    %cst_8 = arith.constant dense<0.000000e+00> : vector<32x128xf32>
    %18 = tpu.matmul %17, %3, %cst_8 {dimension_numbers = #tpu.dot_dimension_numbers<[1], [0], [0], [1], [0, 0, 1, 1], [], []>} : vector<32x32xbf16>, vector<32x128xbf16>, vector<32x128xf32> -> vector<32x128xf32>
    %c7_i32_9 = arith.constant 7 : i32
    %19 = vector.broadcast %c7_i32_9 : i32 to vector<32x128xi32>
    %20 = arith.cmpi sge, %0, %19 : vector<32x128xi32>
    %c14_i32 = arith.constant 14 : i32
    %21 = vector.broadcast %c14_i32 : i32 to vector<32x128xi32>
    %22 = arith.cmpi slt, %0, %21 : vector<32x128xi32>
    %23 = arith.andi %20, %22 : vector<32x128xi1>
    %cst_10 = arith.constant 0.000000e+00 : f32
    %24 = vector.broadcast %cst_10 : f32 to vector<32x128xf32>
    %25 = arith.select %23, %18, %24 : vector<32x128xi1>, vector<32x128xf32>
    %26 = arith.addf %15, %25 : vector<32x128xf32>
    %c2 = arith.constant 2 : index
    %c0_11 = arith.constant 0 : index
    %c0_12 = arith.constant 0 : index
    %27 = vector.load %arg1[%c2, %c0_11, %c0_12] : memref<9x32x32xbf16, #tpu.memory_space<vmem>>, vector<1x32x32xbf16>
    %28 = vector.shape_cast %27 : vector<1x32x32xbf16> to vector<32x32xbf16>
    %cst_13 = arith.constant dense<0.000000e+00> : vector<32x128xf32>
    %29 = tpu.matmul %28, %3, %cst_13 {dimension_numbers = #tpu.dot_dimension_numbers<[1], [0], [0], [1], [0, 0, 1, 1], [], []>} : vector<32x32xbf16>, vector<32x128xbf16>, vector<32x128xf32> -> vector<32x128xf32>
    %c14_i32_14 = arith.constant 14 : i32
    %30 = vector.broadcast %c14_i32_14 : i32 to vector<32x128xi32>
    %31 = arith.cmpi sge, %0, %30 : vector<32x128xi32>
    %c21_i32 = arith.constant 21 : i32
    %32 = vector.broadcast %c21_i32 : i32 to vector<32x128xi32>
    %33 = arith.cmpi slt, %0, %32 : vector<32x128xi32>
    %34 = arith.andi %31, %33 : vector<32x128xi1>
    %cst_15 = arith.constant 0.000000e+00 : f32
    %35 = vector.broadcast %cst_15 : f32 to vector<32x128xf32>
    %36 = arith.select %34, %29, %35 : vector<32x128xi1>, vector<32x128xf32>
    %37 = arith.addf %26, %36 : vector<32x128xf32>
    %c3 = arith.constant 3 : index
    %c0_16 = arith.constant 0 : index
    %c0_17 = arith.constant 0 : index
    %38 = vector.load %arg1[%c3, %c0_16, %c0_17] : memref<9x32x32xbf16, #tpu.memory_space<vmem>>, vector<1x32x32xbf16>
    %39 = vector.shape_cast %38 : vector<1x32x32xbf16> to vector<32x32xbf16>
    %cst_18 = arith.constant dense<0.000000e+00> : vector<32x128xf32>
    %40 = tpu.matmul %39, %3, %cst_18 {dimension_numbers = #tpu.dot_dimension_numbers<[1], [0], [0], [1], [0, 0, 1, 1], [], []>} : vector<32x32xbf16>, vector<32x128xbf16>, vector<32x128xf32> -> vector<32x128xf32>
    %c21_i32_19 = arith.constant 21 : i32
    %41 = vector.broadcast %c21_i32_19 : i32 to vector<32x128xi32>
    %42 = arith.cmpi sge, %0, %41 : vector<32x128xi32>
    %c28_i32 = arith.constant 28 : i32
    %43 = vector.broadcast %c28_i32 : i32 to vector<32x128xi32>
    %44 = arith.cmpi slt, %0, %43 : vector<32x128xi32>
    %45 = arith.andi %42, %44 : vector<32x128xi1>
    %cst_20 = arith.constant 0.000000e+00 : f32
    %46 = vector.broadcast %cst_20 : f32 to vector<32x128xf32>
    %47 = arith.select %45, %40, %46 : vector<32x128xi1>, vector<32x128xf32>
    %48 = arith.addf %37, %47 : vector<32x128xf32>
    %c4 = arith.constant 4 : index
    %c0_21 = arith.constant 0 : index
    %c0_22 = arith.constant 0 : index
    %49 = vector.load %arg1[%c4, %c0_21, %c0_22] : memref<9x32x32xbf16, #tpu.memory_space<vmem>>, vector<1x32x32xbf16>
    %50 = vector.shape_cast %49 : vector<1x32x32xbf16> to vector<32x32xbf16>
    %cst_23 = arith.constant dense<0.000000e+00> : vector<32x128xf32>
    %51 = tpu.matmul %50, %3, %cst_23 {dimension_numbers = #tpu.dot_dimension_numbers<[1], [0], [0], [1], [0, 0, 1, 1], [], []>} : vector<32x32xbf16>, vector<32x128xbf16>, vector<32x128xf32> -> vector<32x128xf32>
    %c28_i32_24 = arith.constant 28 : i32
    %52 = vector.broadcast %c28_i32_24 : i32 to vector<32x128xi32>
    %53 = arith.cmpi sge, %0, %52 : vector<32x128xi32>
    %c35_i32 = arith.constant 35 : i32
    %54 = vector.broadcast %c35_i32 : i32 to vector<32x128xi32>
    %55 = arith.cmpi slt, %0, %54 : vector<32x128xi32>
    %56 = arith.andi %53, %55 : vector<32x128xi1>
    %cst_25 = arith.constant 0.000000e+00 : f32
    %57 = vector.broadcast %cst_25 : f32 to vector<32x128xf32>
    %58 = arith.select %56, %51, %57 : vector<32x128xi1>, vector<32x128xf32>
    %59 = arith.addf %48, %58 : vector<32x128xf32>
    %c5 = arith.constant 5 : index
    %c0_26 = arith.constant 0 : index
    %c0_27 = arith.constant 0 : index
    %60 = vector.load %arg1[%c5, %c0_26, %c0_27] : memref<9x32x32xbf16, #tpu.memory_space<vmem>>, vector<1x32x32xbf16>
    %61 = vector.shape_cast %60 : vector<1x32x32xbf16> to vector<32x32xbf16>
    %cst_28 = arith.constant dense<0.000000e+00> : vector<32x128xf32>
    %62 = tpu.matmul %61, %3, %cst_28 {dimension_numbers = #tpu.dot_dimension_numbers<[1], [0], [0], [1], [0, 0, 1, 1], [], []>} : vector<32x32xbf16>, vector<32x128xbf16>, vector<32x128xf32> -> vector<32x128xf32>
    %c35_i32_29 = arith.constant 35 : i32
    %63 = vector.broadcast %c35_i32_29 : i32 to vector<32x128xi32>
    %64 = arith.cmpi sge, %0, %63 : vector<32x128xi32>
    %c42_i32 = arith.constant 42 : i32
    %65 = vector.broadcast %c42_i32 : i32 to vector<32x128xi32>
    %66 = arith.cmpi slt, %0, %65 : vector<32x128xi32>
    %67 = arith.andi %64, %66 : vector<32x128xi1>
    %cst_30 = arith.constant 0.000000e+00 : f32
    %68 = vector.broadcast %cst_30 : f32 to vector<32x128xf32>
    %69 = arith.select %67, %62, %68 : vector<32x128xi1>, vector<32x128xf32>
    %70 = arith.addf %59, %69 : vector<32x128xf32>
    %c6 = arith.constant 6 : index
    %c0_31 = arith.constant 0 : index
    %c0_32 = arith.constant 0 : index
    %71 = vector.load %arg1[%c6, %c0_31, %c0_32] : memref<9x32x32xbf16, #tpu.memory_space<vmem>>, vector<1x32x32xbf16>
    %72 = vector.shape_cast %71 : vector<1x32x32xbf16> to vector<32x32xbf16>
    %cst_33 = arith.constant dense<0.000000e+00> : vector<32x128xf32>
    %73 = tpu.matmul %72, %3, %cst_33 {dimension_numbers = #tpu.dot_dimension_numbers<[1], [0], [0], [1], [0, 0, 1, 1], [], []>} : vector<32x32xbf16>, vector<32x128xbf16>, vector<32x128xf32> -> vector<32x128xf32>
    %c42_i32_34 = arith.constant 42 : i32
    %74 = vector.broadcast %c42_i32_34 : i32 to vector<32x128xi32>
    %75 = arith.cmpi sge, %0, %74 : vector<32x128xi32>
    %c49_i32 = arith.constant 49 : i32
    %76 = vector.broadcast %c49_i32 : i32 to vector<32x128xi32>
    %77 = arith.cmpi slt, %0, %76 : vector<32x128xi32>
    %78 = arith.andi %75, %77 : vector<32x128xi1>
    %cst_35 = arith.constant 0.000000e+00 : f32
    %79 = vector.broadcast %cst_35 : f32 to vector<32x128xf32>
    %80 = arith.select %78, %73, %79 : vector<32x128xi1>, vector<32x128xf32>
    %81 = arith.addf %70, %80 : vector<32x128xf32>
    %c7 = arith.constant 7 : index
    %c0_36 = arith.constant 0 : index
    %c0_37 = arith.constant 0 : index
    %82 = vector.load %arg1[%c7, %c0_36, %c0_37] : memref<9x32x32xbf16, #tpu.memory_space<vmem>>, vector<1x32x32xbf16>
    %83 = vector.shape_cast %82 : vector<1x32x32xbf16> to vector<32x32xbf16>
    %cst_38 = arith.constant dense<0.000000e+00> : vector<32x128xf32>
    %84 = tpu.matmul %83, %3, %cst_38 {dimension_numbers = #tpu.dot_dimension_numbers<[1], [0], [0], [1], [0, 0, 1, 1], [], []>} : vector<32x32xbf16>, vector<32x128xbf16>, vector<32x128xf32> -> vector<32x128xf32>
    %c49_i32_39 = arith.constant 49 : i32
    %85 = vector.broadcast %c49_i32_39 : i32 to vector<32x128xi32>
    %86 = arith.cmpi sge, %0, %85 : vector<32x128xi32>
    %c56_i32 = arith.constant 56 : i32
    %87 = vector.broadcast %c56_i32 : i32 to vector<32x128xi32>
    %88 = arith.cmpi slt, %0, %87 : vector<32x128xi32>
    %89 = arith.andi %86, %88 : vector<32x128xi1>
    %cst_40 = arith.constant 0.000000e+00 : f32
    %90 = vector.broadcast %cst_40 : f32 to vector<32x128xf32>
    %91 = arith.select %89, %84, %90 : vector<32x128xi1>, vector<32x128xf32>
    %92 = arith.addf %81, %91 : vector<32x128xf32>
    %c8 = arith.constant 8 : index
    %c0_41 = arith.constant 0 : index
    %c0_42 = arith.constant 0 : index
    %93 = vector.load %arg1[%c8, %c0_41, %c0_42] : memref<9x32x32xbf16, #tpu.memory_space<vmem>>, vector<1x32x32xbf16>
    %94 = vector.shape_cast %93 : vector<1x32x32xbf16> to vector<32x32xbf16>
    %cst_43 = arith.constant dense<0.000000e+00> : vector<32x128xf32>
    %95 = tpu.matmul %94, %3, %cst_43 {dimension_numbers = #tpu.dot_dimension_numbers<[1], [0], [0], [1], [0, 0, 1, 1], [], []>} : vector<32x32xbf16>, vector<32x128xbf16>, vector<32x128xf32> -> vector<32x128xf32>
    %c56_i32_44 = arith.constant 56 : i32
    %96 = vector.broadcast %c56_i32_44 : i32 to vector<32x128xi32>
    %97 = arith.cmpi sge, %0, %96 : vector<32x128xi32>
    %c63_i32 = arith.constant 63 : i32
    %98 = vector.broadcast %c63_i32 : i32 to vector<32x128xi32>
    %99 = arith.cmpi slt, %0, %98 : vector<32x128xi32>
    %100 = arith.andi %97, %99 : vector<32x128xi1>
    %cst_45 = arith.constant 0.000000e+00 : f32
    %101 = vector.broadcast %cst_45 : f32 to vector<32x128xf32>
    %102 = arith.select %100, %95, %101 : vector<32x128xi1>, vector<32x128xf32>
    %103 = arith.addf %92, %102 : vector<32x128xf32>
    %104 = arith.truncf %103 : vector<32x128xf32> to vector<32x128xbf16>
    %c0_46 = arith.constant 0 : index
    %c0_47 = arith.constant 0 : index
    %c0_48 = arith.constant 0 : index
    %105 = vector.load %arg3[%c0_46, %c0_47, %c0_48] : memref<3x128x128xbf16, #tpu.memory_space<vmem>>, vector<1x128x128xbf16>
    %106 = vector.shape_cast %105 : vector<1x128x128xbf16> to vector<128x128xbf16>
    %cst_49 = arith.constant dense<0.000000e+00> : vector<32x128xf32>
    %107 = tpu.matmul %104, %106, %cst_49 {dimension_numbers = #tpu.dot_dimension_numbers<[1], [0], [0], [1], [0, 0, 1, 1], [], []>} : vector<32x128xbf16>, vector<128x128xbf16>, vector<32x128xf32> -> vector<32x128xf32>
    %c0_50 = arith.constant 0 : index
    %c0_51 = arith.constant 0 : index
    %108 = vector.load %arg4[%c0_50, %c0_51] : memref<8x128xf32, #tpu.memory_space<vmem>>, vector<1x128xf32>
    %109 = vector.broadcast %108 : vector<1x128xf32> to vector<32x128xf32>
    %110 = arith.addf %107, %109 : vector<32x128xf32>
    %cst_52 = arith.constant 0.000000e+00 : f32
    %111 = vector.broadcast %cst_52 : f32 to vector<32x128xf32>
    %112 = arith.maximumf %110, %111 : vector<32x128xf32>
    %113 = arith.truncf %112 : vector<32x128xf32> to vector<32x128xbf16>
    %cst_53 = arith.constant 0.000000e+00 : f32
    %114 = vector.broadcast %cst_53 : f32 to vector<32x128xf32>
    %c0_54 = arith.constant 0 : index
    %c0_55 = arith.constant 0 : index
    %c0_56 = arith.constant 0 : index
    %115 = vector.load %arg1[%c0_54, %c0_55, %c0_56] : memref<9x32x32xbf16, #tpu.memory_space<vmem>>, vector<1x32x32xbf16>
    %116 = vector.shape_cast %115 : vector<1x32x32xbf16> to vector<32x32xbf16>
    %cst_57 = arith.constant dense<0.000000e+00> : vector<32x128xf32>
    %117 = tpu.matmul %116, %113, %cst_57 {dimension_numbers = #tpu.dot_dimension_numbers<[1], [0], [0], [1], [0, 0, 1, 1], [], []>} : vector<32x32xbf16>, vector<32x128xbf16>, vector<32x128xf32> -> vector<32x128xf32>
    %c0_i32_58 = arith.constant 0 : i32
    %118 = vector.broadcast %c0_i32_58 : i32 to vector<32x128xi32>
    %119 = arith.cmpi sge, %0, %118 : vector<32x128xi32>
    %c7_i32_59 = arith.constant 7 : i32
    %120 = vector.broadcast %c7_i32_59 : i32 to vector<32x128xi32>
    %121 = arith.cmpi slt, %0, %120 : vector<32x128xi32>
    %122 = arith.andi %119, %121 : vector<32x128xi1>
    %cst_60 = arith.constant 0.000000e+00 : f32
    %123 = vector.broadcast %cst_60 : f32 to vector<32x128xf32>
    %124 = arith.select %122, %117, %123 : vector<32x128xi1>, vector<32x128xf32>
    %125 = arith.addf %114, %124 : vector<32x128xf32>
    %c1_61 = arith.constant 1 : index
    %c0_62 = arith.constant 0 : index
    %c0_63 = arith.constant 0 : index
    %126 = vector.load %arg1[%c1_61, %c0_62, %c0_63] : memref<9x32x32xbf16, #tpu.memory_space<vmem>>, vector<1x32x32xbf16>
    %127 = vector.shape_cast %126 : vector<1x32x32xbf16> to vector<32x32xbf16>
    %cst_64 = arith.constant dense<0.000000e+00> : vector<32x128xf32>
    %128 = tpu.matmul %127, %113, %cst_64 {dimension_numbers = #tpu.dot_dimension_numbers<[1], [0], [0], [1], [0, 0, 1, 1], [], []>} : vector<32x32xbf16>, vector<32x128xbf16>, vector<32x128xf32> -> vector<32x128xf32>
    %c7_i32_65 = arith.constant 7 : i32
    %129 = vector.broadcast %c7_i32_65 : i32 to vector<32x128xi32>
    %130 = arith.cmpi sge, %0, %129 : vector<32x128xi32>
    %c14_i32_66 = arith.constant 14 : i32
    %131 = vector.broadcast %c14_i32_66 : i32 to vector<32x128xi32>
    %132 = arith.cmpi slt, %0, %131 : vector<32x128xi32>
    %133 = arith.andi %130, %132 : vector<32x128xi1>
    %cst_67 = arith.constant 0.000000e+00 : f32
    %134 = vector.broadcast %cst_67 : f32 to vector<32x128xf32>
    %135 = arith.select %133, %128, %134 : vector<32x128xi1>, vector<32x128xf32>
    %136 = arith.addf %125, %135 : vector<32x128xf32>
    %c2_68 = arith.constant 2 : index
    %c0_69 = arith.constant 0 : index
    %c0_70 = arith.constant 0 : index
    %137 = vector.load %arg1[%c2_68, %c0_69, %c0_70] : memref<9x32x32xbf16, #tpu.memory_space<vmem>>, vector<1x32x32xbf16>
    %138 = vector.shape_cast %137 : vector<1x32x32xbf16> to vector<32x32xbf16>
    %cst_71 = arith.constant dense<0.000000e+00> : vector<32x128xf32>
    %139 = tpu.matmul %138, %113, %cst_71 {dimension_numbers = #tpu.dot_dimension_numbers<[1], [0], [0], [1], [0, 0, 1, 1], [], []>} : vector<32x32xbf16>, vector<32x128xbf16>, vector<32x128xf32> -> vector<32x128xf32>
    %c14_i32_72 = arith.constant 14 : i32
    %140 = vector.broadcast %c14_i32_72 : i32 to vector<32x128xi32>
    %141 = arith.cmpi sge, %0, %140 : vector<32x128xi32>
    %c21_i32_73 = arith.constant 21 : i32
    %142 = vector.broadcast %c21_i32_73 : i32 to vector<32x128xi32>
    %143 = arith.cmpi slt, %0, %142 : vector<32x128xi32>
    %144 = arith.andi %141, %143 : vector<32x128xi1>
    %cst_74 = arith.constant 0.000000e+00 : f32
    %145 = vector.broadcast %cst_74 : f32 to vector<32x128xf32>
    %146 = arith.select %144, %139, %145 : vector<32x128xi1>, vector<32x128xf32>
    %147 = arith.addf %136, %146 : vector<32x128xf32>
    %c3_75 = arith.constant 3 : index
    %c0_76 = arith.constant 0 : index
    %c0_77 = arith.constant 0 : index
    %148 = vector.load %arg1[%c3_75, %c0_76, %c0_77] : memref<9x32x32xbf16, #tpu.memory_space<vmem>>, vector<1x32x32xbf16>
    %149 = vector.shape_cast %148 : vector<1x32x32xbf16> to vector<32x32xbf16>
    %cst_78 = arith.constant dense<0.000000e+00> : vector<32x128xf32>
    %150 = tpu.matmul %149, %113, %cst_78 {dimension_numbers = #tpu.dot_dimension_numbers<[1], [0], [0], [1], [0, 0, 1, 1], [], []>} : vector<32x32xbf16>, vector<32x128xbf16>, vector<32x128xf32> -> vector<32x128xf32>
    %c21_i32_79 = arith.constant 21 : i32
    %151 = vector.broadcast %c21_i32_79 : i32 to vector<32x128xi32>
    %152 = arith.cmpi sge, %0, %151 : vector<32x128xi32>
    %c28_i32_80 = arith.constant 28 : i32
    %153 = vector.broadcast %c28_i32_80 : i32 to vector<32x128xi32>
    %154 = arith.cmpi slt, %0, %153 : vector<32x128xi32>
    %155 = arith.andi %152, %154 : vector<32x128xi1>
    %cst_81 = arith.constant 0.000000e+00 : f32
    %156 = vector.broadcast %cst_81 : f32 to vector<32x128xf32>
    %157 = arith.select %155, %150, %156 : vector<32x128xi1>, vector<32x128xf32>
    %158 = arith.addf %147, %157 : vector<32x128xf32>
    %c4_82 = arith.constant 4 : index
    %c0_83 = arith.constant 0 : index
    %c0_84 = arith.constant 0 : index
    %159 = vector.load %arg1[%c4_82, %c0_83, %c0_84] : memref<9x32x32xbf16, #tpu.memory_space<vmem>>, vector<1x32x32xbf16>
    %160 = vector.shape_cast %159 : vector<1x32x32xbf16> to vector<32x32xbf16>
    %cst_85 = arith.constant dense<0.000000e+00> : vector<32x128xf32>
    %161 = tpu.matmul %160, %113, %cst_85 {dimension_numbers = #tpu.dot_dimension_numbers<[1], [0], [0], [1], [0, 0, 1, 1], [], []>} : vector<32x32xbf16>, vector<32x128xbf16>, vector<32x128xf32> -> vector<32x128xf32>
    %c28_i32_86 = arith.constant 28 : i32
    %162 = vector.broadcast %c28_i32_86 : i32 to vector<32x128xi32>
    %163 = arith.cmpi sge, %0, %162 : vector<32x128xi32>
    %c35_i32_87 = arith.constant 35 : i32
    %164 = vector.broadcast %c35_i32_87 : i32 to vector<32x128xi32>
    %165 = arith.cmpi slt, %0, %164 : vector<32x128xi32>
    %166 = arith.andi %163, %165 : vector<32x128xi1>
    %cst_88 = arith.constant 0.000000e+00 : f32
    %167 = vector.broadcast %cst_88 : f32 to vector<32x128xf32>
    %168 = arith.select %166, %161, %167 : vector<32x128xi1>, vector<32x128xf32>
    %169 = arith.addf %158, %168 : vector<32x128xf32>
    %c5_89 = arith.constant 5 : index
    %c0_90 = arith.constant 0 : index
    %c0_91 = arith.constant 0 : index
    %170 = vector.load %arg1[%c5_89, %c0_90, %c0_91] : memref<9x32x32xbf16, #tpu.memory_space<vmem>>, vector<1x32x32xbf16>
    %171 = vector.shape_cast %170 : vector<1x32x32xbf16> to vector<32x32xbf16>
    %cst_92 = arith.constant dense<0.000000e+00> : vector<32x128xf32>
    %172 = tpu.matmul %171, %113, %cst_92 {dimension_numbers = #tpu.dot_dimension_numbers<[1], [0], [0], [1], [0, 0, 1, 1], [], []>} : vector<32x32xbf16>, vector<32x128xbf16>, vector<32x128xf32> -> vector<32x128xf32>
    %c35_i32_93 = arith.constant 35 : i32
    %173 = vector.broadcast %c35_i32_93 : i32 to vector<32x128xi32>
    %174 = arith.cmpi sge, %0, %173 : vector<32x128xi32>
    %c42_i32_94 = arith.constant 42 : i32
    %175 = vector.broadcast %c42_i32_94 : i32 to vector<32x128xi32>
    %176 = arith.cmpi slt, %0, %175 : vector<32x128xi32>
    %177 = arith.andi %174, %176 : vector<32x128xi1>
    %cst_95 = arith.constant 0.000000e+00 : f32
    %178 = vector.broadcast %cst_95 : f32 to vector<32x128xf32>
    %179 = arith.select %177, %172, %178 : vector<32x128xi1>, vector<32x128xf32>
    %180 = arith.addf %169, %179 : vector<32x128xf32>
    %c6_96 = arith.constant 6 : index
    %c0_97 = arith.constant 0 : index
    %c0_98 = arith.constant 0 : index
    %181 = vector.load %arg1[%c6_96, %c0_97, %c0_98] : memref<9x32x32xbf16, #tpu.memory_space<vmem>>, vector<1x32x32xbf16>
    %182 = vector.shape_cast %181 : vector<1x32x32xbf16> to vector<32x32xbf16>
    %cst_99 = arith.constant dense<0.000000e+00> : vector<32x128xf32>
    %183 = tpu.matmul %182, %113, %cst_99 {dimension_numbers = #tpu.dot_dimension_numbers<[1], [0], [0], [1], [0, 0, 1, 1], [], []>} : vector<32x32xbf16>, vector<32x128xbf16>, vector<32x128xf32> -> vector<32x128xf32>
    %c42_i32_100 = arith.constant 42 : i32
    %184 = vector.broadcast %c42_i32_100 : i32 to vector<32x128xi32>
    %185 = arith.cmpi sge, %0, %184 : vector<32x128xi32>
    %c49_i32_101 = arith.constant 49 : i32
    %186 = vector.broadcast %c49_i32_101 : i32 to vector<32x128xi32>
    %187 = arith.cmpi slt, %0, %186 : vector<32x128xi32>
    %188 = arith.andi %185, %187 : vector<32x128xi1>
    %cst_102 = arith.constant 0.000000e+00 : f32
    %189 = vector.broadcast %cst_102 : f32 to vector<32x128xf32>
    %190 = arith.select %188, %183, %189 : vector<32x128xi1>, vector<32x128xf32>
    %191 = arith.addf %180, %190 : vector<32x128xf32>
    %c7_103 = arith.constant 7 : index
    %c0_104 = arith.constant 0 : index
    %c0_105 = arith.constant 0 : index
    %192 = vector.load %arg1[%c7_103, %c0_104, %c0_105] : memref<9x32x32xbf16, #tpu.memory_space<vmem>>, vector<1x32x32xbf16>
    %193 = vector.shape_cast %192 : vector<1x32x32xbf16> to vector<32x32xbf16>
    %cst_106 = arith.constant dense<0.000000e+00> : vector<32x128xf32>
    %194 = tpu.matmul %193, %113, %cst_106 {dimension_numbers = #tpu.dot_dimension_numbers<[1], [0], [0], [1], [0, 0, 1, 1], [], []>} : vector<32x32xbf16>, vector<32x128xbf16>, vector<32x128xf32> -> vector<32x128xf32>
    %c49_i32_107 = arith.constant 49 : i32
    %195 = vector.broadcast %c49_i32_107 : i32 to vector<32x128xi32>
    %196 = arith.cmpi sge, %0, %195 : vector<32x128xi32>
    %c56_i32_108 = arith.constant 56 : i32
    %197 = vector.broadcast %c56_i32_108 : i32 to vector<32x128xi32>
    %198 = arith.cmpi slt, %0, %197 : vector<32x128xi32>
    %199 = arith.andi %196, %198 : vector<32x128xi1>
    %cst_109 = arith.constant 0.000000e+00 : f32
    %200 = vector.broadcast %cst_109 : f32 to vector<32x128xf32>
    %201 = arith.select %199, %194, %200 : vector<32x128xi1>, vector<32x128xf32>
    %202 = arith.addf %191, %201 : vector<32x128xf32>
    %c8_110 = arith.constant 8 : index
    %c0_111 = arith.constant 0 : index
    %c0_112 = arith.constant 0 : index
    %203 = vector.load %arg1[%c8_110, %c0_111, %c0_112] : memref<9x32x32xbf16, #tpu.memory_space<vmem>>, vector<1x32x32xbf16>
    %204 = vector.shape_cast %203 : vector<1x32x32xbf16> to vector<32x32xbf16>
    %cst_113 = arith.constant dense<0.000000e+00> : vector<32x128xf32>
    %205 = tpu.matmul %204, %113, %cst_113 {dimension_numbers = #tpu.dot_dimension_numbers<[1], [0], [0], [1], [0, 0, 1, 1], [], []>} : vector<32x32xbf16>, vector<32x128xbf16>, vector<32x128xf32> -> vector<32x128xf32>
    %c56_i32_114 = arith.constant 56 : i32
    %206 = vector.broadcast %c56_i32_114 : i32 to vector<32x128xi32>
    %207 = arith.cmpi sge, %0, %206 : vector<32x128xi32>
    %c63_i32_115 = arith.constant 63 : i32
    %208 = vector.broadcast %c63_i32_115 : i32 to vector<32x128xi32>
    %209 = arith.cmpi slt, %0, %208 : vector<32x128xi32>
    %210 = arith.andi %207, %209 : vector<32x128xi1>
    %cst_116 = arith.constant 0.000000e+00 : f32
    %211 = vector.broadcast %cst_116 : f32 to vector<32x128xf32>
    %212 = arith.select %210, %205, %211 : vector<32x128xi1>, vector<32x128xf32>
    %213 = arith.addf %202, %212 : vector<32x128xf32>
    %214 = arith.truncf %213 : vector<32x128xf32> to vector<32x128xbf16>
    %c1_117 = arith.constant 1 : index
    %c0_118 = arith.constant 0 : index
    %c0_119 = arith.constant 0 : index
    %215 = vector.load %arg3[%c1_117, %c0_118, %c0_119] : memref<3x128x128xbf16, #tpu.memory_space<vmem>>, vector<1x128x128xbf16>
    %216 = vector.shape_cast %215 : vector<1x128x128xbf16> to vector<128x128xbf16>
    %cst_120 = arith.constant dense<0.000000e+00> : vector<32x128xf32>
    %217 = tpu.matmul %214, %216, %cst_120 {dimension_numbers = #tpu.dot_dimension_numbers<[1], [0], [0], [1], [0, 0, 1, 1], [], []>} : vector<32x128xbf16>, vector<128x128xbf16>, vector<32x128xf32> -> vector<32x128xf32>
    %c1_121 = arith.constant 1 : index
    %c0_122 = arith.constant 0 : index
    %218 = vector.load %arg4[%c1_121, %c0_122] : memref<8x128xf32, #tpu.memory_space<vmem>>, vector<1x128xf32>
    %219 = vector.broadcast %218 : vector<1x128xf32> to vector<32x128xf32>
    %220 = arith.addf %217, %219 : vector<32x128xf32>
    %cst_123 = arith.constant 0.000000e+00 : f32
    %221 = vector.broadcast %cst_123 : f32 to vector<32x128xf32>
    %222 = arith.maximumf %220, %221 : vector<32x128xf32>
    %223 = arith.truncf %222 : vector<32x128xf32> to vector<32x128xbf16>
    %cst_124 = arith.constant 0.000000e+00 : f32
    %224 = vector.broadcast %cst_124 : f32 to vector<32x128xf32>
    %c0_125 = arith.constant 0 : index
    %c0_126 = arith.constant 0 : index
    %c0_127 = arith.constant 0 : index
    %225 = vector.load %arg1[%c0_125, %c0_126, %c0_127] : memref<9x32x32xbf16, #tpu.memory_space<vmem>>, vector<1x32x32xbf16>
    %226 = vector.shape_cast %225 : vector<1x32x32xbf16> to vector<32x32xbf16>
    %cst_128 = arith.constant dense<0.000000e+00> : vector<32x128xf32>
    %227 = tpu.matmul %226, %223, %cst_128 {dimension_numbers = #tpu.dot_dimension_numbers<[1], [0], [0], [1], [0, 0, 1, 1], [], []>} : vector<32x32xbf16>, vector<32x128xbf16>, vector<32x128xf32> -> vector<32x128xf32>
    %c0_i32_129 = arith.constant 0 : i32
    %228 = vector.broadcast %c0_i32_129 : i32 to vector<32x128xi32>
    %229 = arith.cmpi sge, %0, %228 : vector<32x128xi32>
    %c7_i32_130 = arith.constant 7 : i32
    %230 = vector.broadcast %c7_i32_130 : i32 to vector<32x128xi32>
    %231 = arith.cmpi slt, %0, %230 : vector<32x128xi32>
    %232 = arith.andi %229, %231 : vector<32x128xi1>
    %cst_131 = arith.constant 0.000000e+00 : f32
    %233 = vector.broadcast %cst_131 : f32 to vector<32x128xf32>
    %234 = arith.select %232, %227, %233 : vector<32x128xi1>, vector<32x128xf32>
    %235 = arith.addf %224, %234 : vector<32x128xf32>
    %c1_132 = arith.constant 1 : index
    %c0_133 = arith.constant 0 : index
    %c0_134 = arith.constant 0 : index
    %236 = vector.load %arg1[%c1_132, %c0_133, %c0_134] : memref<9x32x32xbf16, #tpu.memory_space<vmem>>, vector<1x32x32xbf16>
    %237 = vector.shape_cast %236 : vector<1x32x32xbf16> to vector<32x32xbf16>
    %cst_135 = arith.constant dense<0.000000e+00> : vector<32x128xf32>
    %238 = tpu.matmul %237, %223, %cst_135 {dimension_numbers = #tpu.dot_dimension_numbers<[1], [0], [0], [1], [0, 0, 1, 1], [], []>} : vector<32x32xbf16>, vector<32x128xbf16>, vector<32x128xf32> -> vector<32x128xf32>
    %c7_i32_136 = arith.constant 7 : i32
    %239 = vector.broadcast %c7_i32_136 : i32 to vector<32x128xi32>
    %240 = arith.cmpi sge, %0, %239 : vector<32x128xi32>
    %c14_i32_137 = arith.constant 14 : i32
    %241 = vector.broadcast %c14_i32_137 : i32 to vector<32x128xi32>
    %242 = arith.cmpi slt, %0, %241 : vector<32x128xi32>
    %243 = arith.andi %240, %242 : vector<32x128xi1>
    %cst_138 = arith.constant 0.000000e+00 : f32
    %244 = vector.broadcast %cst_138 : f32 to vector<32x128xf32>
    %245 = arith.select %243, %238, %244 : vector<32x128xi1>, vector<32x128xf32>
    %246 = arith.addf %235, %245 : vector<32x128xf32>
    %c2_139 = arith.constant 2 : index
    %c0_140 = arith.constant 0 : index
    %c0_141 = arith.constant 0 : index
    %247 = vector.load %arg1[%c2_139, %c0_140, %c0_141] : memref<9x32x32xbf16, #tpu.memory_space<vmem>>, vector<1x32x32xbf16>
    %248 = vector.shape_cast %247 : vector<1x32x32xbf16> to vector<32x32xbf16>
    %cst_142 = arith.constant dense<0.000000e+00> : vector<32x128xf32>
    %249 = tpu.matmul %248, %223, %cst_142 {dimension_numbers = #tpu.dot_dimension_numbers<[1], [0], [0], [1], [0, 0, 1, 1], [], []>} : vector<32x32xbf16>, vector<32x128xbf16>, vector<32x128xf32> -> vector<32x128xf32>
    %c14_i32_143 = arith.constant 14 : i32
    %250 = vector.broadcast %c14_i32_143 : i32 to vector<32x128xi32>
    %251 = arith.cmpi sge, %0, %250 : vector<32x128xi32>
    %c21_i32_144 = arith.constant 21 : i32
    %252 = vector.broadcast %c21_i32_144 : i32 to vector<32x128xi32>
    %253 = arith.cmpi slt, %0, %252 : vector<32x128xi32>
    %254 = arith.andi %251, %253 : vector<32x128xi1>
    %cst_145 = arith.constant 0.000000e+00 : f32
    %255 = vector.broadcast %cst_145 : f32 to vector<32x128xf32>
    %256 = arith.select %254, %249, %255 : vector<32x128xi1>, vector<32x128xf32>
    %257 = arith.addf %246, %256 : vector<32x128xf32>
    %c3_146 = arith.constant 3 : index
    %c0_147 = arith.constant 0 : index
    %c0_148 = arith.constant 0 : index
    %258 = vector.load %arg1[%c3_146, %c0_147, %c0_148] : memref<9x32x32xbf16, #tpu.memory_space<vmem>>, vector<1x32x32xbf16>
    %259 = vector.shape_cast %258 : vector<1x32x32xbf16> to vector<32x32xbf16>
    %cst_149 = arith.constant dense<0.000000e+00> : vector<32x128xf32>
    %260 = tpu.matmul %259, %223, %cst_149 {dimension_numbers = #tpu.dot_dimension_numbers<[1], [0], [0], [1], [0, 0, 1, 1], [], []>} : vector<32x32xbf16>, vector<32x128xbf16>, vector<32x128xf32> -> vector<32x128xf32>
    %c21_i32_150 = arith.constant 21 : i32
    %261 = vector.broadcast %c21_i32_150 : i32 to vector<32x128xi32>
    %262 = arith.cmpi sge, %0, %261 : vector<32x128xi32>
    %c28_i32_151 = arith.constant 28 : i32
    %263 = vector.broadcast %c28_i32_151 : i32 to vector<32x128xi32>
    %264 = arith.cmpi slt, %0, %263 : vector<32x128xi32>
    %265 = arith.andi %262, %264 : vector<32x128xi1>
    %cst_152 = arith.constant 0.000000e+00 : f32
    %266 = vector.broadcast %cst_152 : f32 to vector<32x128xf32>
    %267 = arith.select %265, %260, %266 : vector<32x128xi1>, vector<32x128xf32>
    %268 = arith.addf %257, %267 : vector<32x128xf32>
    %c4_153 = arith.constant 4 : index
    %c0_154 = arith.constant 0 : index
    %c0_155 = arith.constant 0 : index
    %269 = vector.load %arg1[%c4_153, %c0_154, %c0_155] : memref<9x32x32xbf16, #tpu.memory_space<vmem>>, vector<1x32x32xbf16>
    %270 = vector.shape_cast %269 : vector<1x32x32xbf16> to vector<32x32xbf16>
    %cst_156 = arith.constant dense<0.000000e+00> : vector<32x128xf32>
    %271 = tpu.matmul %270, %223, %cst_156 {dimension_numbers = #tpu.dot_dimension_numbers<[1], [0], [0], [1], [0, 0, 1, 1], [], []>} : vector<32x32xbf16>, vector<32x128xbf16>, vector<32x128xf32> -> vector<32x128xf32>
    %c28_i32_157 = arith.constant 28 : i32
    %272 = vector.broadcast %c28_i32_157 : i32 to vector<32x128xi32>
    %273 = arith.cmpi sge, %0, %272 : vector<32x128xi32>
    %c35_i32_158 = arith.constant 35 : i32
    %274 = vector.broadcast %c35_i32_158 : i32 to vector<32x128xi32>
    %275 = arith.cmpi slt, %0, %274 : vector<32x128xi32>
    %276 = arith.andi %273, %275 : vector<32x128xi1>
    %cst_159 = arith.constant 0.000000e+00 : f32
    %277 = vector.broadcast %cst_159 : f32 to vector<32x128xf32>
    %278 = arith.select %276, %271, %277 : vector<32x128xi1>, vector<32x128xf32>
    %279 = arith.addf %268, %278 : vector<32x128xf32>
    %c5_160 = arith.constant 5 : index
    %c0_161 = arith.constant 0 : index
    %c0_162 = arith.constant 0 : index
    %280 = vector.load %arg1[%c5_160, %c0_161, %c0_162] : memref<9x32x32xbf16, #tpu.memory_space<vmem>>, vector<1x32x32xbf16>
    %281 = vector.shape_cast %280 : vector<1x32x32xbf16> to vector<32x32xbf16>
    %cst_163 = arith.constant dense<0.000000e+00> : vector<32x128xf32>
    %282 = tpu.matmul %281, %223, %cst_163 {dimension_numbers = #tpu.dot_dimension_numbers<[1], [0], [0], [1], [0, 0, 1, 1], [], []>} : vector<32x32xbf16>, vector<32x128xbf16>, vector<32x128xf32> -> vector<32x128xf32>
    %c35_i32_164 = arith.constant 35 : i32
    %283 = vector.broadcast %c35_i32_164 : i32 to vector<32x128xi32>
    %284 = arith.cmpi sge, %0, %283 : vector<32x128xi32>
    %c42_i32_165 = arith.constant 42 : i32
    %285 = vector.broadcast %c42_i32_165 : i32 to vector<32x128xi32>
    %286 = arith.cmpi slt, %0, %285 : vector<32x128xi32>
    %287 = arith.andi %284, %286 : vector<32x128xi1>
    %cst_166 = arith.constant 0.000000e+00 : f32
    %288 = vector.broadcast %cst_166 : f32 to vector<32x128xf32>
    %289 = arith.select %287, %282, %288 : vector<32x128xi1>, vector<32x128xf32>
    %290 = arith.addf %279, %289 : vector<32x128xf32>
    %c6_167 = arith.constant 6 : index
    %c0_168 = arith.constant 0 : index
    %c0_169 = arith.constant 0 : index
    %291 = vector.load %arg1[%c6_167, %c0_168, %c0_169] : memref<9x32x32xbf16, #tpu.memory_space<vmem>>, vector<1x32x32xbf16>
    %292 = vector.shape_cast %291 : vector<1x32x32xbf16> to vector<32x32xbf16>
    %cst_170 = arith.constant dense<0.000000e+00> : vector<32x128xf32>
    %293 = tpu.matmul %292, %223, %cst_170 {dimension_numbers = #tpu.dot_dimension_numbers<[1], [0], [0], [1], [0, 0, 1, 1], [], []>} : vector<32x32xbf16>, vector<32x128xbf16>, vector<32x128xf32> -> vector<32x128xf32>
    %c42_i32_171 = arith.constant 42 : i32
    %294 = vector.broadcast %c42_i32_171 : i32 to vector<32x128xi32>
    %295 = arith.cmpi sge, %0, %294 : vector<32x128xi32>
    %c49_i32_172 = arith.constant 49 : i32
    %296 = vector.broadcast %c49_i32_172 : i32 to vector<32x128xi32>
    %297 = arith.cmpi slt, %0, %296 : vector<32x128xi32>
    %298 = arith.andi %295, %297 : vector<32x128xi1>
    %cst_173 = arith.constant 0.000000e+00 : f32
    %299 = vector.broadcast %cst_173 : f32 to vector<32x128xf32>
    %300 = arith.select %298, %293, %299 : vector<32x128xi1>, vector<32x128xf32>
    %301 = arith.addf %290, %300 : vector<32x128xf32>
    %c7_174 = arith.constant 7 : index
    %c0_175 = arith.constant 0 : index
    %c0_176 = arith.constant 0 : index
    %302 = vector.load %arg1[%c7_174, %c0_175, %c0_176] : memref<9x32x32xbf16, #tpu.memory_space<vmem>>, vector<1x32x32xbf16>
    %303 = vector.shape_cast %302 : vector<1x32x32xbf16> to vector<32x32xbf16>
    %cst_177 = arith.constant dense<0.000000e+00> : vector<32x128xf32>
    %304 = tpu.matmul %303, %223, %cst_177 {dimension_numbers = #tpu.dot_dimension_numbers<[1], [0], [0], [1], [0, 0, 1, 1], [], []>} : vector<32x32xbf16>, vector<32x128xbf16>, vector<32x128xf32> -> vector<32x128xf32>
    %c49_i32_178 = arith.constant 49 : i32
    %305 = vector.broadcast %c49_i32_178 : i32 to vector<32x128xi32>
    %306 = arith.cmpi sge, %0, %305 : vector<32x128xi32>
    %c56_i32_179 = arith.constant 56 : i32
    %307 = vector.broadcast %c56_i32_179 : i32 to vector<32x128xi32>
    %308 = arith.cmpi slt, %0, %307 : vector<32x128xi32>
    %309 = arith.andi %306, %308 : vector<32x128xi1>
    %cst_180 = arith.constant 0.000000e+00 : f32
    %310 = vector.broadcast %cst_180 : f32 to vector<32x128xf32>
    %311 = arith.select %309, %304, %310 : vector<32x128xi1>, vector<32x128xf32>
    %312 = arith.addf %301, %311 : vector<32x128xf32>
    %c8_181 = arith.constant 8 : index
    %c0_182 = arith.constant 0 : index
    %c0_183 = arith.constant 0 : index
    %313 = vector.load %arg1[%c8_181, %c0_182, %c0_183] : memref<9x32x32xbf16, #tpu.memory_space<vmem>>, vector<1x32x32xbf16>
    %314 = vector.shape_cast %313 : vector<1x32x32xbf16> to vector<32x32xbf16>
    %cst_184 = arith.constant dense<0.000000e+00> : vector<32x128xf32>
    %315 = tpu.matmul %314, %223, %cst_184 {dimension_numbers = #tpu.dot_dimension_numbers<[1], [0], [0], [1], [0, 0, 1, 1], [], []>} : vector<32x32xbf16>, vector<32x128xbf16>, vector<32x128xf32> -> vector<32x128xf32>
    %c56_i32_185 = arith.constant 56 : i32
    %316 = vector.broadcast %c56_i32_185 : i32 to vector<32x128xi32>
    %317 = arith.cmpi sge, %0, %316 : vector<32x128xi32>
    %c63_i32_186 = arith.constant 63 : i32
    %318 = vector.broadcast %c63_i32_186 : i32 to vector<32x128xi32>
    %319 = arith.cmpi slt, %0, %318 : vector<32x128xi32>
    %320 = arith.andi %317, %319 : vector<32x128xi1>
    %cst_187 = arith.constant 0.000000e+00 : f32
    %321 = vector.broadcast %cst_187 : f32 to vector<32x128xf32>
    %322 = arith.select %320, %315, %321 : vector<32x128xi1>, vector<32x128xf32>
    %323 = arith.addf %312, %322 : vector<32x128xf32>
    %324 = arith.truncf %323 : vector<32x128xf32> to vector<32x128xbf16>
    %c2_188 = arith.constant 2 : index
    %c0_189 = arith.constant 0 : index
    %c0_190 = arith.constant 0 : index
    %325 = vector.load %arg3[%c2_188, %c0_189, %c0_190] : memref<3x128x128xbf16, #tpu.memory_space<vmem>>, vector<1x128x128xbf16>
    %326 = vector.shape_cast %325 : vector<1x128x128xbf16> to vector<128x128xbf16>
    %cst_191 = arith.constant dense<0.000000e+00> : vector<32x128xf32>
    %327 = tpu.matmul %324, %326, %cst_191 {dimension_numbers = #tpu.dot_dimension_numbers<[1], [0], [0], [1], [0, 0, 1, 1], [], []>} : vector<32x128xbf16>, vector<128x128xbf16>, vector<32x128xf32> -> vector<32x128xf32>
    %c2_192 = arith.constant 2 : index
    %c0_193 = arith.constant 0 : index
    %328 = vector.load %arg4[%c2_192, %c0_193] : memref<8x128xf32, #tpu.memory_space<vmem>>, vector<1x128xf32>
    %329 = vector.broadcast %328 : vector<1x128xf32> to vector<32x128xf32>
    %330 = arith.addf %327, %329 : vector<32x128xf32>
    %cst_194 = arith.constant 0.000000e+00 : f32
    %331 = vector.broadcast %cst_194 : f32 to vector<32x128xf32>
    %332 = arith.maximumf %330, %331 : vector<32x128xf32>
    %c0_195 = arith.constant 0 : index
    %c0_196 = arith.constant 0 : index
    %333 = vector.load %arg2[%c0_195, %c0_196] : memref<128x32xbf16, #tpu.memory_space<vmem>>, vector<128x32xbf16>
    %334 = arith.truncf %332 : vector<32x128xf32> to vector<32x128xbf16>
    %cst_197 = arith.constant dense<0.000000e+00> : vector<128x128xf32>
    %335 = tpu.matmul %333, %334, %cst_197 {dimension_numbers = #tpu.dot_dimension_numbers<[1], [0], [0], [1], [0, 0, 1, 1], [], []>} : vector<128x32xbf16>, vector<32x128xbf16>, vector<128x128xf32> -> vector<128x128xf32>
    %cst_198 = arith.constant 0.000000e+00 : f32
    %336 = vector.broadcast %cst_198 : f32 to vector<8x128xf32>
    %c0_i32_199 = arith.constant 0 : i32
    %337 = vector.broadcast %c0_i32_199 : i32 to vector<8x128xi32>
    %338 = arith.cmpi sge, %1, %337 : vector<8x128xi32>
    %c7_i32_200 = arith.constant 7 : i32
    %339 = vector.broadcast %c7_i32_200 : i32 to vector<8x128xi32>
    %340 = arith.cmpi slt, %1, %339 : vector<8x128xi32>
    %341 = arith.andi %338, %340 : vector<8x128xi1>
    %342 = vector.extract_strided_slice %335 {offsets = [0, 0], sizes = [8, 128], strides = [1, 1]} : vector<128x128xf32> to vector<8x128xf32>
    %cst_201 = arith.constant 0.000000e+00 : f32
    %343 = vector.broadcast %cst_201 : f32 to vector<8x128xf32>
    %344 = arith.select %341, %342, %343 : vector<8x128xi1>, vector<8x128xf32>
    %345 = arith.addf %336, %344 : vector<8x128xf32>
    %c7_i32_202 = arith.constant 7 : i32
    %346 = vector.broadcast %c7_i32_202 : i32 to vector<8x128xi32>
    %347 = arith.cmpi sge, %1, %346 : vector<8x128xi32>
    %c14_i32_203 = arith.constant 14 : i32
    %348 = vector.broadcast %c14_i32_203 : i32 to vector<8x128xi32>
    %349 = arith.cmpi slt, %1, %348 : vector<8x128xi32>
    %350 = arith.andi %347, %349 : vector<8x128xi1>
    %351 = vector.extract_strided_slice %335 {offsets = [8, 0], sizes = [8, 128], strides = [1, 1]} : vector<128x128xf32> to vector<8x128xf32>
    %cst_204 = arith.constant 0.000000e+00 : f32
    %352 = vector.broadcast %cst_204 : f32 to vector<8x128xf32>
    %353 = arith.select %350, %351, %352 : vector<8x128xi1>, vector<8x128xf32>
    %354 = arith.addf %345, %353 : vector<8x128xf32>
    %c14_i32_205 = arith.constant 14 : i32
    %355 = vector.broadcast %c14_i32_205 : i32 to vector<8x128xi32>
    %356 = arith.cmpi sge, %1, %355 : vector<8x128xi32>
    %c21_i32_206 = arith.constant 21 : i32
    %357 = vector.broadcast %c21_i32_206 : i32 to vector<8x128xi32>
    %358 = arith.cmpi slt, %1, %357 : vector<8x128xi32>
    %359 = arith.andi %356, %358 : vector<8x128xi1>
    %360 = vector.extract_strided_slice %335 {offsets = [16, 0], sizes = [8, 128], strides = [1, 1]} : vector<128x128xf32> to vector<8x128xf32>
    %cst_207 = arith.constant 0.000000e+00 : f32
    %361 = vector.broadcast %cst_207 : f32 to vector<8x128xf32>
    %362 = arith.select %359, %360, %361 : vector<8x128xi1>, vector<8x128xf32>
    %363 = arith.addf %354, %362 : vector<8x128xf32>
    %c21_i32_208 = arith.constant 21 : i32
    %364 = vector.broadcast %c21_i32_208 : i32 to vector<8x128xi32>
    %365 = arith.cmpi sge, %1, %364 : vector<8x128xi32>
    %c28_i32_209 = arith.constant 28 : i32
    %366 = vector.broadcast %c28_i32_209 : i32 to vector<8x128xi32>
    %367 = arith.cmpi slt, %1, %366 : vector<8x128xi32>
    %368 = arith.andi %365, %367 : vector<8x128xi1>
    %369 = vector.extract_strided_slice %335 {offsets = [24, 0], sizes = [8, 128], strides = [1, 1]} : vector<128x128xf32> to vector<8x128xf32>
    %cst_210 = arith.constant 0.000000e+00 : f32
    %370 = vector.broadcast %cst_210 : f32 to vector<8x128xf32>
    %371 = arith.select %368, %369, %370 : vector<8x128xi1>, vector<8x128xf32>
    %372 = arith.addf %363, %371 : vector<8x128xf32>
    %c28_i32_211 = arith.constant 28 : i32
    %373 = vector.broadcast %c28_i32_211 : i32 to vector<8x128xi32>
    %374 = arith.cmpi sge, %1, %373 : vector<8x128xi32>
    %c35_i32_212 = arith.constant 35 : i32
    %375 = vector.broadcast %c35_i32_212 : i32 to vector<8x128xi32>
    %376 = arith.cmpi slt, %1, %375 : vector<8x128xi32>
    %377 = arith.andi %374, %376 : vector<8x128xi1>
    %378 = vector.extract_strided_slice %335 {offsets = [32, 0], sizes = [8, 128], strides = [1, 1]} : vector<128x128xf32> to vector<8x128xf32>
    %cst_213 = arith.constant 0.000000e+00 : f32
    %379 = vector.broadcast %cst_213 : f32 to vector<8x128xf32>
    %380 = arith.select %377, %378, %379 : vector<8x128xi1>, vector<8x128xf32>
    %381 = arith.addf %372, %380 : vector<8x128xf32>
    %c35_i32_214 = arith.constant 35 : i32
    %382 = vector.broadcast %c35_i32_214 : i32 to vector<8x128xi32>
    %383 = arith.cmpi sge, %1, %382 : vector<8x128xi32>
    %c42_i32_215 = arith.constant 42 : i32
    %384 = vector.broadcast %c42_i32_215 : i32 to vector<8x128xi32>
    %385 = arith.cmpi slt, %1, %384 : vector<8x128xi32>
    %386 = arith.andi %383, %385 : vector<8x128xi1>
    %387 = vector.extract_strided_slice %335 {offsets = [40, 0], sizes = [8, 128], strides = [1, 1]} : vector<128x128xf32> to vector<8x128xf32>
    %cst_216 = arith.constant 0.000000e+00 : f32
    %388 = vector.broadcast %cst_216 : f32 to vector<8x128xf32>
    %389 = arith.select %386, %387, %388 : vector<8x128xi1>, vector<8x128xf32>
    %390 = arith.addf %381, %389 : vector<8x128xf32>
    %c42_i32_217 = arith.constant 42 : i32
    %391 = vector.broadcast %c42_i32_217 : i32 to vector<8x128xi32>
    %392 = arith.cmpi sge, %1, %391 : vector<8x128xi32>
    %c49_i32_218 = arith.constant 49 : i32
    %393 = vector.broadcast %c49_i32_218 : i32 to vector<8x128xi32>
    %394 = arith.cmpi slt, %1, %393 : vector<8x128xi32>
    %395 = arith.andi %392, %394 : vector<8x128xi1>
    %396 = vector.extract_strided_slice %335 {offsets = [48, 0], sizes = [8, 128], strides = [1, 1]} : vector<128x128xf32> to vector<8x128xf32>
    %cst_219 = arith.constant 0.000000e+00 : f32
    %397 = vector.broadcast %cst_219 : f32 to vector<8x128xf32>
    %398 = arith.select %395, %396, %397 : vector<8x128xi1>, vector<8x128xf32>
    %399 = arith.addf %390, %398 : vector<8x128xf32>
    %c49_i32_220 = arith.constant 49 : i32
    %400 = vector.broadcast %c49_i32_220 : i32 to vector<8x128xi32>
    %401 = arith.cmpi sge, %1, %400 : vector<8x128xi32>
    %c56_i32_221 = arith.constant 56 : i32
    %402 = vector.broadcast %c56_i32_221 : i32 to vector<8x128xi32>
    %403 = arith.cmpi slt, %1, %402 : vector<8x128xi32>
    %404 = arith.andi %401, %403 : vector<8x128xi1>
    %405 = vector.extract_strided_slice %335 {offsets = [56, 0], sizes = [8, 128], strides = [1, 1]} : vector<128x128xf32> to vector<8x128xf32>
    %cst_222 = arith.constant 0.000000e+00 : f32
    %406 = vector.broadcast %cst_222 : f32 to vector<8x128xf32>
    %407 = arith.select %404, %405, %406 : vector<8x128xi1>, vector<8x128xf32>
    %408 = arith.addf %399, %407 : vector<8x128xf32>
    %c56_i32_223 = arith.constant 56 : i32
    %409 = vector.broadcast %c56_i32_223 : i32 to vector<8x128xi32>
    %410 = arith.cmpi sge, %1, %409 : vector<8x128xi32>
    %c63_i32_224 = arith.constant 63 : i32
    %411 = vector.broadcast %c63_i32_224 : i32 to vector<8x128xi32>
    %412 = arith.cmpi slt, %1, %411 : vector<8x128xi32>
    %413 = arith.andi %410, %412 : vector<8x128xi1>
    %414 = vector.extract_strided_slice %335 {offsets = [64, 0], sizes = [8, 128], strides = [1, 1]} : vector<128x128xf32> to vector<8x128xf32>
    %cst_225 = arith.constant 0.000000e+00 : f32
    %415 = vector.broadcast %cst_225 : f32 to vector<8x128xf32>
    %416 = arith.select %413, %414, %415 : vector<8x128xi1>, vector<8x128xf32>
    %417 = arith.addf %408, %416 : vector<8x128xf32>
    %c63_i32_226 = arith.constant 63 : i32
    %418 = vector.broadcast %c63_i32_226 : i32 to vector<8x128xi32>
    %419 = arith.cmpi sge, %1, %418 : vector<8x128xi32>
    %c70_i32 = arith.constant 70 : i32
    %420 = vector.broadcast %c70_i32 : i32 to vector<8x128xi32>
    %421 = arith.cmpi slt, %1, %420 : vector<8x128xi32>
    %422 = arith.andi %419, %421 : vector<8x128xi1>
    %423 = vector.extract_strided_slice %335 {offsets = [72, 0], sizes = [8, 128], strides = [1, 1]} : vector<128x128xf32> to vector<8x128xf32>
    %cst_227 = arith.constant 0.000000e+00 : f32
    %424 = vector.broadcast %cst_227 : f32 to vector<8x128xf32>
    %425 = arith.select %422, %423, %424 : vector<8x128xi1>, vector<8x128xf32>
    %426 = arith.addf %417, %425 : vector<8x128xf32>
    %c70_i32_228 = arith.constant 70 : i32
    %427 = vector.broadcast %c70_i32_228 : i32 to vector<8x128xi32>
    %428 = arith.cmpi sge, %1, %427 : vector<8x128xi32>
    %c77_i32 = arith.constant 77 : i32
    %429 = vector.broadcast %c77_i32 : i32 to vector<8x128xi32>
    %430 = arith.cmpi slt, %1, %429 : vector<8x128xi32>
    %431 = arith.andi %428, %430 : vector<8x128xi1>
    %432 = vector.extract_strided_slice %335 {offsets = [80, 0], sizes = [8, 128], strides = [1, 1]} : vector<128x128xf32> to vector<8x128xf32>
    %cst_229 = arith.constant 0.000000e+00 : f32
    %433 = vector.broadcast %cst_229 : f32 to vector<8x128xf32>
    %434 = arith.select %431, %432, %433 : vector<8x128xi1>, vector<8x128xf32>
    %435 = arith.addf %426, %434 : vector<8x128xf32>
    %c77_i32_230 = arith.constant 77 : i32
    %436 = vector.broadcast %c77_i32_230 : i32 to vector<8x128xi32>
    %437 = arith.cmpi sge, %1, %436 : vector<8x128xi32>
    %c84_i32 = arith.constant 84 : i32
    %438 = vector.broadcast %c84_i32 : i32 to vector<8x128xi32>
    %439 = arith.cmpi slt, %1, %438 : vector<8x128xi32>
    %440 = arith.andi %437, %439 : vector<8x128xi1>
    %441 = vector.extract_strided_slice %335 {offsets = [88, 0], sizes = [8, 128], strides = [1, 1]} : vector<128x128xf32> to vector<8x128xf32>
    %cst_231 = arith.constant 0.000000e+00 : f32
    %442 = vector.broadcast %cst_231 : f32 to vector<8x128xf32>
    %443 = arith.select %440, %441, %442 : vector<8x128xi1>, vector<8x128xf32>
    %444 = arith.addf %435, %443 : vector<8x128xf32>
    %c84_i32_232 = arith.constant 84 : i32
    %445 = vector.broadcast %c84_i32_232 : i32 to vector<8x128xi32>
    %446 = arith.cmpi sge, %1, %445 : vector<8x128xi32>
    %c91_i32 = arith.constant 91 : i32
    %447 = vector.broadcast %c91_i32 : i32 to vector<8x128xi32>
    %448 = arith.cmpi slt, %1, %447 : vector<8x128xi32>
    %449 = arith.andi %446, %448 : vector<8x128xi1>
    %450 = vector.extract_strided_slice %335 {offsets = [96, 0], sizes = [8, 128], strides = [1, 1]} : vector<128x128xf32> to vector<8x128xf32>
    %cst_233 = arith.constant 0.000000e+00 : f32
    %451 = vector.broadcast %cst_233 : f32 to vector<8x128xf32>
    %452 = arith.select %449, %450, %451 : vector<8x128xi1>, vector<8x128xf32>
    %453 = arith.addf %444, %452 : vector<8x128xf32>
    %c91_i32_234 = arith.constant 91 : i32
    %454 = vector.broadcast %c91_i32_234 : i32 to vector<8x128xi32>
    %455 = arith.cmpi sge, %1, %454 : vector<8x128xi32>
    %c98_i32 = arith.constant 98 : i32
    %456 = vector.broadcast %c98_i32 : i32 to vector<8x128xi32>
    %457 = arith.cmpi slt, %1, %456 : vector<8x128xi32>
    %458 = arith.andi %455, %457 : vector<8x128xi1>
    %459 = vector.extract_strided_slice %335 {offsets = [104, 0], sizes = [8, 128], strides = [1, 1]} : vector<128x128xf32> to vector<8x128xf32>
    %cst_235 = arith.constant 0.000000e+00 : f32
    %460 = vector.broadcast %cst_235 : f32 to vector<8x128xf32>
    %461 = arith.select %458, %459, %460 : vector<8x128xi1>, vector<8x128xf32>
    %462 = arith.addf %453, %461 : vector<8x128xf32>
    %c98_i32_236 = arith.constant 98 : i32
    %463 = vector.broadcast %c98_i32_236 : i32 to vector<8x128xi32>
    %464 = arith.cmpi sge, %1, %463 : vector<8x128xi32>
    %c105_i32 = arith.constant 105 : i32
    %465 = vector.broadcast %c105_i32 : i32 to vector<8x128xi32>
    %466 = arith.cmpi slt, %1, %465 : vector<8x128xi32>
    %467 = arith.andi %464, %466 : vector<8x128xi1>
    %468 = vector.extract_strided_slice %335 {offsets = [112, 0], sizes = [8, 128], strides = [1, 1]} : vector<128x128xf32> to vector<8x128xf32>
    %cst_237 = arith.constant 0.000000e+00 : f32
    %469 = vector.broadcast %cst_237 : f32 to vector<8x128xf32>
    %470 = arith.select %467, %468, %469 : vector<8x128xi1>, vector<8x128xf32>
    %471 = arith.addf %462, %470 : vector<8x128xf32>
    %c105_i32_238 = arith.constant 105 : i32
    %472 = vector.broadcast %c105_i32_238 : i32 to vector<8x128xi32>
    %473 = arith.cmpi sge, %1, %472 : vector<8x128xi32>
    %c112_i32 = arith.constant 112 : i32
    %474 = vector.broadcast %c112_i32 : i32 to vector<8x128xi32>
    %475 = arith.cmpi slt, %1, %474 : vector<8x128xi32>
    %476 = arith.andi %473, %475 : vector<8x128xi1>
    %477 = vector.extract_strided_slice %335 {offsets = [120, 0], sizes = [8, 128], strides = [1, 1]} : vector<128x128xf32> to vector<8x128xf32>
    %cst_239 = arith.constant 0.000000e+00 : f32
    %478 = vector.broadcast %cst_239 : f32 to vector<8x128xf32>
    %479 = arith.select %476, %477, %478 : vector<8x128xi1>, vector<8x128xf32>
    %480 = arith.addf %471, %479 : vector<8x128xf32>
    %481 = arith.truncf %480 : vector<8x128xf32> to vector<8x128xbf16>
    %c0_240 = arith.constant 0 : index
    %c0_241 = arith.constant 0 : index
    %482 = vector.load %arg5[%c0_240, %c0_241] : memref<128x256xbf16, #tpu.memory_space<vmem>>, vector<128x256xbf16>
    %cst_242 = arith.constant dense<0.000000e+00> : vector<8x256xf32>
    %483 = tpu.matmul %481, %482, %cst_242 {dimension_numbers = #tpu.dot_dimension_numbers<[1], [0], [0], [1], [0, 0, 1, 1], [], []>} : vector<8x128xbf16>, vector<128x256xbf16>, vector<8x256xf32> -> vector<8x256xf32>
    %c0_243 = arith.constant 0 : index
    %c0_244 = arith.constant 0 : index
    %484 = vector.load %arg9[%c0_243, %c0_244] : memref<8x256xf32, #tpu.memory_space<vmem>>, vector<1x256xf32>
    %485 = vector.broadcast %484 : vector<1x256xf32> to vector<8x256xf32>
    %486 = arith.addf %483, %485 : vector<8x256xf32>
    %cst_245 = arith.constant 0.000000e+00 : f32
    %487 = vector.broadcast %cst_245 : f32 to vector<8x256xf32>
    %488 = arith.maximumf %486, %487 : vector<8x256xf32>
    %489 = arith.truncf %488 : vector<8x256xf32> to vector<8x256xbf16>
    %c0_246 = arith.constant 0 : index
    %c0_247 = arith.constant 0 : index
    %490 = vector.load %arg6[%c0_246, %c0_247] : memref<256x128xbf16, #tpu.memory_space<vmem>>, vector<256x128xbf16>
    %cst_248 = arith.constant dense<0.000000e+00> : vector<8x128xf32>
    %491 = tpu.matmul %489, %490, %cst_248 {dimension_numbers = #tpu.dot_dimension_numbers<[1], [0], [0], [1], [0, 0, 1, 1], [], []>} : vector<8x256xbf16>, vector<256x128xbf16>, vector<8x128xf32> -> vector<8x128xf32>
    %c1_249 = arith.constant 1 : index
    %c0_250 = arith.constant 0 : index
    %492 = vector.load %arg9[%c1_249, %c0_250] : memref<8x256xf32, #tpu.memory_space<vmem>>, vector<1x128xf32>
    %493 = vector.broadcast %492 : vector<1x128xf32> to vector<8x128xf32>
    %494 = arith.addf %491, %493 : vector<8x128xf32>
    %cst_251 = arith.constant 0.000000e+00 : f32
    %495 = vector.broadcast %cst_251 : f32 to vector<8x128xf32>
    %496 = arith.maximumf %494, %495 : vector<8x128xf32>
    %497 = arith.truncf %496 : vector<8x128xf32> to vector<8x128xbf16>
    %c0_252 = arith.constant 0 : index
    %c0_253 = arith.constant 0 : index
    %498 = vector.load %arg7[%c0_252, %c0_253] : memref<128x128xbf16, #tpu.memory_space<vmem>>, vector<128x128xbf16>
    %cst_254 = arith.constant dense<0.000000e+00> : vector<8x128xf32>
    %499 = tpu.matmul %497, %498, %cst_254 {dimension_numbers = #tpu.dot_dimension_numbers<[1], [0], [0], [1], [0, 0, 1, 1], [], []>} : vector<8x128xbf16>, vector<128x128xbf16>, vector<8x128xf32> -> vector<8x128xf32>
    %c2_255 = arith.constant 2 : index
    %c0_256 = arith.constant 0 : index
    %500 = vector.load %arg9[%c2_255, %c0_256] : memref<8x256xf32, #tpu.memory_space<vmem>>, vector<1x128xf32>
    %501 = vector.broadcast %500 : vector<1x128xf32> to vector<8x128xf32>
    %502 = arith.addf %499, %501 : vector<8x128xf32>
    %cst_257 = arith.constant 0.000000e+00 : f32
    %503 = vector.broadcast %cst_257 : f32 to vector<8x128xf32>
    %504 = arith.maximumf %502, %503 : vector<8x128xf32>
    %505 = arith.truncf %504 : vector<8x128xf32> to vector<8x128xbf16>
    %c0_258 = arith.constant 0 : index
    %c0_259 = arith.constant 0 : index
    %506 = vector.load %arg8[%c0_258, %c0_259] : memref<128x128xbf16, #tpu.memory_space<vmem>>, vector<128x128xbf16>
    %cst_260 = arith.constant dense<0.000000e+00> : vector<8x128xf32>
    %507 = tpu.matmul %505, %506, %cst_260 {dimension_numbers = #tpu.dot_dimension_numbers<[1], [0], [0], [1], [0, 0, 1, 1], [], []>} : vector<8x128xbf16>, vector<128x128xbf16>, vector<8x128xf32> -> vector<8x128xf32>
    %c3_261 = arith.constant 3 : index
    %c0_262 = arith.constant 0 : index
    %508 = vector.load %arg9[%c3_261, %c0_262] : memref<8x256xf32, #tpu.memory_space<vmem>>, vector<1x128xf32>
    %509 = vector.broadcast %508 : vector<1x128xf32> to vector<8x128xf32>
    %510 = arith.addf %507, %509 : vector<8x128xf32>
    %c6_i32 = arith.constant 6 : i32
    %511 = vector.broadcast %c6_i32 : i32 to vector<8x128xi32>
    %512 = arith.cmpi slt, %1, %511 : vector<8x128xi32>
    %cst_263 = arith.constant -1.000000e+30 : f32
    %513 = vector.broadcast %cst_263 : f32 to vector<8x128xf32>
    %514 = arith.select %512, %510, %513 : vector<8x128xi1>, vector<8x128xf32>
    %cst_264 = arith.constant dense<0xFF800000> : vector<8xf32>
    %515 = vector.multi_reduction <maximumf>, %514, %cst_264 [1] : vector<8x128xf32> to vector<8xf32>
    %516 = vector.shape_cast %515 : vector<8xf32> to vector<8x1xf32>
    %517 = vector.broadcast %516 : vector<8x1xf32> to vector<8x128xf32>
    %518 = arith.subf %514, %517 : vector<8x128xf32>
    %519 = math.exp %518 : vector<8x128xf32>
    %cst_265 = arith.constant dense<0.000000e+00> : vector<8xf32>
    %520 = vector.multi_reduction <add>, %519, %cst_265 [1] : vector<8x128xf32> to vector<8xf32>
    %521 = vector.shape_cast %520 : vector<8xf32> to vector<8x1xf32>
    %522 = vector.broadcast %521 : vector<8x1xf32> to vector<8x128xf32>
    %523 = arith.divf %519, %522 : vector<8x128xf32>
    %c6_i32_266 = arith.constant 6 : i32
    %524 = vector.broadcast %c6_i32_266 : i32 to vector<8x128xi32>
    %525 = arith.cmpi slt, %1, %524 : vector<8x128xi32>
    %cst_267 = arith.constant 0.000000e+00 : f32
    %526 = vector.broadcast %cst_267 : f32 to vector<8x128xf32>
    %527 = arith.maximumf %510, %526 : vector<8x128xf32>
    %528 = arith.select %525, %523, %527 : vector<8x128xi1>, vector<8x128xf32>
    %c0_268 = arith.constant 0 : index
    %c0_269 = arith.constant 0 : index
    %529 = vector.load %arg10[%c0_268, %c0_269] : memref<8x128xf32, #tpu.memory_space<vmem>>, vector<8x128xf32>
    tpu.vector_store %arg10[%c0_268, %c0_269], %528 {strides = array<i32>} : memref<8x128xf32, #tpu.memory_space<vmem>>, vector<8x128xf32>,
    return
  }
}

</mosaic_0001>

<llo_original>
// kernel: cnn_forward.1
$region0: #{cnn_forward.1}
  #allocation0 [shape = 'u32[]', space=smem, size = 0x4, offset = 0x4, fixed_abs, tag = 'smem constant byte address 0x4 - core index']
  #allocation1 [shape = 'u32[144,128]{1,0:T(1,128)}', space=vmem, size = 0x12000, scoped, tag = 'internal scratch']
  %s0 = inlined_call_operand.vmem [shape: f32[32,128], index: 0, kind: input, shape index: {}]
  %s1 = inlined_call_operand.vmem [shape: bf16[9,32,32], index: 1, kind: input, shape index: {}]
  %s2 = inlined_call_operand.hbm [shape: bf16[128,32], index: 2, kind: input, shape index: {}]
  %s3 = inlined_call_operand.vmem [shape: bf16[3,128,128], index: 3, kind: input, shape index: {}]
  %s4 = inlined_call_operand.vmem [shape: f32[8,128], index: 4, kind: input, shape index: {}]
  %s5 = inlined_call_operand.vmem [shape: bf16[128,256], index: 5, kind: input, shape index: {}]
  %s6 = inlined_call_operand.hbm [shape: bf16[256,128], index: 6, kind: input, shape index: {}]
  %s7 = inlined_call_operand.vmem [shape: bf16[128,128], index: 7, kind: input, shape index: {}]
  %s8 = inlined_call_operand.hbm [shape: bf16[128,128], index: 8, kind: input, shape index: {}]
  %s9 = inlined_call_operand.vmem [shape: f32[8,256], index: 9, kind: input, shape index: {}]
  %s10 = inlined_call_operand.vmem [shape: f32[8,128], index: 10, kind: output, shape index: {}]
  %s11 = sld [smem:[#allocation0]]
  $region62: #{cnn_forward.1} parent=0
    _
  %s13 = ssub.s32 1, %s11
  %s14 = scalar_select 0, %s13, %s11
  $region1: #{cnn_forward.1} parent=0
    #allocation2 [shape = 'u8[32768]{0}', space=vmem, size = 0x8000, scoped, tag = 'input window, operand 2, single buffered']
    #allocation3 [shape = 's32[1]{0}', space=sflag, size = 0x4, scoped, tag = 'scoped memory for cnn_forward.1']
    #allocation4 [shape = 'u8[65536]{0}', space=vmem, size = 0x10000, scoped, tag = 'input window, operand 6, single buffered']
    #allocation5 [shape = 's32[1]{0}', space=sflag, size = 0x4, scoped, tag = 'scoped memory for cnn_forward.1']
    #allocation6 [shape = 'u8[32768]{0}', space=vmem, size = 0x8000, scoped, tag = 'input window, operand 8, single buffered']
    %15 = vsyncpa [#allocation3], 0
    %16 = vsyncpa [#allocation5], 0
    // Predicated region
    $region2: #{cnn_forward.1} parent=1 // pred_check
      _
    $region3: #{cnn_forward.1} parent=1 // pred_check_branch
      %18 = sbr.rel (0) target = $region5
    $region4: #{cnn_forward.1} parent=1 // pred_region
      _
    $region5: #{cnn_forward.1} parent=1 // pred_fallthru
      _
    // Predicated region
    $region6: #{cnn_forward.1} parent=1 // pred_check
      _
    $region7: #{cnn_forward.1} parent=1 // pred_check_branch
      %20 = sbr.rel (0) target = $region9
    $region8: #{cnn_forward.1} parent=1 // pred_region
      _
    $region9: #{cnn_forward.1} parent=1 // pred_fallthru
      _
    // Predicated region
    $region10: #{cnn_forward.1} parent=1 // pred_check
      _
    $region11: #{cnn_forward.1} parent=1 // pred_check_branch
      %22 = sbr.rel (0) target = $region13
    $region12: #{cnn_forward.1} parent=1 // pred_region
      %s24 = ssub.s32 1024, 1024
      %25 = vsyncadd [#allocation3], %s24
      %s26 = sshll.u32 [#allocation2], 4
      %s27 = int_to_ptr.vmem [resolvable:$true] %s26
      %32 = dma.hbm_to_vmem [thread:$0]  %s2, 1024, %s27, [#allocation3], 64, 64, 4
    $region13: #{cnn_forward.1} parent=1 // pred_fallthru
      _
    // Predicated region
    $region14: #{cnn_forward.1} parent=1 // pred_check
      _
    $region15: #{cnn_forward.1} parent=1 // pred_check_branch
      %34 = sbr.rel (0) target = $region17
    $region16: #{cnn_forward.1} parent=1 // pred_region
      _
    $region17: #{cnn_forward.1} parent=1 // pred_fallthru
      _
    // Predicated region
    $region18: #{cnn_forward.1} parent=1 // pred_check
      _
    $region19: #{cnn_forward.1} parent=1 // pred_check_branch
      %36 = sbr.rel (0) target = $region21
    $region20: #{cnn_forward.1} parent=1 // pred_region
      _
    $region21: #{cnn_forward.1} parent=1 // pred_fallthru
      _
    // Predicated region
    $region22: #{cnn_forward.1} parent=1 // pred_check
      _
    $region23: #{cnn_forward.1} parent=1 // pred_check_branch
      %38 = sbr.rel (0) target = $region25
    $region24: #{cnn_forward.1} parent=1 // pred_region
      _
    $region25: #{cnn_forward.1} parent=1 // pred_fallthru
      _
    // Predicated region
    $region26: #{cnn_forward.1} parent=1 // pred_check
      _
    $region27: #{cnn_forward.1} parent=1 // pred_check_branch
      %40 = sbr.rel (0) target = $region29
    $region28: #{cnn_forward.1} parent=1 // pred_region
      %s42 = ssub.s32 2048, 2048
      %43 = vsyncadd [#allocation5], %s42
      %s44 = sshll.u32 [#allocation4], 4
      %s45 = int_to_ptr.vmem [resolvable:$true] %s44
      %50 = dma.hbm_to_vmem [thread:$0]  %s6, 2048, %s45, [#allocation5], 64, 64, 4
    $region29: #{cnn_forward.1} parent=1 // pred_fallthru
      _
    // Predicated region
    $region30: #{cnn_forward.1} parent=1 // pred_check
      _
    $region31: #{cnn_forward.1} parent=1 // pred_check_branch
      %52 = sbr.rel (0) target = $region33
    $region32: #{cnn_forward.1} parent=1 // pred_region
      _
    $region33: #{cnn_forward.1} parent=1 // pred_fallthru
      _
    // Predicated region
    $region34: #{cnn_forward.1} parent=1 // pred_check
      _
    $region35: #{cnn_forward.1} parent=1 // pred_check_branch
      %54 = sbr.rel (0) target = $region37
    $region36: #{cnn_forward.1} parent=1 // pred_region
      %s56 = ssub.s32 1024, 1024
      %57 = vsyncadd [#allocation5], %s56
      %s58 = sshll.u32 [#allocation6], 4
      %s59 = int_to_ptr.vmem [resolvable:$true] %s58
      %64 = dma.hbm_to_vmem [thread:$0]  %s8, 1024, %s59, [#allocation5], 64, 64, 4
    $region37: #{cnn_forward.1} parent=1 // pred_fallthru
      _
    // Predicated region
    $region38: #{cnn_forward.1} parent=1 // pred_check
      _
    $region39: #{cnn_forward.1} parent=1 // pred_check_branch
      %66 = sbr.rel (0) target = $region41
    $region40: #{cnn_forward.1} parent=1 // pred_region
      _
    $region41: #{cnn_forward.1} parent=1 // pred_fallthru
      _
    // Predicated region
    $region42: #{cnn_forward.1} parent=1 // pred_check
      _
    $region43: #{cnn_forward.1} parent=1 // pred_check_branch
      %68 = sbr.rel (0) target = $region45
    $region44: #{cnn_forward.1} parent=1 // pred_region
      %69 = dma.done [#allocation3], 1024
    $region45: #{cnn_forward.1} parent=1 // pred_fallthru
      _
    // Predicated region
    $region46: #{cnn_forward.1} parent=1 // pred_check
      _
    $region47: #{cnn_forward.1} parent=1 // pred_check_branch
      %71 = sbr.rel (0) target = $region49
    $region48: #{cnn_forward.1} parent=1 // pred_region
      %72 = dma.done [#allocation5], 2048
    $region49: #{cnn_forward.1} parent=1 // pred_fallthru
      _
    // Predicated region
    $region50: #{cnn_forward.1} parent=1 // pred_check
      _
    $region51: #{cnn_forward.1} parent=1 // pred_check_branch
      %74 = sbr.rel (0) target = $region53
    $region52: #{cnn_forward.1} parent=1 // pred_region
      %75 = dma.done [#allocation5], 1024
    $region53: #{cnn_forward.1} parent=1 // pred_fallthru
      _
    %v77 = vlaneseq
    %v78 = vand.u32 %v77, 127
    %v79 = vld [vmem:[%s0] sm:$0xff]
    %v80 = vld [vmem:[%s0 + $0x8] sm:$0xff]
    %v81 = vld [vmem:[%s0 + $0x10] sm:$0xff]
    %v82 = vld [vmem:[%s0 + $0x18] sm:$0xff]
    %v83 = vpack.c.bf16 %v80, %v79
    %v84 = vpack.c.bf16 %v82, %v81
    %v85 = vld [vmem:[%s1] sm:$0xf]
    %v86 = vld [vmem:[%s1 + $0x4] sm:$0xf]
    %v87 = vld [vmem:[%s1 + $0x8] sm:$0xf]
    %v88 = vld [vmem:[%s1 + $0xc] sm:$0xf]
    %v93 = vunpack.c.l.b16 %v85
    %v94 = vunpack.c.l.b16 %v86
    %v95 = vunpack.c.l.b16 %v87
    %v96 = vunpack.c.l.b16 %v88
    %v97 = vpack.c.b16 %v94, %v93
    %v98 = vpack.c.b16 %v96, %v95
    %vm99 = vcmask 261120
    %v101 = vsel %vm99, %v97, 0
    %v104 = vsel %vm99, %v98, 0
    %106 = vmatprep.subr.bf16.mxu0 0
    %107 = vmatpush1.bf16.msra.mxu0 0
    %108 = vmatprep.subr.bf16.mxu0 0
    %109 = vmatpush1.bf16.msra.mxu0 0
    %110 = vmatprep.subr.bf16.mxu0 0
    %111 = vmatpush1.bf16.msra.mxu0 0
    %112 = vmatprep.subr.bf16.mxu0 0
    %113 = vmatpush1.bf16.msra.mxu0 0
    %114 = vmatprep.subr.bf16.mxu0 0
    %115 = vmatpush1.bf16.msra.mxu0 0
    %116 = vmatprep.subr.bf16.mxu0 0
    %117 = vmatpush1.bf16.msra.mxu0 0
    %118 = vmatprep.subr.bf16.mxu0 0
    %119 = vmatpush1.bf16.msra.mxu0 %v84
    %120 = vmatprep.subr.bf16.mxu0 0
    %121 = vmatpush1.bf16.msra.mxu0 %v83
    %122 = vmatprep.subr.bf16.mxu0 0
    %123 = vmatpush2.bf16.msra.mxu0 0
    %124 = vmatprep.subr.bf16.mxu0 0
    %125 = vmatpush2.bf16.msra.mxu0 0
    %126 = vmatprep.subr.bf16.mxu0 0
    %127 = vmatpush2.bf16.msra.mxu0 0
    %128 = vmatprep.subr.bf16.mxu0 0
    %129 = vmatpush2.bf16.msra.mxu0 0
    %130 = vmatprep.subr.bf16.mxu0 0
    %131 = vmatpush2.bf16.msra.mxu0 0
    %132 = vmatprep.subr.bf16.mxu0 0
    %133 = vmatpush2.bf16.msra.mxu0 0
    %134 = vmatprep.subr.bf16.mxu0 0
    %135 = vmatpush2.bf16.msra.mxu0 0
    %136 = vmatprep.subr.bf16.mxu0 0
    %137 = vmatpush2.bf16.msra.mxu0 0
    %138 = vmatprep.mubr.bf16.mxu0 0
    %139 = vmatmul.mubr.bf16.gmra.mxu0 %v101
    %v140 = vpop.f32.mrf.mxu0
    %v141 = vadd.f32 0.0, %v140
    %v142 = vpop.f32.mrf.mxu0
    %v143 = vpop.f32.mrf.mxu0
    %v144 = vadd.f32 0.0, %v143
    %v145 = vpop.f32.mrf.mxu0
    %146 = vmatprep.mubr.bf16.mxu0 0
    %147 = vmatmul.mubr.bf16.gmra.mxu0 %v104
    %v148 = vpop.f32.mrf.mxu0
    %v149 = vadd.f32 0.0, %v148
    %v150 = vpop.f32.mrf.mxu0
    %v151 = vpop.f32.mrf.mxu0
    %v152 = vadd.f32 0.0, %v151
    %v153 = vpop.f32.mrf.mxu0
    %154 = vdwg.mxu0
    %vm155 = vcmp.ge.s32.totalorder %v78, 0
    %vm156 = vcmp.lt.s32.totalorder %v78, 7
    %vm157 = vmand %vm155, %vm156
    %v158 = vsel %vm157, %v141, 0.0
    %v159 = vsel %vm157, %v144, 0.0
    %v160 = vsel %vm157, %v149, 0.0
    %v161 = vsel %vm157, %v152, 0.0
    %v162 = vadd.f32 %v158, 0.0
    %v163 = vadd.f32 %v159, 0.0
    %v164 = vadd.f32 %v160, 0.0
    %v165 = vadd.f32 %v161, 0.0
    %s166 = scalar_lea.vmem %s1, 16
    %v167 = vld [vmem:[%s166] sm:$0xf]
    %v168 = vld [vmem:[%s166 + $0x4] sm:$0xf]
    %v169 = vld [vmem:[%s166 + $0x8] sm:$0xf]
    %v170 = vld [vmem:[%s166 + $0xc] sm:$0xf]
    %v175 = vunpack.c.l.b16 %v167
    %v176 = vunpack.c.l.b16 %v168
    %v177 = vunpack.c.l.b16 %v169
    %v178 = vunpack.c.l.b16 %v170
    %v179 = vpack.c.b16 %v176, %v175
    %v180 = vpack.c.b16 %v178, %v177
    %v182 = vsel %vm99, %v179, 0
    %v185 = vsel %vm99, %v180, 0
    %187 = vmatprep.subr.bf16.mxu0 0
    %188 = vmatpush1.bf16.msra.mxu0 0
    %189 = vmatprep.subr.bf16.mxu0 0
    %190 = vmatpush1.bf16.msra.mxu0 0
    %191 = vmatprep.subr.bf16.mxu0 0
    %192 = vmatpush1.bf16.msra.mxu0 0
    %193 = vmatprep.subr.bf16.mxu0 0
    %194 = vmatpush1.bf16.msra.mxu0 0
    %195 = vmatprep.subr.bf16.mxu0 0
    %196 = vmatpush1.bf16.msra.mxu0 0
    %197 = vmatprep.subr.bf16.mxu0 0
    %198 = vmatpush1.bf16.msra.mxu0 0
    %199 = vmatprep.subr.bf16.mxu0 0
    %200 = vmatpush1.bf16.msra.mxu0 %v84
    %201 = vmatprep.subr.bf16.mxu0 0
    %202 = vmatpush1.bf16.msra.mxu0 %v83
    %203 = vmatprep.subr.bf16.mxu0 0
    %204 = vmatpush2.bf16.msra.mxu0 0
    %205 = vmatprep.subr.bf16.mxu0 0
    %206 = vmatpush2.bf16.msra.mxu0 0
    %207 = vmatprep.subr.bf16.mxu0 0
    %208 = vmatpush2.bf16.msra.mxu0 0
    %209 = vmatprep.subr.bf16.mxu0 0
    %210 = vmatpush2.bf16.msra.mxu0 0
    %211 = vmatprep.subr.bf16.mxu0 0
    %212 = vmatpush2.bf16.msra.mxu0 0
    %213 = vmatprep.subr.bf16.mxu0 0
    %214 = vmatpush2.bf16.msra.mxu0 0
    %215 = vmatprep.subr.bf16.mxu0 0
    %216 = vmatpush2.bf16.msra.mxu0 0
    %217 = vmatprep.subr.bf16.mxu0 0
    %218 = vmatpush2.bf16.msra.mxu0 0
    %219 = vmatprep.mubr.bf16.mxu0 0
    %220 = vmatmul.mubr.bf16.gmra.mxu0 %v182
    %v221 = vpop.f32.mrf.mxu0
    %v222 = vadd.f32 0.0, %v221
    %v223 = vpop.f32.mrf.mxu0
    %v224 = vpop.f32.mrf.mxu0
    %v225 = vadd.f32 0.0, %v224
    %v226 = vpop.f32.mrf.mxu0
    %227 = vmatprep.mubr.bf16.mxu0 0
    %228 = vmatmul.mubr.bf16.gmra.mxu0 %v185
    %v229 = vpop.f32.mrf.mxu0
    %v230 = vadd.f32 0.0, %v229
    %v231 = vpop.f32.mrf.mxu0
    %v232 = vpop.f32.mrf.mxu0
    %v233 = vadd.f32 0.0, %v232
    %v234 = vpop.f32.mrf.mxu0
    %235 = vdwg.mxu0
    %vm236 = vcmp.ge.s32.totalorder %v78, 7
    %vm237 = vcmp.lt.s32.totalorder %v78, 14
    %vm238 = vmand %vm236, %vm237
    %v239 = vsel %vm238, %v222, 0.0
    %v240 = vsel %vm238, %v225, 0.0
    %v241 = vsel %vm238, %v230, 0.0
    %v242 = vsel %vm238, %v233, 0.0
    %v243 = vadd.f32 %v162, %v239
    %v244 = vadd.f32 %v163, %v240
    %v245 = vadd.f32 %v164, %v241
    %v246 = vadd.f32 %v165, %v242
    %s247 = scalar_lea.vmem %s1, 32
    %v248 = vld [vmem:[%s247] sm:$0xf]
    %v249 = vld [vmem:[%s247 + $0x4] sm:$0xf]
    %v250 = vld [vmem:[%s247 + $0x8] sm:$0xf]
    %v251 = vld [vmem:[%s247 + $0xc] sm:$0xf]
    %v256 = vunpack.c.l.b16 %v248
    %v257 = vunpack.c.l.b16 %v249
    %v258 = vunpack.c.l.b16 %v250
    %v259 = vunpack.c.l.b16 %v251
    %v260 = vpack.c.b16 %v257, %v256
    %v261 = vpack.c.b16 %v259, %v258
    %v263 = vsel %vm99, %v260, 0
    %v266 = vsel %vm99, %v261, 0
    %268 = vmatprep.subr.bf16.mxu0 0
    %269 = vmatpush1.bf16.msra.mxu0 0
    %270 = vmatprep.subr.bf16.mxu0 0
    %271 = vmatpush1.bf16.msra.mxu0 0
    %272 = vmatprep.subr.bf16.mxu0 0
    %273 = vmatpush1.bf16.msra.mxu0 0
    %274 = vmatprep.subr.bf16.mxu0 0
    %275 = vmatpush1.bf16.msra.mxu0 0
    %276 = vmatprep.subr.bf16.mxu0 0
    %277 = vmatpush1.bf16.msra.mxu0 0
    %278 = vmatprep.subr.bf16.mxu0 0
    %279 = vmatpush1.bf16.msra.mxu0 0
    %280 = vmatprep.subr.bf16.mxu0 0
    %281 = vmatpush1.bf16.msra.mxu0 %v84
    %282 = vmatprep.subr.bf16.mxu0 0
    %283 = vmatpush1.bf16.msra.mxu0 %v83
    %284 = vmatprep.subr.bf16.mxu0 0
    %285 = vmatpush2.bf16.msra.mxu0 0
    %286 = vmatprep.subr.bf16.mxu0 0
    %287 = vmatpush2.bf16.msra.mxu0 0
    %288 = vmatprep.subr.bf16.mxu0 0
    %289 = vmatpush2.bf16.msra.mxu0 0
    %290 = vmatprep.subr.bf16.mxu0 0
    %291 = vmatpush2.bf16.msra.mxu0 0
    %292 = vmatprep.subr.bf16.mxu0 0
    %293 = vmatpush2.bf16.msra.mxu0 0
    %294 = vmatprep.subr.bf16.mxu0 0
    %295 = vmatpush2.bf16.msra.mxu0 0
    %296 = vmatprep.subr.bf16.mxu0 0
    %297 = vmatpush2.bf16.msra.mxu0 0
    %298 = vmatprep.subr.bf16.mxu0 0
    %299 = vmatpush2.bf16.msra.mxu0 0
    %300 = vmatprep.mubr.bf16.mxu0 0
    %301 = vmatmul.mubr.bf16.gmra.mxu0 %v263
    %v302 = vpop.f32.mrf.mxu0
    %v303 = vadd.f32 0.0, %v302
    %v304 = vpop.f32.mrf.mxu0
    %v305 = vpop.f32.mrf.mxu0
    %v306 = vadd.f32 0.0, %v305
    %v307 = vpop.f32.mrf.mxu0
    %308 = vmatprep.mubr.bf16.mxu0 0
    %309 = vmatmul.mubr.bf16.gmra.mxu0 %v266
    %v310 = vpop.f32.mrf.mxu0
    %v311 = vadd.f32 0.0, %v310
    %v312 = vpop.f32.mrf.mxu0
    %v313 = vpop.f32.mrf.mxu0
    %v314 = vadd.f32 0.0, %v313
    %v315 = vpop.f32.mrf.mxu0
    %316 = vdwg.mxu0
    %vm317 = vcmp.ge.s32.totalorder %v78, 14
    %vm318 = vcmp.lt.s32.totalorder %v78, 21
    %vm319 = vmand %vm317, %vm318
    %v320 = vsel %vm319, %v303, 0.0
    %v321 = vsel %vm319, %v306, 0.0
    %v322 = vsel %vm319, %v311, 0.0
    %v323 = vsel %vm319, %v314, 0.0
    %v324 = vadd.f32 %v243, %v320
    %v325 = vadd.f32 %v244, %v321
    %v326 = vadd.f32 %v245, %v322
    %v327 = vadd.f32 %v246, %v323
    %s328 = scalar_lea.vmem %s1, 48
    %v329 = vld [vmem:[%s328] sm:$0xf]
    %v330 = vld [vmem:[%s328 + $0x4] sm:$0xf]
    %v331 = vld [vmem:[%s328 + $0x8] sm:$0xf]
    %v332 = vld [vmem:[%s328 + $0xc] sm:$0xf]
    %v337 = vunpack.c.l.b16 %v329
    %v338 = vunpack.c.l.b16 %v330
    %v339 = vunpack.c.l.b16 %v331
    %v340 = vunpack.c.l.b16 %v332
    %v341 = vpack.c.b16 %v338, %v337
    %v342 = vpack.c.b16 %v340, %v339
    %v344 = vsel %vm99, %v341, 0
    %v347 = vsel %vm99, %v342, 0
    %349 = vmatprep.subr.bf16.mxu0 0
    %350 = vmatpush1.bf16.msra.mxu0 0
    %351 = vmatprep.subr.bf16.mxu0 0
    %352 = vmatpush1.bf16.msra.mxu0 0
    %353 = vmatprep.subr.bf16.mxu0 0
    %354 = vmatpush1.bf16.msra.mxu0 0
    %355 = vmatprep.subr.bf16.mxu0 0
    %356 = vmatpush1.bf16.msra.mxu0 0
    %357 = vmatprep.subr.bf16.mxu0 0
    %358 = vmatpush1.bf16.msra.mxu0 0
    %359 = vmatprep.subr.bf16.mxu0 0
    %360 = vmatpush1.bf16.msra.mxu0 0
    %361 = vmatprep.subr.bf16.mxu0 0
    %362 = vmatpush1.bf16.msra.mxu0 %v84
    %363 = vmatprep.subr.bf16.mxu0 0
    %364 = vmatpush1.bf16.msra.mxu0 %v83
    %365 = vmatprep.subr.bf16.mxu0 0
    %366 = vmatpush2.bf16.msra.mxu0 0
    %367 = vmatprep.subr.bf16.mxu0 0
    %368 = vmatpush2.bf16.msra.mxu0 0
    %369 = vmatprep.subr.bf16.mxu0 0
    %370 = vmatpush2.bf16.msra.mxu0 0
    %371 = vmatprep.subr.bf16.mxu0 0
    %372 = vmatpush2.bf16.msra.mxu0 0
    %373 = vmatprep.subr.bf16.mxu0 0
    %374 = vmatpush2.bf16.msra.mxu0 0
    %375 = vmatprep.subr.bf16.mxu0 0
    %376 = vmatpush2.bf16.msra.mxu0 0
    %377 = vmatprep.subr.bf16.mxu0 0
    %378 = vmatpush2.bf16.msra.mxu0 0
    %379 = vmatprep.subr.bf16.mxu0 0
    %380 = vmatpush2.bf16.msra.mxu0 0
    %381 = vmatprep.mubr.bf16.mxu0 0
    %382 = vmatmul.mubr.bf16.gmra.mxu0 %v344
    %v383 = vpop.f32.mrf.mxu0
    %v384 = vadd.f32 0.0, %v383
    %v385 = vpop.f32.mrf.mxu0
    %v386 = vpop.f32.mrf.mxu0
    %v387 = vadd.f32 0.0, %v386
    %v388 = vpop.f32.mrf.mxu0
    %389 = vmatprep.mubr.bf16.mxu0 0
    %390 = vmatmul.mubr.bf16.gmra.mxu0 %v347
    %v391 = vpop.f32.mrf.mxu0
    %v392 = vadd.f32 0.0, %v391
    %v393 = vpop.f32.mrf.mxu0
    %v394 = vpop.f32.mrf.mxu0
    %v395 = vadd.f32 0.0, %v394
    %v396 = vpop.f32.mrf.mxu0
    %397 = vdwg.mxu0
    %vm398 = vcmp.ge.s32.totalorder %v78, 21
    %vm399 = vcmp.lt.s32.totalorder %v78, 28
    %vm400 = vmand %vm398, %vm399
    %v401 = vsel %vm400, %v384, 0.0
    %v402 = vsel %vm400, %v387, 0.0
    %v403 = vsel %vm400, %v392, 0.0
    %v404 = vsel %vm400, %v395, 0.0
    %v405 = vadd.f32 %v324, %v401
    %v406 = vadd.f32 %v325, %v402
    %v407 = vadd.f32 %v326, %v403
    %v408 = vadd.f32 %v327, %v404
    %s409 = scalar_lea.vmem %s1, 64
    %v410 = vld [vmem:[%s409] sm:$0xf]
    %v411 = vld [vmem:[%s409 + $0x4] sm:$0xf]
    %v412 = vld [vmem:[%s409 + $0x8] sm:$0xf]
    %v413 = vld [vmem:[%s409 + $0xc] sm:$0xf]
    %v418 = vunpack.c.l.b16 %v410
    %v419 = vunpack.c.l.b16 %v411
    %v420 = vunpack.c.l.b16 %v412
    %v421 = vunpack.c.l.b16 %v413
    %v422 = vpack.c.b16 %v419, %v418
    %v423 = vpack.c.b16 %v421, %v420
    %v425 = vsel %vm99, %v422, 0
    %v428 = vsel %vm99, %v423, 0
    %430 = vmatprep.subr.bf16.mxu0 0
    %431 = vmatpush1.bf16.msra.mxu0 0
    %432 = vmatprep.subr.bf16.mxu0 0
    %433 = vmatpush1.bf16.msra.mxu0 0
    %434 = vmatprep.subr.bf16.mxu0 0
    %435 = vmatpush1.bf16.msra.mxu0 0
    %436 = vmatprep.subr.bf16.mxu0 0
    %437 = vmatpush1.bf16.msra.mxu0 0
    %438 = vmatprep.subr.bf16.mxu0 0
    %439 = vmatpush1.bf16.msra.mxu0 0
    %440 = vmatprep.subr.bf16.mxu0 0
    %441 = vmatpush1.bf16.msra.mxu0 0
    %442 = vmatprep.subr.bf16.mxu0 0
    %443 = vmatpush1.bf16.msra.mxu0 %v84
    %444 = vmatprep.subr.bf16.mxu0 0
    %445 = vmatpush1.bf16.msra.mxu0 %v83
    %446 = vmatprep.subr.bf16.mxu0 0
    %447 = vmatpush2.bf16.msra.mxu0 0
    %448 = vmatprep.subr.bf16.mxu0 0
    %449 = vmatpush2.bf16.msra.mxu0 0
    %450 = vmatprep.subr.bf16.mxu0 0
    %451 = vmatpush2.bf16.msra.mxu0 0
    %452 = vmatprep.subr.bf16.mxu0 0
    %453 = vmatpush2.bf16.msra.mxu0 0
    %454 = vmatprep.subr.bf16.mxu0 0
    %455 = vmatpush2.bf16.msra.mxu0 0
    %456 = vmatprep.subr.bf16.mxu0 0
    %457 = vmatpush2.bf16.msra.mxu0 0
    %458 = vmatprep.subr.bf16.mxu0 0
    %459 = vmatpush2.bf16.msra.mxu0 0
    %460 = vmatprep.subr.bf16.mxu0 0
    %461 = vmatpush2.bf16.msra.mxu0 0
    %462 = vmatprep.mubr.bf16.mxu0 0
    %463 = vmatmul.mubr.bf16.gmra.mxu0 %v425
    %v464 = vpop.f32.mrf.mxu0
    %v465 = vadd.f32 0.0, %v464
    %v466 = vpop.f32.mrf.mxu0
    %v467 = vpop.f32.mrf.mxu0
    %v468 = vadd.f32 0.0, %v467
    %v469 = vpop.f32.mrf.mxu0
    %470 = vmatprep.mubr.bf16.mxu0 0
    %471 = vmatmul.mubr.bf16.gmra.mxu0 %v428
    %v472 = vpop.f32.mrf.mxu0
    %v473 = vadd.f32 0.0, %v472
    %v474 = vpop.f32.mrf.mxu0
    %v475 = vpop.f32.mrf.mxu0
    %v476 = vadd.f32 0.0, %v475
    %v477 = vpop.f32.mrf.mxu0
    %478 = vdwg.mxu0
    %vm479 = vcmp.ge.s32.totalorder %v78, 28
    %vm480 = vcmp.lt.s32.totalorder %v78, 35
    %vm481 = vmand %vm479, %vm480
    %v482 = vsel %vm481, %v465, 0.0
    %v483 = vsel %vm481, %v468, 0.0
    %v484 = vsel %vm481, %v473, 0.0
    %v485 = vsel %vm481, %v476, 0.0
    %v486 = vadd.f32 %v405, %v482
    %v487 = vadd.f32 %v406, %v483
    %v488 = vadd.f32 %v407, %v484
    %v489 = vadd.f32 %v408, %v485
    %s490 = scalar_lea.vmem %s1, 80
    %v491 = vld [vmem:[%s490] sm:$0xf]
    %v492 = vld [vmem:[%s490 + $0x4] sm:$0xf]
    %v493 = vld [vmem:[%s490 + $0x8] sm:$0xf]
    %v494 = vld [vmem:[%s490 + $0xc] sm:$0xf]
    %v499 = vunpack.c.l.b16 %v491
    %v500 = vunpack.c.l.b16 %v492
    %v501 = vunpack.c.l.b16 %v493
    %v502 = vunpack.c.l.b16 %v494
    %v503 = vpack.c.b16 %v500, %v499
    %v504 = vpack.c.b16 %v502, %v501
    %v506 = vsel %vm99, %v503, 0
    %v509 = vsel %vm99, %v504, 0
    %511 = vmatprep.subr.bf16.mxu0 0
    %512 = vmatpush1.bf16.msra.mxu0 0
    %513 = vmatprep.subr.bf16.mxu0 0
    %514 = vmatpush1.bf16.msra.mxu0 0
    %515 = vmatprep.subr.bf16.mxu0 0
    %516 = vmatpush1.bf16.msra.mxu0 0
    %517 = vmatprep.subr.bf16.mxu0 0
    %518 = vmatpush1.bf16.msra.mxu0 0
    %519 = vmatprep.subr.bf16.mxu0 0
    %520 = vmatpush1.bf16.msra.mxu0 0
    %521 = vmatprep.subr.bf16.mxu0 0
    %522 = vmatpush1.bf16.msra.mxu0 0
    %523 = vmatprep.subr.bf16.mxu0 0
    %524 = vmatpush1.bf16.msra.mxu0 %v84
    %525 = vmatprep.subr.bf16.mxu0 0
    %526 = vmatpush1.bf16.msra.mxu0 %v83
    %527 = vmatprep.subr.bf16.mxu0 0
    %528 = vmatpush2.bf16.msra.mxu0 0
    %529 = vmatprep.subr.bf16.mxu0 0
    %530 = vmatpush2.bf16.msra.mxu0 0
    %531 = vmatprep.subr.bf16.mxu0 0
    %532 = vmatpush2.bf16.msra.mxu0 0
    %533 = vmatprep.subr.bf16.mxu0 0
    %534 = vmatpush2.bf16.msra.mxu0 0
    %535 = vmatprep.subr.bf16.mxu0 0
    %536 = vmatpush2.bf16.msra.mxu0 0
    %537 = vmatprep.subr.bf16.mxu0 0
    %538 = vmatpush2.bf16.msra.mxu0 0
    %539 = vmatprep.subr.bf16.mxu0 0
    %540 = vmatpush2.bf16.msra.mxu0 0
    %541 = vmatprep.subr.bf16.mxu0 0
    %542 = vmatpush2.bf16.msra.mxu0 0
    %543 = vmatprep.mubr.bf16.mxu0 0
    %544 = vmatmul.mubr.bf16.gmra.mxu0 %v506
    %v545 = vpop.f32.mrf.mxu0
    %v546 = vadd.f32 0.0, %v545
    %v547 = vpop.f32.mrf.mxu0
    %v548 = vpop.f32.mrf.mxu0
    %v549 = vadd.f32 0.0, %v548
    %v550 = vpop.f32.mrf.mxu0
    %551 = vmatprep.mubr.bf16.mxu0 0
    %552 = vmatmul.mubr.bf16.gmra.mxu0 %v509
    %v553 = vpop.f32.mrf.mxu0
    %v554 = vadd.f32 0.0, %v553
    %v555 = vpop.f32.mrf.mxu0
    %v556 = vpop.f32.mrf.mxu0
    %v557 = vadd.f32 0.0, %v556
    %v558 = vpop.f32.mrf.mxu0
    %559 = vdwg.mxu0
    %vm560 = vcmp.ge.s32.totalorder %v78, 35
    %vm561 = vcmp.lt.s32.totalorder %v78, 42
    %vm562 = vmand %vm560, %vm561
    %v563 = vsel %vm562, %v546, 0.0
    %v564 = vsel %vm562, %v549, 0.0
    %v565 = vsel %vm562, %v554, 0.0
    %v566 = vsel %vm562, %v557, 0.0
    %v567 = vadd.f32 %v486, %v563
    %v568 = vadd.f32 %v487, %v564
    %v569 = vadd.f32 %v488, %v565
    %v570 = vadd.f32 %v489, %v566
    %s571 = scalar_lea.vmem %s1, 96
    %v572 = vld [vmem:[%s571] sm:$0xf]
    %v573 = vld [vmem:[%s571 + $0x4] sm:$0xf]
    %v574 = vld [vmem:[%s571 + $0x8] sm:$0xf]
    %v575 = vld [vmem:[%s571 + $0xc] sm:$0xf]
    %v580 = vunpack.c.l.b16 %v572
    %v581 = vunpack.c.l.b16 %v573
    %v582 = vunpack.c.l.b16 %v574
    %v583 = vunpack.c.l.b16 %v575
    %v584 = vpack.c.b16 %v581, %v580
    %v585 = vpack.c.b16 %v583, %v582
    %v587 = vsel %vm99, %v584, 0
    %v590 = vsel %vm99, %v585, 0
    %592 = vmatprep.subr.bf16.mxu0 0
    %593 = vmatpush1.bf16.msra.mxu0 0
    %594 = vmatprep.subr.bf16.mxu0 0
    %595 = vmatpush1.bf16.msra.mxu0 0
    %596 = vmatprep.subr.bf16.mxu0 0
    %597 = vmatpush1.bf16.msra.mxu0 0
    %598 = vmatprep.subr.bf16.mxu0 0
    %599 = vmatpush1.bf16.msra.mxu0 0
    %600 = vmatprep.subr.bf16.mxu0 0
    %601 = vmatpush1.bf16.msra.mxu0 0
    %602 = vmatprep.subr.bf16.mxu0 0
    %603 = vmatpush1.bf16.msra.mxu0 0
    %604 = vmatprep.subr.bf16.mxu0 0
    %605 = vmatpush1.bf16.msra.mxu0 %v84
    %606 = vmatprep.subr.bf16.mxu0 0
    %607 = vmatpush1.bf16.msra.mxu0 %v83
    %608 = vmatprep.subr.bf16.mxu0 0
    %609 = vmatpush2.bf16.msra.mxu0 0
    %610 = vmatprep.subr.bf16.mxu0 0
    %611 = vmatpush2.bf16.msra.mxu0 0
    %612 = vmatprep.subr.bf16.mxu0 0
    %613 = vmatpush2.bf16.msra.mxu0 0
    %614 = vmatprep.subr.bf16.mxu0 0
    %615 = vmatpush2.bf16.msra.mxu0 0
    %616 = vmatprep.subr.bf16.mxu0 0
    %617 = vmatpush2.bf16.msra.mxu0 0
    %618 = vmatprep.subr.bf16.mxu0 0
    %619 = vmatpush2.bf16.msra.mxu0 0
    %620 = vmatprep.subr.bf16.mxu0 0
    %621 = vmatpush2.bf16.msra.mxu0 0
    %622 = vmatprep.subr.bf16.mxu0 0
    %623 = vmatpush2.bf16.msra.mxu0 0
    %624 = vmatprep.mubr.bf16.mxu0 0
    %625 = vmatmul.mubr.bf16.gmra.mxu0 %v587
    %v626 = vpop.f32.mrf.mxu0
    %v627 = vadd.f32 0.0, %v626
    %v628 = vpop.f32.mrf.mxu0
    %v629 = vpop.f32.mrf.mxu0
    %v630 = vadd.f32 0.0, %v629
    %v631 = vpop.f32.mrf.mxu0
    %632 = vmatprep.mubr.bf16.mxu0 0
    %633 = vmatmul.mubr.bf16.gmra.mxu0 %v590
    %v634 = vpop.f32.mrf.mxu0
    %v635 = vadd.f32 0.0, %v634
    %v636 = vpop.f32.mrf.mxu0
    %v637 = vpop.f32.mrf.mxu0
    %v638 = vadd.f32 0.0, %v637
    %v639 = vpop.f32.mrf.mxu0
    %640 = vdwg.mxu0
    %vm641 = vcmp.ge.s32.totalorder %v78, 42
    %vm642 = vcmp.lt.s32.totalorder %v78, 49
    %vm643 = vmand %vm641, %vm642
    %v644 = vsel %vm643, %v627, 0.0
    %v645 = vsel %vm643, %v630, 0.0
    %v646 = vsel %vm643, %v635, 0.0
    %v647 = vsel %vm643, %v638, 0.0
    %v648 = vadd.f32 %v567, %v644
    %v649 = vadd.f32 %v568, %v645
    %v650 = vadd.f32 %v569, %v646
    %v651 = vadd.f32 %v570, %v647
    %s652 = scalar_lea.vmem %s1, 112
    %v653 = vld [vmem:[%s652] sm:$0xf]
    %v654 = vld [vmem:[%s652 + $0x4] sm:$0xf]
    %v655 = vld [vmem:[%s652 + $0x8] sm:$0xf]
    %v656 = vld [vmem:[%s652 + $0xc] sm:$0xf]
    %v661 = vunpack.c.l.b16 %v653
    %v662 = vunpack.c.l.b16 %v654
    %v663 = vunpack.c.l.b16 %v655
    %v664 = vunpack.c.l.b16 %v656
    %v665 = vpack.c.b16 %v662, %v661
    %v666 = vpack.c.b16 %v664, %v663
    %v668 = vsel %vm99, %v665, 0
    %v671 = vsel %vm99, %v666, 0
    %673 = vmatprep.subr.bf16.mxu0 0
    %674 = vmatpush1.bf16.msra.mxu0 0
    %675 = vmatprep.subr.bf16.mxu0 0
    %676 = vmatpush1.bf16.msra.mxu0 0
    %677 = vmatprep.subr.bf16.mxu0 0
    %678 = vmatpush1.bf16.msra.mxu0 0
    %679 = vmatprep.subr.bf16.mxu0 0
    %680 = vmatpush1.bf16.msra.mxu0 0
    %681 = vmatprep.subr.bf16.mxu0 0
    %682 = vmatpush1.bf16.msra.mxu0 0
    %683 = vmatprep.subr.bf16.mxu0 0
    %684 = vmatpush1.bf16.msra.mxu0 0
    %685 = vmatprep.subr.bf16.mxu0 0
    %686 = vmatpush1.bf16.msra.mxu0 %v84
    %687 = vmatprep.subr.bf16.mxu0 0
    %688 = vmatpush1.bf16.msra.mxu0 %v83
    %689 = vmatprep.subr.bf16.mxu0 0
    %690 = vmatpush2.bf16.msra.mxu0 0
    %691 = vmatprep.subr.bf16.mxu0 0
    %692 = vmatpush2.bf16.msra.mxu0 0
    %693 = vmatprep.subr.bf16.mxu0 0
    %694 = vmatpush2.bf16.msra.mxu0 0
    %695 = vmatprep.subr.bf16.mxu0 0
    %696 = vmatpush2.bf16.msra.mxu0 0
    %697 = vmatprep.subr.bf16.mxu0 0
    %698 = vmatpush2.bf16.msra.mxu0 0
    %699 = vmatprep.subr.bf16.mxu0 0
    %700 = vmatpush2.bf16.msra.mxu0 0
    %701 = vmatprep.subr.bf16.mxu0 0
    %702 = vmatpush2.bf16.msra.mxu0 0
    %703 = vmatprep.subr.bf16.mxu0 0
    %704 = vmatpush2.bf16.msra.mxu0 0
    %705 = vmatprep.mubr.bf16.mxu0 0
    %706 = vmatmul.mubr.bf16.gmra.mxu0 %v668
    %v707 = vpop.f32.mrf.mxu0
    %v708 = vadd.f32 0.0, %v707
    %v709 = vpop.f32.mrf.mxu0
    %v710 = vpop.f32.mrf.mxu0
    %v711 = vadd.f32 0.0, %v710
    %v712 = vpop.f32.mrf.mxu0
    %713 = vmatprep.mubr.bf16.mxu0 0
    %714 = vmatmul.mubr.bf16.gmra.mxu0 %v671
    %v715 = vpop.f32.mrf.mxu0
    %v716 = vadd.f32 0.0, %v715
    %v717 = vpop.f32.mrf.mxu0
    %v718 = vpop.f32.mrf.mxu0
    %v719 = vadd.f32 0.0, %v718
    %v720 = vpop.f32.mrf.mxu0
    %721 = vdwg.mxu0
    %vm722 = vcmp.ge.s32.totalorder %v78, 49
    %vm723 = vcmp.lt.s32.totalorder %v78, 56
    %vm724 = vmand %vm722, %vm723
    %v725 = vsel %vm724, %v708, 0.0
    %v726 = vsel %vm724, %v711, 0.0
    %v727 = vsel %vm724, %v716, 0.0
    %v728 = vsel %vm724, %v719, 0.0
    %v729 = vadd.f32 %v648, %v725
    %v730 = vadd.f32 %v649, %v726
    %v731 = vadd.f32 %v650, %v727
    %v732 = vadd.f32 %v651, %v728
    %s733 = scalar_lea.vmem %s1, 128
    %v734 = vld [vmem:[%s733] sm:$0xf]
    %v735 = vld [vmem:[%s733 + $0x4] sm:$0xf]
    %v736 = vld [vmem:[%s733 + $0x8] sm:$0xf]
    %v737 = vld [vmem:[%s733 + $0xc] sm:$0xf]
    %v742 = vunpack.c.l.b16 %v734
    %v743 = vunpack.c.l.b16 %v735
    %v744 = vunpack.c.l.b16 %v736
    %v745 = vunpack.c.l.b16 %v737
    %v746 = vpack.c.b16 %v743, %v742
    %v747 = vpack.c.b16 %v745, %v744
    %v749 = vsel %vm99, %v746, 0
    %v752 = vsel %vm99, %v747, 0
    %754 = vmatprep.subr.bf16.mxu0 0
    %755 = vmatpush1.bf16.msra.mxu0 0
    %756 = vmatprep.subr.bf16.mxu0 0
    %757 = vmatpush1.bf16.msra.mxu0 0
    %758 = vmatprep.subr.bf16.mxu0 0
    %759 = vmatpush1.bf16.msra.mxu0 0
    %760 = vmatprep.subr.bf16.mxu0 0
    %761 = vmatpush1.bf16.msra.mxu0 0
    %762 = vmatprep.subr.bf16.mxu0 0
    %763 = vmatpush1.bf16.msra.mxu0 0
    %764 = vmatprep.subr.bf16.mxu0 0
    %765 = vmatpush1.bf16.msra.mxu0 0
    %766 = vmatprep.subr.bf16.mxu0 0
    %767 = vmatpush1.bf16.msra.mxu0 %v84
    %768 = vmatprep.subr.bf16.mxu0 0
    %769 = vmatpush1.bf16.msra.mxu0 %v83
    %770 = vmatprep.subr.bf16.mxu0 0
    %771 = vmatpush2.bf16.msra.mxu0 0
    %772 = vmatprep.subr.bf16.mxu0 0
    %773 = vmatpush2.bf16.msra.mxu0 0
    %774 = vmatprep.subr.bf16.mxu0 0
    %775 = vmatpush2.bf16.msra.mxu0 0
    %776 = vmatprep.subr.bf16.mxu0 0
    %777 = vmatpush2.bf16.msra.mxu0 0
    %778 = vmatprep.subr.bf16.mxu0 0
    %779 = vmatpush2.bf16.msra.mxu0 0
    %780 = vmatprep.subr.bf16.mxu0 0
    %781 = vmatpush2.bf16.msra.mxu0 0
    %782 = vmatprep.subr.bf16.mxu0 0
    %783 = vmatpush2.bf16.msra.mxu0 0
    %784 = vmatprep.subr.bf16.mxu0 0
    %785 = vmatpush2.bf16.msra.mxu0 0
    %786 = vmatprep.mubr.bf16.mxu0 0
    %787 = vmatmul.mubr.bf16.gmra.mxu0 %v749
    %v788 = vpop.f32.mrf.mxu0
    %v789 = vadd.f32 0.0, %v788
    %v790 = vpop.f32.mrf.mxu0
    %v791 = vpop.f32.mrf.mxu0
    %v792 = vadd.f32 0.0, %v791
    %v793 = vpop.f32.mrf.mxu0
    %794 = vmatprep.mubr.bf16.mxu0 0
    %795 = vmatmul.mubr.bf16.gmra.mxu0 %v752
    %v796 = vpop.f32.mrf.mxu0
    %v797 = vadd.f32 0.0, %v796
    %v798 = vpop.f32.mrf.mxu0
    %v799 = vpop.f32.mrf.mxu0
    %v800 = vadd.f32 0.0, %v799
    %v801 = vpop.f32.mrf.mxu0
    %802 = vdwg.mxu0
    %vm803 = vcmp.ge.s32.totalorder %v78, 56
    %vm804 = vcmp.lt.s32.totalorder %v78, 63
    %vm805 = vmand %vm803, %vm804
    %v806 = vsel %vm805, %v789, 0.0
    %v807 = vsel %vm805, %v792, 0.0
    %v808 = vsel %vm805, %v797, 0.0
    %v809 = vsel %vm805, %v800, 0.0
    %v810 = vadd.f32 %v729, %v806
    %v811 = vadd.f32 %v730, %v807
    %v812 = vadd.f32 %v731, %v808
    %v813 = vadd.f32 %v732, %v809
    %v814 = vpack.c.bf16 %v811, %v810
    %v815 = vpack.c.bf16 %v813, %v812
    %v816 = vld [vmem:[%s3] sm:$0xf]
    %v817 = vld [vmem:[%s3 + $0x4] sm:$0xf]
    %v818 = vld [vmem:[%s3 + $0x8] sm:$0xf]
    %v819 = vld [vmem:[%s3 + $0xc] sm:$0xf]
    %v820 = vld [vmem:[%s3 + $0x10] sm:$0xf]
    %v821 = vld [vmem:[%s3 + $0x14] sm:$0xf]
    %v822 = vld [vmem:[%s3 + $0x18] sm:$0xf]
    %v823 = vld [vmem:[%s3 + $0x1c] sm:$0xf]
    %v824 = vld [vmem:[%s3 + $0x20] sm:$0xf]
    %v825 = vld [vmem:[%s3 + $0x24] sm:$0xf]
    %v826 = vld [vmem:[%s3 + $0x28] sm:$0xf]
    %v827 = vld [vmem:[%s3 + $0x2c] sm:$0xf]
    %v828 = vld [vmem:[%s3 + $0x30] sm:$0xf]
    %v829 = vld [vmem:[%s3 + $0x34] sm:$0xf]
    %v830 = vld [vmem:[%s3 + $0x38] sm:$0xf]
    %v831 = vld [vmem:[%s3 + $0x3c] sm:$0xf]
    %v832 = vld [vmem:[%s4] sm:$0x1]
    %v833 = vlaneseq
    %v834 = vshrl.u32 %v833, 7
    %v835 = vsub.s32 0, %v834
    %v836 = vrot.slane %v832, %v835
    %v853 = vunpack.c.l.b16 %v816
    %v854 = vunpack.c.l.b16 %v817
    %v855 = vunpack.c.l.b16 %v818
    %v856 = vunpack.c.l.b16 %v819
    %v857 = vunpack.c.l.b16 %v820
    %v858 = vunpack.c.l.b16 %v821
    %v859 = vunpack.c.l.b16 %v822
    %v860 = vunpack.c.l.b16 %v823
    %v861 = vunpack.c.l.b16 %v824
    %v862 = vunpack.c.l.b16 %v825
    %v863 = vunpack.c.l.b16 %v826
    %v864 = vunpack.c.l.b16 %v827
    %v865 = vunpack.c.l.b16 %v828
    %v866 = vunpack.c.l.b16 %v829
    %v867 = vunpack.c.l.b16 %v830
    %v868 = vunpack.c.l.b16 %v831
    %v869 = vpack.c.b16 %v854, %v853
    %v870 = vpack.c.b16 %v856, %v855
    %v871 = vpack.c.b16 %v858, %v857
    %v872 = vpack.c.b16 %v860, %v859
    %v873 = vpack.c.b16 %v862, %v861
    %v874 = vpack.c.b16 %v864, %v863
    %v875 = vpack.c.b16 %v866, %v865
    %v876 = vpack.c.b16 %v868, %v867
    %885 = vmatprep.subr.bf16.mxu0 0
    %886 = vmatpush1.bf16.msra.mxu0 %v876
    %887 = vmatprep.subr.bf16.mxu0 0
    %888 = vmatpush1.bf16.msra.mxu0 %v875
    %889 = vmatprep.subr.bf16.mxu0 0
    %890 = vmatpush1.bf16.msra.mxu0 %v874
    %891 = vmatprep.subr.bf16.mxu0 0
    %892 = vmatpush1.bf16.msra.mxu0 %v873
    %893 = vmatprep.subr.bf16.mxu0 0
    %894 = vmatpush1.bf16.msra.mxu0 %v872
    %895 = vmatprep.subr.bf16.mxu0 0
    %896 = vmatpush1.bf16.msra.mxu0 %v871
    %897 = vmatprep.subr.bf16.mxu0 0
    %898 = vmatpush1.bf16.msra.mxu0 %v870
    %899 = vmatprep.subr.bf16.mxu0 0
    %900 = vmatpush1.bf16.msra.mxu0 %v869
    %901 = vmatprep.subr.bf16.mxu0 0
    %902 = vmatpush2.bf16.msra.mxu0 0
    %903 = vmatprep.subr.bf16.mxu0 0
    %904 = vmatpush2.bf16.msra.mxu0 0
    %905 = vmatprep.subr.bf16.mxu0 0
    %906 = vmatpush2.bf16.msra.mxu0 0
    %907 = vmatprep.subr.bf16.mxu0 0
    %908 = vmatpush2.bf16.msra.mxu0 0
    %909 = vmatprep.subr.bf16.mxu0 0
    %910 = vmatpush2.bf16.msra.mxu0 0
    %911 = vmatprep.subr.bf16.mxu0 0
    %912 = vmatpush2.bf16.msra.mxu0 0
    %913 = vmatprep.subr.bf16.mxu0 0
    %914 = vmatpush2.bf16.msra.mxu0 0
    %915 = vmatprep.subr.bf16.mxu0 0
    %916 = vmatpush2.bf16.msra.mxu0 0
    %917 = vmatprep.mubr.bf16.mxu0 0
    %918 = vmatmul.mubr.bf16.gmra.mxu0 %v814
    %v919 = vpop.f32.mrf.mxu0
    %v920 = vadd.f32 %v836, %v919
    %v921 = vpop.f32.mrf.mxu0
    %v922 = vpop.f32.mrf.mxu0
    %v923 = vadd.f32 %v836, %v922
    %v924 = vpop.f32.mrf.mxu0
    %925 = vmatprep.mubr.bf16.mxu0 0
    %926 = vmatmul.mubr.bf16.gmra.mxu0 %v815
    %v927 = vpop.f32.mrf.mxu0
    %v928 = vadd.f32 %v836, %v927
    %v929 = vpop.f32.mrf.mxu0
    %v930 = vpop.f32.mrf.mxu0
    %v931 = vadd.f32 %v836, %v930
    %v932 = vpop.f32.mrf.mxu0
    %933 = vdwg.mxu0
    %v934 = vmax.f32 %v920, 0.0
    %v935 = vmax.f32 %v923, 0.0
    %v936 = vmax.f32 %v928, 0.0
    %v937 = vmax.f32 %v931, 0.0
    %v938 = vpack.c.bf16 %v935, %v934
    %v939 = vpack.c.bf16 %v937, %v936
    %940 = vmatprep.subr.bf16.mxu0 0
    %941 = vmatpush1.bf16.msra.mxu0 0
    %942 = vmatprep.subr.bf16.mxu0 0
    %943 = vmatpush1.bf16.msra.mxu0 0
    %944 = vmatprep.subr.bf16.mxu0 0
    %945 = vmatpush1.bf16.msra.mxu0 0
    %946 = vmatprep.subr.bf16.mxu0 0
    %947 = vmatpush1.bf16.msra.mxu0 0
    %948 = vmatprep.subr.bf16.mxu0 0
    %949 = vmatpush1.bf16.msra.mxu0 0
    %950 = vmatprep.subr.bf16.mxu0 0
    %951 = vmatpush1.bf16.msra.mxu0 0
    %952 = vmatprep.subr.bf16.mxu0 0
    %953 = vmatpush1.bf16.msra.mxu0 %v939
    %954 = vmatprep.subr.bf16.mxu0 0
    %955 = vmatpush1.bf16.msra.mxu0 %v938
    %956 = vmatprep.subr.bf16.mxu0 0
    %957 = vmatpush2.bf16.msra.mxu0 0
    %958 = vmatprep.subr.bf16.mxu0 0
    %959 = vmatpush2.bf16.msra.mxu0 0
    %960 = vmatprep.subr.bf16.mxu0 0
    %961 = vmatpush2.bf16.msra.mxu0 0
    %962 = vmatprep.subr.bf16.mxu0 0
    %963 = vmatpush2.bf16.msra.mxu0 0
    %964 = vmatprep.subr.bf16.mxu0 0
    %965 = vmatpush2.bf16.msra.mxu0 0
    %966 = vmatprep.subr.bf16.mxu0 0
    %967 = vmatpush2.bf16.msra.mxu0 0
    %968 = vmatprep.subr.bf16.mxu0 0
    %969 = vmatpush2.bf16.msra.mxu0 0
    %970 = vmatprep.subr.bf16.mxu0 0
    %971 = vmatpush2.bf16.msra.mxu0 0
    %972 = vmatprep.mubr.bf16.mxu0 0
    %973 = vmatmul.mubr.bf16.gmra.mxu0 %v101
    %v974 = vpop.f32.mrf.mxu0
    %v975 = vadd.f32 0.0, %v974
    %v976 = vpop.f32.mrf.mxu0
    %v977 = vpop.f32.mrf.mxu0
    %v978 = vadd.f32 0.0, %v977
    %v979 = vpop.f32.mrf.mxu0
    %980 = vmatprep.mubr.bf16.mxu0 0
    %981 = vmatmul.mubr.bf16.gmra.mxu0 %v104
    %v982 = vpop.f32.mrf.mxu0
    %v983 = vadd.f32 0.0, %v982
    %v984 = vpop.f32.mrf.mxu0
    %v985 = vpop.f32.mrf.mxu0
    %v986 = vadd.f32 0.0, %v985
    %v987 = vpop.f32.mrf.mxu0
    %988 = vdwg.mxu0
    %v989 = vsel %vm157, %v975, 0.0
    %v990 = vsel %vm157, %v978, 0.0
    %v991 = vsel %vm157, %v983, 0.0
    %v992 = vsel %vm157, %v986, 0.0
    %v993 = vadd.f32 %v989, 0.0
    %v994 = vadd.f32 %v990, 0.0
    %v995 = vadd.f32 %v991, 0.0
    %v996 = vadd.f32 %v992, 0.0
    %997 = vmatprep.subr.bf16.mxu0 0
    %998 = vmatpush1.bf16.msra.mxu0 0
    %999 = vmatprep.subr.bf16.mxu0 0
    %1000 = vmatpush1.bf16.msra.mxu0 0
    %1001 = vmatprep.subr.bf16.mxu0 0
    %1002 = vmatpush1.bf16.msra.mxu0 0
    %1003 = vmatprep.subr.bf16.mxu0 0
    %1004 = vmatpush1.bf16.msra.mxu0 0
    %1005 = vmatprep.subr.bf16.mxu0 0
    %1006 = vmatpush1.bf16.msra.mxu0 0
    %1007 = vmatprep.subr.bf16.mxu0 0
    %1008 = vmatpush1.bf16.msra.mxu0 0
    %1009 = vmatprep.subr.bf16.mxu0 0
    %1010 = vmatpush1.bf16.msra.mxu0 %v939
    %1011 = vmatprep.subr.bf16.mxu0 0
    %1012 = vmatpush1.bf16.msra.mxu0 %v938
    %1013 = vmatprep.subr.bf16.mxu0 0
    %1014 = vmatpush2.bf16.msra.mxu0 0
    %1015 = vmatprep.subr.bf16.mxu0 0
    %1016 = vmatpush2.bf16.msra.mxu0 0
    %1017 = vmatprep.subr.bf16.mxu0 0
    %1018 = vmatpush2.bf16.msra.mxu0 0
    %1019 = vmatprep.subr.bf16.mxu0 0
    %1020 = vmatpush2.bf16.msra.mxu0 0
    %1021 = vmatprep.subr.bf16.mxu0 0
    %1022 = vmatpush2.bf16.msra.mxu0 0
    %1023 = vmatprep.subr.bf16.mxu0 0
    %1024 = vmatpush2.bf16.msra.mxu0 0
    %1025 = vmatprep.subr.bf16.mxu0 0
    %1026 = vmatpush2.bf16.msra.mxu0 0
    %1027 = vmatprep.subr.bf16.mxu0 0
    %1028 = vmatpush2.bf16.msra.mxu0 0
    %1029 = vmatprep.mubr.bf16.mxu0 0
    %1030 = vmatmul.mubr.bf16.gmra.mxu0 %v182
    %v1031 = vpop.f32.mrf.mxu0
    %v1032 = vadd.f32 0.0, %v1031
    %v1033 = vpop.f32.mrf.mxu0
    %v1034 = vpop.f32.mrf.mxu0
    %v1035 = vadd.f32 0.0, %v1034
    %v1036 = vpop.f32.mrf.mxu0
    %1037 = vmatprep.mubr.bf16.mxu0 0
    %1038 = vmatmul.mubr.bf16.gmra.mxu0 %v185
    %v1039 = vpop.f32.mrf.mxu0
    %v1040 = vadd.f32 0.0, %v1039
    %v1041 = vpop.f32.mrf.mxu0
    %v1042 = vpop.f32.mrf.mxu0
    %v1043 = vadd.f32 0.0, %v1042
    %v1044 = vpop.f32.mrf.mxu0
    %1045 = vdwg.mxu0
    %v1046 = vsel %vm238, %v1032, 0.0
    %v1047 = vsel %vm238, %v1035, 0.0
    %v1048 = vsel %vm238, %v1040, 0.0
    %v1049 = vsel %vm238, %v1043, 0.0
    %v1050 = vadd.f32 %v993, %v1046
    %v1051 = vadd.f32 %v994, %v1047
    %v1052 = vadd.f32 %v995, %v1048
    %v1053 = vadd.f32 %v996, %v1049
    %1054 = vmatprep.subr.bf16.mxu0 0
    %1055 = vmatpush1.bf16.msra.mxu0 0
    %1056 = vmatprep.subr.bf16.mxu0 0
    %1057 = vmatpush1.bf16.msra.mxu0 0
    %1058 = vmatprep.subr.bf16.mxu0 0
    %1059 = vmatpush1.bf16.msra.mxu0 0
    %1060 = vmatprep.subr.bf16.mxu0 0
    %1061 = vmatpush1.bf16.msra.mxu0 0
    %1062 = vmatprep.subr.bf16.mxu0 0
    %1063 = vmatpush1.bf16.msra.mxu0 0
    %1064 = vmatprep.subr.bf16.mxu0 0
    %1065 = vmatpush1.bf16.msra.mxu0 0
    %1066 = vmatprep.subr.bf16.mxu0 0
    %1067 = vmatpush1.bf16.msra.mxu0 %v939
    %1068 = vmatprep.subr.bf16.mxu0 0
    %1069 = vmatpush1.bf16.msra.mxu0 %v938
    %1070 = vmatprep.subr.bf16.mxu0 0
    %1071 = vmatpush2.bf16.msra.mxu0 0
    %1072 = vmatprep.subr.bf16.mxu0 0
    %1073 = vmatpush2.bf16.msra.mxu0 0
    %1074 = vmatprep.subr.bf16.mxu0 0
    %1075 = vmatpush2.bf16.msra.mxu0 0
    %1076 = vmatprep.subr.bf16.mxu0 0
    %1077 = vmatpush2.bf16.msra.mxu0 0
    %1078 = vmatprep.subr.bf16.mxu0 0
    %1079 = vmatpush2.bf16.msra.mxu0 0
    %1080 = vmatprep.subr.bf16.mxu0 0
    %1081 = vmatpush2.bf16.msra.mxu0 0
    %1082 = vmatprep.subr.bf16.mxu0 0
    %1083 = vmatpush2.bf16.msra.mxu0 0
    %1084 = vmatprep.subr.bf16.mxu0 0
    %1085 = vmatpush2.bf16.msra.mxu0 0
    %1086 = vmatprep.mubr.bf16.mxu0 0
    %1087 = vmatmul.mubr.bf16.gmra.mxu0 %v263
    %v1088 = vpop.f32.mrf.mxu0
    %v1089 = vadd.f32 0.0, %v1088
    %v1090 = vpop.f32.mrf.mxu0
    %v1091 = vpop.f32.mrf.mxu0
    %v1092 = vadd.f32 0.0, %v1091
    %v1093 = vpop.f32.mrf.mxu0
    %1094 = vmatprep.mubr.bf16.mxu0 0
    %1095 = vmatmul.mubr.bf16.gmra.mxu0 %v266
    %v1096 = vpop.f32.mrf.mxu0
    %v1097 = vadd.f32 0.0, %v1096
    %v1098 = vpop.f32.mrf.mxu0
    %v1099 = vpop.f32.mrf.mxu0
    %v1100 = vadd.f32 0.0, %v1099
    %v1101 = vpop.f32.mrf.mxu0
    %1102 = vdwg.mxu0
    %v1103 = vsel %vm319, %v1089, 0.0
    %v1104 = vsel %vm319, %v1092, 0.0
    %v1105 = vsel %vm319, %v1097, 0.0
    %v1106 = vsel %vm319, %v1100, 0.0
    %v1107 = vadd.f32 %v1050, %v1103
    %v1108 = vadd.f32 %v1051, %v1104
    %v1109 = vadd.f32 %v1052, %v1105
    %v1110 = vadd.f32 %v1053, %v1106
    %1111 = vmatprep.subr.bf16.mxu0 0
    %1112 = vmatpush1.bf16.msra.mxu0 0
    %1113 = vmatprep.subr.bf16.mxu0 0
    %1114 = vmatpush1.bf16.msra.mxu0 0
    %1115 = vmatprep.subr.bf16.mxu0 0
    %1116 = vmatpush1.bf16.msra.mxu0 0
    %1117 = vmatprep.subr.bf16.mxu0 0
    %1118 = vmatpush1.bf16.msra.mxu0 0
    %1119 = vmatprep.subr.bf16.mxu0 0
    %1120 = vmatpush1.bf16.msra.mxu0 0
    %1121 = vmatprep.subr.bf16.mxu0 0
    %1122 = vmatpush1.bf16.msra.mxu0 0
    %1123 = vmatprep.subr.bf16.mxu0 0
    %1124 = vmatpush1.bf16.msra.mxu0 %v939
    %1125 = vmatprep.subr.bf16.mxu0 0
    %1126 = vmatpush1.bf16.msra.mxu0 %v938
    %1127 = vmatprep.subr.bf16.mxu0 0
    %1128 = vmatpush2.bf16.msra.mxu0 0
    %1129 = vmatprep.subr.bf16.mxu0 0
    %1130 = vmatpush2.bf16.msra.mxu0 0
    %1131 = vmatprep.subr.bf16.mxu0 0
    %1132 = vmatpush2.bf16.msra.mxu0 0
    %1133 = vmatprep.subr.bf16.mxu0 0
    %1134 = vmatpush2.bf16.msra.mxu0 0
    %1135 = vmatprep.subr.bf16.mxu0 0
    %1136 = vmatpush2.bf16.msra.mxu0 0
    %1137 = vmatprep.subr.bf16.mxu0 0
    %1138 = vmatpush2.bf16.msra.mxu0 0
    %1139 = vmatprep.subr.bf16.mxu0 0
    %1140 = vmatpush2.bf16.msra.mxu0 0
    %1141 = vmatprep.subr.bf16.mxu0 0
    %1142 = vmatpush2.bf16.msra.mxu0 0
    %1143 = vmatprep.mubr.bf16.mxu0 0
    %1144 = vmatmul.mubr.bf16.gmra.mxu0 %v344
    %v1145 = vpop.f32.mrf.mxu0
    %v1146 = vadd.f32 0.0, %v1145
    %v1147 = vpop.f32.mrf.mxu0
    %v1148 = vpop.f32.mrf.mxu0
    %v1149 = vadd.f32 0.0, %v1148
    %v1150 = vpop.f32.mrf.mxu0
    %1151 = vmatprep.mubr.bf16.mxu0 0
    %1152 = vmatmul.mubr.bf16.gmra.mxu0 %v347
    %v1153 = vpop.f32.mrf.mxu0
    %v1154 = vadd.f32 0.0, %v1153
    %v1155 = vpop.f32.mrf.mxu0
    %v1156 = vpop.f32.mrf.mxu0
    %v1157 = vadd.f32 0.0, %v1156
    %v1158 = vpop.f32.mrf.mxu0
    %1159 = vdwg.mxu0
    %v1160 = vsel %vm400, %v1146, 0.0
    %v1161 = vsel %vm400, %v1149, 0.0
    %v1162 = vsel %vm400, %v1154, 0.0
    %v1163 = vsel %vm400, %v1157, 0.0
    %v1164 = vadd.f32 %v1107, %v1160
    %v1165 = vadd.f32 %v1108, %v1161
    %v1166 = vadd.f32 %v1109, %v1162
    %v1167 = vadd.f32 %v1110, %v1163
    %1168 = vmatprep.subr.bf16.mxu0 0
    %1169 = vmatpush1.bf16.msra.mxu0 0
    %1170 = vmatprep.subr.bf16.mxu0 0
    %1171 = vmatpush1.bf16.msra.mxu0 0
    %1172 = vmatprep.subr.bf16.mxu0 0
    %1173 = vmatpush1.bf16.msra.mxu0 0
    %1174 = vmatprep.subr.bf16.mxu0 0
    %1175 = vmatpush1.bf16.msra.mxu0 0
    %1176 = vmatprep.subr.bf16.mxu0 0
    %1177 = vmatpush1.bf16.msra.mxu0 0
    %1178 = vmatprep.subr.bf16.mxu0 0
    %1179 = vmatpush1.bf16.msra.mxu0 0
    %1180 = vmatprep.subr.bf16.mxu0 0
    %1181 = vmatpush1.bf16.msra.mxu0 %v939
    %1182 = vmatprep.subr.bf16.mxu0 0
    %1183 = vmatpush1.bf16.msra.mxu0 %v938
    %1184 = vmatprep.subr.bf16.mxu0 0
    %1185 = vmatpush2.bf16.msra.mxu0 0
    %1186 = vmatprep.subr.bf16.mxu0 0
    %1187 = vmatpush2.bf16.msra.mxu0 0
    %1188 = vmatprep.subr.bf16.mxu0 0
    %1189 = vmatpush2.bf16.msra.mxu0 0
    %1190 = vmatprep.subr.bf16.mxu0 0
    %1191 = vmatpush2.bf16.msra.mxu0 0
    %1192 = vmatprep.subr.bf16.mxu0 0
    %1193 = vmatpush2.bf16.msra.mxu0 0
    %1194 = vmatprep.subr.bf16.mxu0 0
    %1195 = vmatpush2.bf16.msra.mxu0 0
    %1196 = vmatprep.subr.bf16.mxu0 0
    %1197 = vmatpush2.bf16.msra.mxu0 0
    %1198 = vmatprep.subr.bf16.mxu0 0
    %1199 = vmatpush2.bf16.msra.mxu0 0
    %1200 = vmatprep.mubr.bf16.mxu0 0
    %1201 = vmatmul.mubr.bf16.gmra.mxu0 %v425
    %v1202 = vpop.f32.mrf.mxu0
    %v1203 = vadd.f32 0.0, %v1202
    %v1204 = vpop.f32.mrf.mxu0
    %v1205 = vpop.f32.mrf.mxu0
    %v1206 = vadd.f32 0.0, %v1205
    %v1207 = vpop.f32.mrf.mxu0
    %1208 = vmatprep.mubr.bf16.mxu0 0
    %1209 = vmatmul.mubr.bf16.gmra.mxu0 %v428
    %v1210 = vpop.f32.mrf.mxu0
    %v1211 = vadd.f32 0.0, %v1210
    %v1212 = vpop.f32.mrf.mxu0
    %v1213 = vpop.f32.mrf.mxu0
    %v1214 = vadd.f32 0.0, %v1213
    %v1215 = vpop.f32.mrf.mxu0
    %1216 = vdwg.mxu0
    %v1217 = vsel %vm481, %v1203, 0.0
    %v1218 = vsel %vm481, %v1206, 0.0
    %v1219 = vsel %vm481, %v1211, 0.0
    %v1220 = vsel %vm481, %v1214, 0.0
    %v1221 = vadd.f32 %v1164, %v1217
    %v1222 = vadd.f32 %v1165, %v1218
    %v1223 = vadd.f32 %v1166, %v1219
    %v1224 = vadd.f32 %v1167, %v1220
    %1225 = vmatprep.subr.bf16.mxu0 0
    %1226 = vmatpush1.bf16.msra.mxu0 0
    %1227 = vmatprep.subr.bf16.mxu0 0
    %1228 = vmatpush1.bf16.msra.mxu0 0
    %1229 = vmatprep.subr.bf16.mxu0 0
    %1230 = vmatpush1.bf16.msra.mxu0 0
    %1231 = vmatprep.subr.bf16.mxu0 0
    %1232 = vmatpush1.bf16.msra.mxu0 0
    %1233 = vmatprep.subr.bf16.mxu0 0
    %1234 = vmatpush1.bf16.msra.mxu0 0
    %1235 = vmatprep.subr.bf16.mxu0 0
    %1236 = vmatpush1.bf16.msra.mxu0 0
    %1237 = vmatprep.subr.bf16.mxu0 0
    %1238 = vmatpush1.bf16.msra.mxu0 %v939
    %1239 = vmatprep.subr.bf16.mxu0 0
    %1240 = vmatpush1.bf16.msra.mxu0 %v938
    %1241 = vmatprep.subr.bf16.mxu0 0
    %1242 = vmatpush2.bf16.msra.mxu0 0
    %1243 = vmatprep.subr.bf16.mxu0 0
    %1244 = vmatpush2.bf16.msra.mxu0 0
    %1245 = vmatprep.subr.bf16.mxu0 0
    %1246 = vmatpush2.bf16.msra.mxu0 0
    %1247 = vmatprep.subr.bf16.mxu0 0
    %1248 = vmatpush2.bf16.msra.mxu0 0
    %1249 = vmatprep.subr.bf16.mxu0 0
    %1250 = vmatpush2.bf16.msra.mxu0 0
    %1251 = vmatprep.subr.bf16.mxu0 0
    %1252 = vmatpush2.bf16.msra.mxu0 0
    %1253 = vmatprep.subr.bf16.mxu0 0
    %1254 = vmatpush2.bf16.msra.mxu0 0
    %1255 = vmatprep.subr.bf16.mxu0 0
    %1256 = vmatpush2.bf16.msra.mxu0 0
    %1257 = vmatprep.mubr.bf16.mxu0 0
    %1258 = vmatmul.mubr.bf16.gmra.mxu0 %v506
    %v1259 = vpop.f32.mrf.mxu0
    %v1260 = vadd.f32 0.0, %v1259
    %v1261 = vpop.f32.mrf.mxu0
    %v1262 = vpop.f32.mrf.mxu0
    %v1263 = vadd.f32 0.0, %v1262
    %v1264 = vpop.f32.mrf.mxu0
    %1265 = vmatprep.mubr.bf16.mxu0 0
    %1266 = vmatmul.mubr.bf16.gmra.mxu0 %v509
    %v1267 = vpop.f32.mrf.mxu0
    %v1268 = vadd.f32 0.0, %v1267
    %v1269 = vpop.f32.mrf.mxu0
    %v1270 = vpop.f32.mrf.mxu0
    %v1271 = vadd.f32 0.0, %v1270
    %v1272 = vpop.f32.mrf.mxu0
    %1273 = vdwg.mxu0
    %v1274 = vsel %vm562, %v1260, 0.0
    %v1275 = vsel %vm562, %v1263, 0.0
    %v1276 = vsel %vm562, %v1268, 0.0
    %v1277 = vsel %vm562, %v1271, 0.0
    %v1278 = vadd.f32 %v1221, %v1274
    %v1279 = vadd.f32 %v1222, %v1275
    %v1280 = vadd.f32 %v1223, %v1276
    %v1281 = vadd.f32 %v1224, %v1277
    %1282 = vmatprep.subr.bf16.mxu0 0
    %1283 = vmatpush1.bf16.msra.mxu0 0
    %1284 = vmatprep.subr.bf16.mxu0 0
    %1285 = vmatpush1.bf16.msra.mxu0 0
    %1286 = vmatprep.subr.bf16.mxu0 0
    %1287 = vmatpush1.bf16.msra.mxu0 0
    %1288 = vmatprep.subr.bf16.mxu0 0
    %1289 = vmatpush1.bf16.msra.mxu0 0
    %1290 = vmatprep.subr.bf16.mxu0 0
    %1291 = vmatpush1.bf16.msra.mxu0 0
    %1292 = vmatprep.subr.bf16.mxu0 0
    %1293 = vmatpush1.bf16.msra.mxu0 0
    %1294 = vmatprep.subr.bf16.mxu0 0
    %1295 = vmatpush1.bf16.msra.mxu0 %v939
    %1296 = vmatprep.subr.bf16.mxu0 0
    %1297 = vmatpush1.bf16.msra.mxu0 %v938
    %1298 = vmatprep.subr.bf16.mxu0 0
    %1299 = vmatpush2.bf16.msra.mxu0 0
    %1300 = vmatprep.subr.bf16.mxu0 0
    %1301 = vmatpush2.bf16.msra.mxu0 0
    %1302 = vmatprep.subr.bf16.mxu0 0
    %1303 = vmatpush2.bf16.msra.mxu0 0
    %1304 = vmatprep.subr.bf16.mxu0 0
    %1305 = vmatpush2.bf16.msra.mxu0 0
    %1306 = vmatprep.subr.bf16.mxu0 0
    %1307 = vmatpush2.bf16.msra.mxu0 0
    %1308 = vmatprep.subr.bf16.mxu0 0
    %1309 = vmatpush2.bf16.msra.mxu0 0
    %1310 = vmatprep.subr.bf16.mxu0 0
    %1311 = vmatpush2.bf16.msra.mxu0 0
    %1312 = vmatprep.subr.bf16.mxu0 0
    %1313 = vmatpush2.bf16.msra.mxu0 0
    %1314 = vmatprep.mubr.bf16.mxu0 0
    %1315 = vmatmul.mubr.bf16.gmra.mxu0 %v587
    %v1316 = vpop.f32.mrf.mxu0
    %v1317 = vadd.f32 0.0, %v1316
    %v1318 = vpop.f32.mrf.mxu0
    %v1319 = vpop.f32.mrf.mxu0
    %v1320 = vadd.f32 0.0, %v1319
    %v1321 = vpop.f32.mrf.mxu0
    %1322 = vmatprep.mubr.bf16.mxu0 0
    %1323 = vmatmul.mubr.bf16.gmra.mxu0 %v590
    %v1324 = vpop.f32.mrf.mxu0
    %v1325 = vadd.f32 0.0, %v1324
    %v1326 = vpop.f32.mrf.mxu0
    %v1327 = vpop.f32.mrf.mxu0
    %v1328 = vadd.f32 0.0, %v1327
    %v1329 = vpop.f32.mrf.mxu0
    %1330 = vdwg.mxu0
    %v1331 = vsel %vm643, %v1317, 0.0
    %v1332 = vsel %vm643, %v1320, 0.0
    %v1333 = vsel %vm643, %v1325, 0.0
    %v1334 = vsel %vm643, %v1328, 0.0
    %v1335 = vadd.f32 %v1278, %v1331
    %v1336 = vadd.f32 %v1279, %v1332
    %v1337 = vadd.f32 %v1280, %v1333
    %v1338 = vadd.f32 %v1281, %v1334
    %1339 = vmatprep.subr.bf16.mxu0 0
    %1340 = vmatpush1.bf16.msra.mxu0 0
    %1341 = vmatprep.subr.bf16.mxu0 0
    %1342 = vmatpush1.bf16.msra.mxu0 0
    %1343 = vmatprep.subr.bf16.mxu0 0
    %1344 = vmatpush1.bf16.msra.mxu0 0
    %1345 = vmatprep.subr.bf16.mxu0 0
    %1346 = vmatpush1.bf16.msra.mxu0 0
    %1347 = vmatprep.subr.bf16.mxu0 0
    %1348 = vmatpush1.bf16.msra.mxu0 0
    %1349 = vmatprep.subr.bf16.mxu0 0
    %1350 = vmatpush1.bf16.msra.mxu0 0
    %1351 = vmatprep.subr.bf16.mxu0 0
    %1352 = vmatpush1.bf16.msra.mxu0 %v939
    %1353 = vmatprep.subr.bf16.mxu0 0
    %1354 = vmatpush1.bf16.msra.mxu0 %v938
    %1355 = vmatprep.subr.bf16.mxu0 0
    %1356 = vmatpush2.bf16.msra.mxu0 0
    %1357 = vmatprep.subr.bf16.mxu0 0
    %1358 = vmatpush2.bf16.msra.mxu0 0
    %1359 = vmatprep.subr.bf16.mxu0 0
    %1360 = vmatpush2.bf16.msra.mxu0 0
    %1361 = vmatprep.subr.bf16.mxu0 0
    %1362 = vmatpush2.bf16.msra.mxu0 0
    %1363 = vmatprep.subr.bf16.mxu0 0
    %1364 = vmatpush2.bf16.msra.mxu0 0
    %1365 = vmatprep.subr.bf16.mxu0 0
    %1366 = vmatpush2.bf16.msra.mxu0 0
    %1367 = vmatprep.subr.bf16.mxu0 0
    %1368 = vmatpush2.bf16.msra.mxu0 0
    %1369 = vmatprep.subr.bf16.mxu0 0
    %1370 = vmatpush2.bf16.msra.mxu0 0
    %1371 = vmatprep.mubr.bf16.mxu0 0
    %1372 = vmatmul.mubr.bf16.gmra.mxu0 %v668
    %v1373 = vpop.f32.mrf.mxu0
    %v1374 = vadd.f32 0.0, %v1373
    %v1375 = vpop.f32.mrf.mxu0
    %v1376 = vpop.f32.mrf.mxu0
    %v1377 = vadd.f32 0.0, %v1376
    %v1378 = vpop.f32.mrf.mxu0
    %1379 = vmatprep.mubr.bf16.mxu0 0
    %1380 = vmatmul.mubr.bf16.gmra.mxu0 %v671
    %v1381 = vpop.f32.mrf.mxu0
    %v1382 = vadd.f32 0.0, %v1381
    %v1383 = vpop.f32.mrf.mxu0
    %v1384 = vpop.f32.mrf.mxu0
    %v1385 = vadd.f32 0.0, %v1384
    %v1386 = vpop.f32.mrf.mxu0
    %1387 = vdwg.mxu0
    %v1388 = vsel %vm724, %v1374, 0.0
    %v1389 = vsel %vm724, %v1377, 0.0
    %v1390 = vsel %vm724, %v1382, 0.0
    %v1391 = vsel %vm724, %v1385, 0.0
    %v1392 = vadd.f32 %v1335, %v1388
    %v1393 = vadd.f32 %v1336, %v1389
    %v1394 = vadd.f32 %v1337, %v1390
    %v1395 = vadd.f32 %v1338, %v1391
    %1396 = vmatprep.subr.bf16.mxu0 0
    %1397 = vmatpush1.bf16.msra.mxu0 0
    %1398 = vmatprep.subr.bf16.mxu0 0
    %1399 = vmatpush1.bf16.msra.mxu0 0
    %1400 = vmatprep.subr.bf16.mxu0 0
    %1401 = vmatpush1.bf16.msra.mxu0 0
    %1402 = vmatprep.subr.bf16.mxu0 0
    %1403 = vmatpush1.bf16.msra.mxu0 0
    %1404 = vmatprep.subr.bf16.mxu0 0
    %1405 = vmatpush1.bf16.msra.mxu0 0
    %1406 = vmatprep.subr.bf16.mxu0 0
    %1407 = vmatpush1.bf16.msra.mxu0 0
    %1408 = vmatprep.subr.bf16.mxu0 0
    %1409 = vmatpush1.bf16.msra.mxu0 %v939
    %1410 = vmatprep.subr.bf16.mxu0 0
    %1411 = vmatpush1.bf16.msra.mxu0 %v938
    %1412 = vmatprep.subr.bf16.mxu0 0
    %1413 = vmatpush2.bf16.msra.mxu0 0
    %1414 = vmatprep.subr.bf16.mxu0 0
    %1415 = vmatpush2.bf16.msra.mxu0 0
    %1416 = vmatprep.subr.bf16.mxu0 0
    %1417 = vmatpush2.bf16.msra.mxu0 0
    %1418 = vmatprep.subr.bf16.mxu0 0
    %1419 = vmatpush2.bf16.msra.mxu0 0
    %1420 = vmatprep.subr.bf16.mxu0 0
    %1421 = vmatpush2.bf16.msra.mxu0 0
    %1422 = vmatprep.subr.bf16.mxu0 0
    %1423 = vmatpush2.bf16.msra.mxu0 0
    %1424 = vmatprep.subr.bf16.mxu0 0
    %1425 = vmatpush2.bf16.msra.mxu0 0
    %1426 = vmatprep.subr.bf16.mxu0 0
    %1427 = vmatpush2.bf16.msra.mxu0 0
    %1428 = vmatprep.mubr.bf16.mxu0 0
    %1429 = vmatmul.mubr.bf16.gmra.mxu0 %v749
    %v1430 = vpop.f32.mrf.mxu0
    %v1431 = vadd.f32 0.0, %v1430
    %v1432 = vpop.f32.mrf.mxu0
    %v1433 = vpop.f32.mrf.mxu0
    %v1434 = vadd.f32 0.0, %v1433
    %v1435 = vpop.f32.mrf.mxu0
    %1436 = vmatprep.mubr.bf16.mxu0 0
    %1437 = vmatmul.mubr.bf16.gmra.mxu0 %v752
    %v1438 = vpop.f32.mrf.mxu0
    %v1439 = vadd.f32 0.0, %v1438
    %v1440 = vpop.f32.mrf.mxu0
    %v1441 = vpop.f32.mrf.mxu0
    %v1442 = vadd.f32 0.0, %v1441
    %v1443 = vpop.f32.mrf.mxu0
    %1444 = vdwg.mxu0
    %v1445 = vsel %vm805, %v1431, 0.0
    %v1446 = vsel %vm805, %v1434, 0.0
    %v1447 = vsel %vm805, %v1439, 0.0
    %v1448 = vsel %vm805, %v1442, 0.0
    %v1449 = vadd.f32 %v1392, %v1445
    %v1450 = vadd.f32 %v1393, %v1446
    %v1451 = vadd.f32 %v1394, %v1447
    %v1452 = vadd.f32 %v1395, %v1448
    %v1453 = vpack.c.bf16 %v1450, %v1449
    %v1454 = vpack.c.bf16 %v1452, %v1451
    %s1455 = scalar_lea.vmem %s3, 64
    %v1456 = vld [vmem:[%s1455] sm:$0xf]
    %v1457 = vld [vmem:[%s1455 + $0x4] sm:$0xf]
    %v1458 = vld [vmem:[%s1455 + $0x8] sm:$0xf]
    %v1459 = vld [vmem:[%s1455 + $0xc] sm:$0xf]
    %v1460 = vld [vmem:[%s1455 + $0x10] sm:$0xf]
    %v1461 = vld [vmem:[%s1455 + $0x14] sm:$0xf]
    %v1462 = vld [vmem:[%s1455 + $0x18] sm:$0xf]
    %v1463 = vld [vmem:[%s1455 + $0x1c] sm:$0xf]
    %v1464 = vld [vmem:[%s1455 + $0x20] sm:$0xf]
    %v1465 = vld [vmem:[%s1455 + $0x24] sm:$0xf]
    %v1466 = vld [vmem:[%s1455 + $0x28] sm:$0xf]
    %v1467 = vld [vmem:[%s1455 + $0x2c] sm:$0xf]
    %v1468 = vld [vmem:[%s1455 + $0x30] sm:$0xf]
    %v1469 = vld [vmem:[%s1455 + $0x34] sm:$0xf]
    %v1470 = vld [vmem:[%s1455 + $0x38] sm:$0xf]
    %v1471 = vld [vmem:[%s1455 + $0x3c] sm:$0xf]
    %v1472 = vld [vmem:[%s4 + $0x1] sm:$0x1]
    %v1473 = vlaneseq
    %v1474 = vshrl.u32 %v1473, 7
    %v1475 = vsub.s32 0, %v1474
    %v1476 = vrot.slane %v1472, %v1475
    %v1493 = vunpack.c.l.b16 %v1456
    %v1494 = vunpack.c.l.b16 %v1457
    %v1495 = vunpack.c.l.b16 %v1458
    %v1496 = vunpack.c.l.b16 %v1459
    %v1497 = vunpack.c.l.b16 %v1460
    %v1498 = vunpack.c.l.b16 %v1461
    %v1499 = vunpack.c.l.b16 %v1462
    %v1500 = vunpack.c.l.b16 %v1463
    %v1501 = vunpack.c.l.b16 %v1464
    %v1502 = vunpack.c.l.b16 %v1465
    %v1503 = vunpack.c.l.b16 %v1466
    %v1504 = vunpack.c.l.b16 %v1467
    %v1505 = vunpack.c.l.b16 %v1468
    %v1506 = vunpack.c.l.b16 %v1469
    %v1507 = vunpack.c.l.b16 %v1470
    %v1508 = vunpack.c.l.b16 %v1471
    %v1509 = vpack.c.b16 %v1494, %v1493
    %v1510 = vpack.c.b16 %v1496, %v1495
    %v1511 = vpack.c.b16 %v1498, %v1497
    %v1512 = vpack.c.b16 %v1500, %v1499
    %v1513 = vpack.c.b16 %v1502, %v1501
    %v1514 = vpack.c.b16 %v1504, %v1503
    %v1515 = vpack.c.b16 %v1506, %v1505
    %v1516 = vpack.c.b16 %v1508, %v1507
    %1525 = vmatprep.subr.bf16.mxu0 0
    %1526 = vmatpush1.bf16.msra.mxu0 %v1516
    %1527 = vmatprep.subr.bf16.mxu0 0
    %1528 = vmatpush1.bf16.msra.mxu0 %v1515
    %1529 = vmatprep.subr.bf16.mxu0 0
    %1530 = vmatpush1.bf16.msra.mxu0 %v1514
    %1531 = vmatprep.subr.bf16.mxu0 0
    %1532 = vmatpush1.bf16.msra.mxu0 %v1513
    %1533 = vmatprep.subr.bf16.mxu0 0
    %1534 = vmatpush1.bf16.msra.mxu0 %v1512
    %1535 = vmatprep.subr.bf16.mxu0 0
    %1536 = vmatpush1.bf16.msra.mxu0 %v1511
    %1537 = vmatprep.subr.bf16.mxu0 0
    %1538 = vmatpush1.bf16.msra.mxu0 %v1510
    %1539 = vmatprep.subr.bf16.mxu0 0
    %1540 = vmatpush1.bf16.msra.mxu0 %v1509
    %1541 = vmatprep.subr.bf16.mxu0 0
    %1542 = vmatpush2.bf16.msra.mxu0 0
    %1543 = vmatprep.subr.bf16.mxu0 0
    %1544 = vmatpush2.bf16.msra.mxu0 0
    %1545 = vmatprep.subr.bf16.mxu0 0
    %1546 = vmatpush2.bf16.msra.mxu0 0
    %1547 = vmatprep.subr.bf16.mxu0 0
    %1548 = vmatpush2.bf16.msra.mxu0 0
    %1549 = vmatprep.subr.bf16.mxu0 0
    %1550 = vmatpush2.bf16.msra.mxu0 0
    %1551 = vmatprep.subr.bf16.mxu0 0
    %1552 = vmatpush2.bf16.msra.mxu0 0
    %1553 = vmatprep.subr.bf16.mxu0 0
    %1554 = vmatpush2.bf16.msra.mxu0 0
    %1555 = vmatprep.subr.bf16.mxu0 0
    %1556 = vmatpush2.bf16.msra.mxu0 0
    %1557 = vmatprep.mubr.bf16.mxu0 0
    %1558 = vmatmul.mubr.bf16.gmra.mxu0 %v1453
    %v1559 = vpop.f32.mrf.mxu0
    %v1560 = vadd.f32 %v1476, %v1559
    %v1561 = vpop.f32.mrf.mxu0
    %v1562 = vpop.f32.mrf.mxu0
    %v1563 = vadd.f32 %v1476, %v1562
    %v1564 = vpop.f32.mrf.mxu0
    %1565 = vmatprep.mubr.bf16.mxu0 0
    %1566 = vmatmul.mubr.bf16.gmra.mxu0 %v1454
    %v1567 = vpop.f32.mrf.mxu0
    %v1568 = vadd.f32 %v1476, %v1567
    %v1569 = vpop.f32.mrf.mxu0
    %v1570 = vpop.f32.mrf.mxu0
    %v1571 = vadd.f32 %v1476, %v1570
    %v1572 = vpop.f32.mrf.mxu0
    %1573 = vdwg.mxu0
    %v1574 = vmax.f32 %v1560, 0.0
    %v1575 = vmax.f32 %v1563, 0.0
    %v1576 = vmax.f32 %v1568, 0.0
    %v1577 = vmax.f32 %v1571, 0.0
    %v1578 = vpack.c.bf16 %v1575, %v1574
    %v1579 = vpack.c.bf16 %v1577, %v1576
    %1580 = vmatprep.subr.bf16.mxu0 0
    %1581 = vmatpush1.bf16.msra.mxu0 0
    %1582 = vmatprep.subr.bf16.mxu0 0
    %1583 = vmatpush1.bf16.msra.mxu0 0
    %1584 = vmatprep.subr.bf16.mxu0 0
    %1585 = vmatpush1.bf16.msra.mxu0 0
    %1586 = vmatprep.subr.bf16.mxu0 0
    %1587 = vmatpush1.bf16.msra.mxu0 0
    %1588 = vmatprep.subr.bf16.mxu0 0
    %1589 = vmatpush1.bf16.msra.mxu0 0
    %1590 = vmatprep.subr.bf16.mxu0 0
    %1591 = vmatpush1.bf16.msra.mxu0 0
    %1592 = vmatprep.subr.bf16.mxu0 0
    %1593 = vmatpush1.bf16.msra.mxu0 %v1579
    %1594 = vmatprep.subr.bf16.mxu0 0
    %1595 = vmatpush1.bf16.msra.mxu0 %v1578
    %1596 = vmatprep.subr.bf16.mxu0 0
    %1597 = vmatpush2.bf16.msra.mxu0 0
    %1598 = vmatprep.subr.bf16.mxu0 0
    %1599 = vmatpush2.bf16.msra.mxu0 0
    %1600 = vmatprep.subr.bf16.mxu0 0
    %1601 = vmatpush2.bf16.msra.mxu0 0
    %1602 = vmatprep.subr.bf16.mxu0 0
    %1603 = vmatpush2.bf16.msra.mxu0 0
    %1604 = vmatprep.subr.bf16.mxu0 0
    %1605 = vmatpush2.bf16.msra.mxu0 0
    %1606 = vmatprep.subr.bf16.mxu0 0
    %1607 = vmatpush2.bf16.msra.mxu0 0
    %1608 = vmatprep.subr.bf16.mxu0 0
    %1609 = vmatpush2.bf16.msra.mxu0 0
    %1610 = vmatprep.subr.bf16.mxu0 0
    %1611 = vmatpush2.bf16.msra.mxu0 0
    %1612 = vmatprep.mubr.bf16.mxu0 0
    %1613 = vmatmul.mubr.bf16.gmra.mxu0 %v101
    %v1614 = vpop.f32.mrf.mxu0
    %v1615 = vadd.f32 0.0, %v1614
    %v1616 = vpop.f32.mrf.mxu0
    %v1617 = vpop.f32.mrf.mxu0
    %v1618 = vadd.f32 0.0, %v1617
    %v1619 = vpop.f32.mrf.mxu0
    %1620 = vmatprep.mubr.bf16.mxu0 0
    %1621 = vmatmul.mubr.bf16.gmra.mxu0 %v104
    %v1622 = vpop.f32.mrf.mxu0
    %v1623 = vadd.f32 0.0, %v1622
    %v1624 = vpop.f32.mrf.mxu0
    %v1625 = vpop.f32.mrf.mxu0
    %v1626 = vadd.f32 0.0, %v1625
    %v1627 = vpop.f32.mrf.mxu0
    %1628 = vdwg.mxu0
    %v1629 = vsel %vm157, %v1615, 0.0
    %v1630 = vsel %vm157, %v1618, 0.0
    %v1631 = vsel %vm157, %v1623, 0.0
    %v1632 = vsel %vm157, %v1626, 0.0
    %v1633 = vadd.f32 %v1629, 0.0
    %v1634 = vadd.f32 %v1630, 0.0
    %v1635 = vadd.f32 %v1631, 0.0
    %v1636 = vadd.f32 %v1632, 0.0
    %1637 = vmatprep.subr.bf16.mxu0 0
    %1638 = vmatpush1.bf16.msra.mxu0 0
    %1639 = vmatprep.subr.bf16.mxu0 0
    %1640 = vmatpush1.bf16.msra.mxu0 0
    %1641 = vmatprep.subr.bf16.mxu0 0
    %1642 = vmatpush1.bf16.msra.mxu0 0
    %1643 = vmatprep.subr.bf16.mxu0 0
    %1644 = vmatpush1.bf16.msra.mxu0 0
    %1645 = vmatprep.subr.bf16.mxu0 0
    %1646 = vmatpush1.bf16.msra.mxu0 0
    %1647 = vmatprep.subr.bf16.mxu0 0
    %1648 = vmatpush1.bf16.msra.mxu0 0
    %1649 = vmatprep.subr.bf16.mxu0 0
    %1650 = vmatpush1.bf16.msra.mxu0 %v1579
    %1651 = vmatprep.subr.bf16.mxu0 0
    %1652 = vmatpush1.bf16.msra.mxu0 %v1578
    %1653 = vmatprep.subr.bf16.mxu0 0
    %1654 = vmatpush2.bf16.msra.mxu0 0
    %1655 = vmatprep.subr.bf16.mxu0 0
    %1656 = vmatpush2.bf16.msra.mxu0 0
    %1657 = vmatprep.subr.bf16.mxu0 0
    %1658 = vmatpush2.bf16.msra.mxu0 0
    %1659 = vmatprep.subr.bf16.mxu0 0
    %1660 = vmatpush2.bf16.msra.mxu0 0
    %1661 = vmatprep.subr.bf16.mxu0 0
    %1662 = vmatpush2.bf16.msra.mxu0 0
    %1663 = vmatprep.subr.bf16.mxu0 0
    %1664 = vmatpush2.bf16.msra.mxu0 0
    %1665 = vmatprep.subr.bf16.mxu0 0
    %1666 = vmatpush2.bf16.msra.mxu0 0
    %1667 = vmatprep.subr.bf16.mxu0 0
    %1668 = vmatpush2.bf16.msra.mxu0 0
    %1669 = vmatprep.mubr.bf16.mxu0 0
    %1670 = vmatmul.mubr.bf16.gmra.mxu0 %v182
    %v1671 = vpop.f32.mrf.mxu0
    %v1672 = vadd.f32 0.0, %v1671
    %v1673 = vpop.f32.mrf.mxu0
    %v1674 = vpop.f32.mrf.mxu0
    %v1675 = vadd.f32 0.0, %v1674
    %v1676 = vpop.f32.mrf.mxu0
    %1677 = vmatprep.mubr.bf16.mxu0 0
    %1678 = vmatmul.mubr.bf16.gmra.mxu0 %v185
    %v1679 = vpop.f32.mrf.mxu0
    %v1680 = vadd.f32 0.0, %v1679
    %v1681 = vpop.f32.mrf.mxu0
    %v1682 = vpop.f32.mrf.mxu0
    %v1683 = vadd.f32 0.0, %v1682
    %v1684 = vpop.f32.mrf.mxu0
    %1685 = vdwg.mxu0
    %v1686 = vsel %vm238, %v1672, 0.0
    %v1687 = vsel %vm238, %v1675, 0.0
    %v1688 = vsel %vm238, %v1680, 0.0
    %v1689 = vsel %vm238, %v1683, 0.0
    %v1690 = vadd.f32 %v1633, %v1686
    %v1691 = vadd.f32 %v1634, %v1687
    %v1692 = vadd.f32 %v1635, %v1688
    %v1693 = vadd.f32 %v1636, %v1689
    %1694 = vmatprep.subr.bf16.mxu0 0
    %1695 = vmatpush1.bf16.msra.mxu0 0
    %1696 = vmatprep.subr.bf16.mxu0 0
    %1697 = vmatpush1.bf16.msra.mxu0 0
    %1698 = vmatprep.subr.bf16.mxu0 0
    %1699 = vmatpush1.bf16.msra.mxu0 0
    %1700 = vmatprep.subr.bf16.mxu0 0
    %1701 = vmatpush1.bf16.msra.mxu0 0
    %1702 = vmatprep.subr.bf16.mxu0 0
    %1703 = vmatpush1.bf16.msra.mxu0 0
    %1704 = vmatprep.subr.bf16.mxu0 0
    %1705 = vmatpush1.bf16.msra.mxu0 0
    %1706 = vmatprep.subr.bf16.mxu0 0
    %1707 = vmatpush1.bf16.msra.mxu0 %v1579
    %1708 = vmatprep.subr.bf16.mxu0 0
    %1709 = vmatpush1.bf16.msra.mxu0 %v1578
    %1710 = vmatprep.subr.bf16.mxu0 0
    %1711 = vmatpush2.bf16.msra.mxu0 0
    %1712 = vmatprep.subr.bf16.mxu0 0
    %1713 = vmatpush2.bf16.msra.mxu0 0
    %1714 = vmatprep.subr.bf16.mxu0 0
    %1715 = vmatpush2.bf16.msra.mxu0 0
    %1716 = vmatprep.subr.bf16.mxu0 0
    %1717 = vmatpush2.bf16.msra.mxu0 0
    %1718 = vmatprep.subr.bf16.mxu0 0
    %1719 = vmatpush2.bf16.msra.mxu0 0
    %1720 = vmatprep.subr.bf16.mxu0 0
    %1721 = vmatpush2.bf16.msra.mxu0 0
    %1722 = vmatprep.subr.bf16.mxu0 0
    %1723 = vmatpush2.bf16.msra.mxu0 0
    %1724 = vmatprep.subr.bf16.mxu0 0
    %1725 = vmatpush2.bf16.msra.mxu0 0
    %1726 = vmatprep.mubr.bf16.mxu0 0
    %1727 = vmatmul.mubr.bf16.gmra.mxu0 %v263
    %v1728 = vpop.f32.mrf.mxu0
    %v1729 = vadd.f32 0.0, %v1728
    %v1730 = vpop.f32.mrf.mxu0
    %v1731 = vpop.f32.mrf.mxu0
    %v1732 = vadd.f32 0.0, %v1731
    %v1733 = vpop.f32.mrf.mxu0
    %1734 = vmatprep.mubr.bf16.mxu0 0
    %1735 = vmatmul.mubr.bf16.gmra.mxu0 %v266
    %v1736 = vpop.f32.mrf.mxu0
    %v1737 = vadd.f32 0.0, %v1736
    %v1738 = vpop.f32.mrf.mxu0
    %v1739 = vpop.f32.mrf.mxu0
    %v1740 = vadd.f32 0.0, %v1739
    %v1741 = vpop.f32.mrf.mxu0
    %1742 = vdwg.mxu0
    %v1743 = vsel %vm319, %v1729, 0.0
    %v1744 = vsel %vm319, %v1732, 0.0
    %v1745 = vsel %vm319, %v1737, 0.0
    %v1746 = vsel %vm319, %v1740, 0.0
    %v1747 = vadd.f32 %v1690, %v1743
    %v1748 = vadd.f32 %v1691, %v1744
    %v1749 = vadd.f32 %v1692, %v1745
    %v1750 = vadd.f32 %v1693, %v1746
    %1751 = vmatprep.subr.bf16.mxu0 0
    %1752 = vmatpush1.bf16.msra.mxu0 0
    %1753 = vmatprep.subr.bf16.mxu0 0
    %1754 = vmatpush1.bf16.msra.mxu0 0
    %1755 = vmatprep.subr.bf16.mxu0 0
    %1756 = vmatpush1.bf16.msra.mxu0 0
    %1757 = vmatprep.subr.bf16.mxu0 0
    %1758 = vmatpush1.bf16.msra.mxu0 0
    %1759 = vmatprep.subr.bf16.mxu0 0
    %1760 = vmatpush1.bf16.msra.mxu0 0
    %1761 = vmatprep.subr.bf16.mxu0 0
    %1762 = vmatpush1.bf16.msra.mxu0 0
    %1763 = vmatprep.subr.bf16.mxu0 0
    %1764 = vmatpush1.bf16.msra.mxu0 %v1579
    %1765 = vmatprep.subr.bf16.mxu0 0
    %1766 = vmatpush1.bf16.msra.mxu0 %v1578
    %1767 = vmatprep.subr.bf16.mxu0 0
    %1768 = vmatpush2.bf16.msra.mxu0 0
    %1769 = vmatprep.subr.bf16.mxu0 0
    %1770 = vmatpush2.bf16.msra.mxu0 0
    %1771 = vmatprep.subr.bf16.mxu0 0
    %1772 = vmatpush2.bf16.msra.mxu0 0
    %1773 = vmatprep.subr.bf16.mxu0 0
    %1774 = vmatpush2.bf16.msra.mxu0 0
    %1775 = vmatprep.subr.bf16.mxu0 0
    %1776 = vmatpush2.bf16.msra.mxu0 0
    %1777 = vmatprep.subr.bf16.mxu0 0
    %1778 = vmatpush2.bf16.msra.mxu0 0
    %1779 = vmatprep.subr.bf16.mxu0 0
    %1780 = vmatpush2.bf16.msra.mxu0 0
    %1781 = vmatprep.subr.bf16.mxu0 0
    %1782 = vmatpush2.bf16.msra.mxu0 0
    %1783 = vmatprep.mubr.bf16.mxu0 0
    %1784 = vmatmul.mubr.bf16.gmra.mxu0 %v344
    %v1785 = vpop.f32.mrf.mxu0
    %v1786 = vadd.f32 0.0, %v1785
    %v1787 = vpop.f32.mrf.mxu0
    %v1788 = vpop.f32.mrf.mxu0
    %v1789 = vadd.f32 0.0, %v1788
    %v1790 = vpop.f32.mrf.mxu0
    %1791 = vmatprep.mubr.bf16.mxu0 0
    %1792 = vmatmul.mubr.bf16.gmra.mxu0 %v347
    %v1793 = vpop.f32.mrf.mxu0
    %v1794 = vadd.f32 0.0, %v1793
    %v1795 = vpop.f32.mrf.mxu0
    %v1796 = vpop.f32.mrf.mxu0
    %v1797 = vadd.f32 0.0, %v1796
    %v1798 = vpop.f32.mrf.mxu0
    %1799 = vdwg.mxu0
    %v1800 = vsel %vm400, %v1786, 0.0
    %v1801 = vsel %vm400, %v1789, 0.0
    %v1802 = vsel %vm400, %v1794, 0.0
    %v1803 = vsel %vm400, %v1797, 0.0
    %v1804 = vadd.f32 %v1747, %v1800
    %v1805 = vadd.f32 %v1748, %v1801
    %v1806 = vadd.f32 %v1749, %v1802
    %v1807 = vadd.f32 %v1750, %v1803
    %1808 = vmatprep.subr.bf16.mxu0 0
    %1809 = vmatpush1.bf16.msra.mxu0 0
    %1810 = vmatprep.subr.bf16.mxu0 0
    %1811 = vmatpush1.bf16.msra.mxu0 0
    %1812 = vmatprep.subr.bf16.mxu0 0
    %1813 = vmatpush1.bf16.msra.mxu0 0
    %1814 = vmatprep.subr.bf16.mxu0 0
    %1815 = vmatpush1.bf16.msra.mxu0 0
    %1816 = vmatprep.subr.bf16.mxu0 0
    %1817 = vmatpush1.bf16.msra.mxu0 0
    %1818 = vmatprep.subr.bf16.mxu0 0
    %1819 = vmatpush1.bf16.msra.mxu0 0
    %1820 = vmatprep.subr.bf16.mxu0 0
    %1821 = vmatpush1.bf16.msra.mxu0 %v1579
    %1822 = vmatprep.subr.bf16.mxu0 0
    %1823 = vmatpush1.bf16.msra.mxu0 %v1578
    %1824 = vmatprep.subr.bf16.mxu0 0
    %1825 = vmatpush2.bf16.msra.mxu0 0
    %1826 = vmatprep.subr.bf16.mxu0 0
    %1827 = vmatpush2.bf16.msra.mxu0 0
    %1828 = vmatprep.subr.bf16.mxu0 0
    %1829 = vmatpush2.bf16.msra.mxu0 0
    %1830 = vmatprep.subr.bf16.mxu0 0
    %1831 = vmatpush2.bf16.msra.mxu0 0
    %1832 = vmatprep.subr.bf16.mxu0 0
    %1833 = vmatpush2.bf16.msra.mxu0 0
    %1834 = vmatprep.subr.bf16.mxu0 0
    %1835 = vmatpush2.bf16.msra.mxu0 0
    %1836 = vmatprep.subr.bf16.mxu0 0
    %1837 = vmatpush2.bf16.msra.mxu0 0
    %1838 = vmatprep.subr.bf16.mxu0 0
    %1839 = vmatpush2.bf16.msra.mxu0 0
    %1840 = vmatprep.mubr.bf16.mxu0 0
    %1841 = vmatmul.mubr.bf16.gmra.mxu0 %v425
    %v1842 = vpop.f32.mrf.mxu0
    %v1843 = vadd.f32 0.0, %v1842
    %v1844 = vpop.f32.mrf.mxu0
    %v1845 = vpop.f32.mrf.mxu0
    %v1846 = vadd.f32 0.0, %v1845
    %v1847 = vpop.f32.mrf.mxu0
    %1848 = vmatprep.mubr.bf16.mxu0 0
    %1849 = vmatmul.mubr.bf16.gmra.mxu0 %v428
    %v1850 = vpop.f32.mrf.mxu0
    %v1851 = vadd.f32 0.0, %v1850
    %v1852 = vpop.f32.mrf.mxu0
    %v1853 = vpop.f32.mrf.mxu0
    %v1854 = vadd.f32 0.0, %v1853
    %v1855 = vpop.f32.mrf.mxu0
    %1856 = vdwg.mxu0
    %v1857 = vsel %vm481, %v1843, 0.0
    %v1858 = vsel %vm481, %v1846, 0.0
    %v1859 = vsel %vm481, %v1851, 0.0
    %v1860 = vsel %vm481, %v1854, 0.0
    %v1861 = vadd.f32 %v1804, %v1857
    %v1862 = vadd.f32 %v1805, %v1858
    %v1863 = vadd.f32 %v1806, %v1859
    %v1864 = vadd.f32 %v1807, %v1860
    %1865 = vmatprep.subr.bf16.mxu0 0
    %1866 = vmatpush1.bf16.msra.mxu0 0
    %1867 = vmatprep.subr.bf16.mxu0 0
    %1868 = vmatpush1.bf16.msra.mxu0 0
    %1869 = vmatprep.subr.bf16.mxu0 0
    %1870 = vmatpush1.bf16.msra.mxu0 0
    %1871 = vmatprep.subr.bf16.mxu0 0
    %1872 = vmatpush1.bf16.msra.mxu0 0
    %1873 = vmatprep.subr.bf16.mxu0 0
    %1874 = vmatpush1.bf16.msra.mxu0 0
    %1875 = vmatprep.subr.bf16.mxu0 0
    %1876 = vmatpush1.bf16.msra.mxu0 0
    %1877 = vmatprep.subr.bf16.mxu0 0
    %1878 = vmatpush1.bf16.msra.mxu0 %v1579
    %1879 = vmatprep.subr.bf16.mxu0 0
    %1880 = vmatpush1.bf16.msra.mxu0 %v1578
    %1881 = vmatprep.subr.bf16.mxu0 0
    %1882 = vmatpush2.bf16.msra.mxu0 0
    %1883 = vmatprep.subr.bf16.mxu0 0
    %1884 = vmatpush2.bf16.msra.mxu0 0
    %1885 = vmatprep.subr.bf16.mxu0 0
    %1886 = vmatpush2.bf16.msra.mxu0 0
    %1887 = vmatprep.subr.bf16.mxu0 0
    %1888 = vmatpush2.bf16.msra.mxu0 0
    %1889 = vmatprep.subr.bf16.mxu0 0
    %1890 = vmatpush2.bf16.msra.mxu0 0
    %1891 = vmatprep.subr.bf16.mxu0 0
    %1892 = vmatpush2.bf16.msra.mxu0 0
    %1893 = vmatprep.subr.bf16.mxu0 0
    %1894 = vmatpush2.bf16.msra.mxu0 0
    %1895 = vmatprep.subr.bf16.mxu0 0
    %1896 = vmatpush2.bf16.msra.mxu0 0
    %1897 = vmatprep.mubr.bf16.mxu0 0
    %1898 = vmatmul.mubr.bf16.gmra.mxu0 %v506
    %v1899 = vpop.f32.mrf.mxu0
    %v1900 = vadd.f32 0.0, %v1899
    %v1901 = vpop.f32.mrf.mxu0
    %v1902 = vpop.f32.mrf.mxu0
    %v1903 = vadd.f32 0.0, %v1902
    %v1904 = vpop.f32.mrf.mxu0
    %1905 = vmatprep.mubr.bf16.mxu0 0
    %1906 = vmatmul.mubr.bf16.gmra.mxu0 %v509
    %v1907 = vpop.f32.mrf.mxu0
    %v1908 = vadd.f32 0.0, %v1907
    %v1909 = vpop.f32.mrf.mxu0
    %v1910 = vpop.f32.mrf.mxu0
    %v1911 = vadd.f32 0.0, %v1910
    %v1912 = vpop.f32.mrf.mxu0
    %1913 = vdwg.mxu0
    %v1914 = vsel %vm562, %v1900, 0.0
    %v1915 = vsel %vm562, %v1903, 0.0
    %v1916 = vsel %vm562, %v1908, 0.0
    %v1917 = vsel %vm562, %v1911, 0.0
    %v1918 = vadd.f32 %v1861, %v1914
    %v1919 = vadd.f32 %v1862, %v1915
    %v1920 = vadd.f32 %v1863, %v1916
    %v1921 = vadd.f32 %v1864, %v1917
    %1922 = vmatprep.subr.bf16.mxu0 0
    %1923 = vmatpush1.bf16.msra.mxu0 0
    %1924 = vmatprep.subr.bf16.mxu0 0
    %1925 = vmatpush1.bf16.msra.mxu0 0
    %1926 = vmatprep.subr.bf16.mxu0 0
    %1927 = vmatpush1.bf16.msra.mxu0 0
    %1928 = vmatprep.subr.bf16.mxu0 0
    %1929 = vmatpush1.bf16.msra.mxu0 0
    %1930 = vmatprep.subr.bf16.mxu0 0
    %1931 = vmatpush1.bf16.msra.mxu0 0
    %1932 = vmatprep.subr.bf16.mxu0 0
    %1933 = vmatpush1.bf16.msra.mxu0 0
    %1934 = vmatprep.subr.bf16.mxu0 0
    %1935 = vmatpush1.bf16.msra.mxu0 %v1579
    %1936 = vmatprep.subr.bf16.mxu0 0
    %1937 = vmatpush1.bf16.msra.mxu0 %v1578
    %1938 = vmatprep.subr.bf16.mxu0 0
    %1939 = vmatpush2.bf16.msra.mxu0 0
    %1940 = vmatprep.subr.bf16.mxu0 0
    %1941 = vmatpush2.bf16.msra.mxu0 0
    %1942 = vmatprep.subr.bf16.mxu0 0
    %1943 = vmatpush2.bf16.msra.mxu0 0
    %1944 = vmatprep.subr.bf16.mxu0 0
    %1945 = vmatpush2.bf16.msra.mxu0 0
    %1946 = vmatprep.subr.bf16.mxu0 0
    %1947 = vmatpush2.bf16.msra.mxu0 0
    %1948 = vmatprep.subr.bf16.mxu0 0
    %1949 = vmatpush2.bf16.msra.mxu0 0
    %1950 = vmatprep.subr.bf16.mxu0 0
    %1951 = vmatpush2.bf16.msra.mxu0 0
    %1952 = vmatprep.subr.bf16.mxu0 0
    %1953 = vmatpush2.bf16.msra.mxu0 0
    %1954 = vmatprep.mubr.bf16.mxu0 0
    %1955 = vmatmul.mubr.bf16.gmra.mxu0 %v587
    %v1956 = vpop.f32.mrf.mxu0
    %v1957 = vadd.f32 0.0, %v1956
    %v1958 = vpop.f32.mrf.mxu0
    %v1959 = vpop.f32.mrf.mxu0
    %v1960 = vadd.f32 0.0, %v1959
    %v1961 = vpop.f32.mrf.mxu0
    %1962 = vmatprep.mubr.bf16.mxu0 0
    %1963 = vmatmul.mubr.bf16.gmra.mxu0 %v590
    %v1964 = vpop.f32.mrf.mxu0
    %v1965 = vadd.f32 0.0, %v1964
    %v1966 = vpop.f32.mrf.mxu0
    %v1967 = vpop.f32.mrf.mxu0
    %v1968 = vadd.f32 0.0, %v1967
    %v1969 = vpop.f32.mrf.mxu0
    %1970 = vdwg.mxu0
    %v1971 = vsel %vm643, %v1957, 0.0
    %v1972 = vsel %vm643, %v1960, 0.0
    %v1973 = vsel %vm643, %v1965, 0.0
    %v1974 = vsel %vm643, %v1968, 0.0
    %v1975 = vadd.f32 %v1918, %v1971
    %v1976 = vadd.f32 %v1919, %v1972
    %v1977 = vadd.f32 %v1920, %v1973
    %v1978 = vadd.f32 %v1921, %v1974
    %1979 = vmatprep.subr.bf16.mxu0 0
    %1980 = vmatpush1.bf16.msra.mxu0 0
    %1981 = vmatprep.subr.bf16.mxu0 0
    %1982 = vmatpush1.bf16.msra.mxu0 0
    %1983 = vmatprep.subr.bf16.mxu0 0
    %1984 = vmatpush1.bf16.msra.mxu0 0
    %1985 = vmatprep.subr.bf16.mxu0 0
    %1986 = vmatpush1.bf16.msra.mxu0 0
    %1987 = vmatprep.subr.bf16.mxu0 0
    %1988 = vmatpush1.bf16.msra.mxu0 0
    %1989 = vmatprep.subr.bf16.mxu0 0
    %1990 = vmatpush1.bf16.msra.mxu0 0
    %1991 = vmatprep.subr.bf16.mxu0 0
    %1992 = vmatpush1.bf16.msra.mxu0 %v1579
    %1993 = vmatprep.subr.bf16.mxu0 0
    %1994 = vmatpush1.bf16.msra.mxu0 %v1578
    %1995 = vmatprep.subr.bf16.mxu0 0
    %1996 = vmatpush2.bf16.msra.mxu0 0
    %1997 = vmatprep.subr.bf16.mxu0 0
    %1998 = vmatpush2.bf16.msra.mxu0 0
    %1999 = vmatprep.subr.bf16.mxu0 0
    %2000 = vmatpush2.bf16.msra.mxu0 0
    %2001 = vmatprep.subr.bf16.mxu0 0
    %2002 = vmatpush2.bf16.msra.mxu0 0
    %2003 = vmatprep.subr.bf16.mxu0 0
    %2004 = vmatpush2.bf16.msra.mxu0 0
    %2005 = vmatprep.subr.bf16.mxu0 0
    %2006 = vmatpush2.bf16.msra.mxu0 0
    %2007 = vmatprep.subr.bf16.mxu0 0
    %2008 = vmatpush2.bf16.msra.mxu0 0
    %2009 = vmatprep.subr.bf16.mxu0 0
    %2010 = vmatpush2.bf16.msra.mxu0 0
    %2011 = vmatprep.mubr.bf16.mxu0 0
    %2012 = vmatmul.mubr.bf16.gmra.mxu0 %v668
    %v2013 = vpop.f32.mrf.mxu0
    %v2014 = vadd.f32 0.0, %v2013
    %v2015 = vpop.f32.mrf.mxu0
    %v2016 = vpop.f32.mrf.mxu0
    %v2017 = vadd.f32 0.0, %v2016
    %v2018 = vpop.f32.mrf.mxu0
    %2019 = vmatprep.mubr.bf16.mxu0 0
    %2020 = vmatmul.mubr.bf16.gmra.mxu0 %v671
    %v2021 = vpop.f32.mrf.mxu0
    %v2022 = vadd.f32 0.0, %v2021
    %v2023 = vpop.f32.mrf.mxu0
    %v2024 = vpop.f32.mrf.mxu0
    %v2025 = vadd.f32 0.0, %v2024
    %v2026 = vpop.f32.mrf.mxu0
    %2027 = vdwg.mxu0
    %v2028 = vsel %vm724, %v2014, 0.0
    %v2029 = vsel %vm724, %v2017, 0.0
    %v2030 = vsel %vm724, %v2022, 0.0
    %v2031 = vsel %vm724, %v2025, 0.0
    %v2032 = vadd.f32 %v1975, %v2028
    %v2033 = vadd.f32 %v1976, %v2029
    %v2034 = vadd.f32 %v1977, %v2030
    %v2035 = vadd.f32 %v1978, %v2031
    %2036 = vmatprep.subr.bf16.mxu0 0
    %2037 = vmatpush1.bf16.msra.mxu0 0
    %2038 = vmatprep.subr.bf16.mxu0 0
    %2039 = vmatpush1.bf16.msra.mxu0 0
    %2040 = vmatprep.subr.bf16.mxu0 0
    %2041 = vmatpush1.bf16.msra.mxu0 0
    %2042 = vmatprep.subr.bf16.mxu0 0
    %2043 = vmatpush1.bf16.msra.mxu0 0
    %2044 = vmatprep.subr.bf16.mxu0 0
    %2045 = vmatpush1.bf16.msra.mxu0 0
    %2046 = vmatprep.subr.bf16.mxu0 0
    %2047 = vmatpush1.bf16.msra.mxu0 0
    %2048 = vmatprep.subr.bf16.mxu0 0
    %2049 = vmatpush1.bf16.msra.mxu0 %v1579
    %2050 = vmatprep.subr.bf16.mxu0 0
    %2051 = vmatpush1.bf16.msra.mxu0 %v1578
    %2052 = vmatprep.subr.bf16.mxu0 0
    %2053 = vmatpush2.bf16.msra.mxu0 0
    %2054 = vmatprep.subr.bf16.mxu0 0
    %2055 = vmatpush2.bf16.msra.mxu0 0
    %2056 = vmatprep.subr.bf16.mxu0 0
    %2057 = vmatpush2.bf16.msra.mxu0 0
    %2058 = vmatprep.subr.bf16.mxu0 0
    %2059 = vmatpush2.bf16.msra.mxu0 0
    %2060 = vmatprep.subr.bf16.mxu0 0
    %2061 = vmatpush2.bf16.msra.mxu0 0
    %2062 = vmatprep.subr.bf16.mxu0 0
    %2063 = vmatpush2.bf16.msra.mxu0 0
    %2064 = vmatprep.subr.bf16.mxu0 0
    %2065 = vmatpush2.bf16.msra.mxu0 0
    %2066 = vmatprep.subr.bf16.mxu0 0
    %2067 = vmatpush2.bf16.msra.mxu0 0
    %2068 = vmatprep.mubr.bf16.mxu0 0
    %2069 = vmatmul.mubr.bf16.gmra.mxu0 %v749
    %v2070 = vpop.f32.mrf.mxu0
    %v2071 = vadd.f32 0.0, %v2070
    %v2072 = vpop.f32.mrf.mxu0
    %v2073 = vpop.f32.mrf.mxu0
    %v2074 = vadd.f32 0.0, %v2073
    %v2075 = vpop.f32.mrf.mxu0
    %2076 = vmatprep.mubr.bf16.mxu0 0
    %2077 = vmatmul.mubr.bf16.gmra.mxu0 %v752
    %v2078 = vpop.f32.mrf.mxu0
    %v2079 = vadd.f32 0.0, %v2078
    %v2080 = vpop.f32.mrf.mxu0
    %v2081 = vpop.f32.mrf.mxu0
    %v2082 = vadd.f32 0.0, %v2081
    %v2083 = vpop.f32.mrf.mxu0
    %2084 = vdwg.mxu0
    %v2085 = vsel %vm805, %v2071, 0.0
    %v2086 = vsel %vm805, %v2074, 0.0
    %v2087 = vsel %vm805, %v2079, 0.0
    %v2088 = vsel %vm805, %v2082, 0.0
    %v2089 = vadd.f32 %v2032, %v2085
    %v2090 = vadd.f32 %v2033, %v2086
    %v2091 = vadd.f32 %v2034, %v2087
    %v2092 = vadd.f32 %v2035, %v2088
    %v2093 = vpack.c.bf16 %v2090, %v2089
    %v2094 = vpack.c.bf16 %v2092, %v2091
    %s2095 = scalar_lea.vmem %s3, 128
    %v2096 = vld [vmem:[%s2095] sm:$0xf]
    %v2097 = vld [vmem:[%s2095 + $0x4] sm:$0xf]
    %v2098 = vld [vmem:[%s2095 + $0x8] sm:$0xf]
    %v2099 = vld [vmem:[%s2095 + $0xc] sm:$0xf]
    %v2100 = vld [vmem:[%s2095 + $0x10] sm:$0xf]
    %v2101 = vld [vmem:[%s2095 + $0x14] sm:$0xf]
    %v2102 = vld [vmem:[%s2095 + $0x18] sm:$0xf]
    %v2103 = vld [vmem:[%s2095 + $0x1c] sm:$0xf]
    %v2104 = vld [vmem:[%s2095 + $0x20] sm:$0xf]
    %v2105 = vld [vmem:[%s2095 + $0x24] sm:$0xf]
    %v2106 = vld [vmem:[%s2095 + $0x28] sm:$0xf]
    %v2107 = vld [vmem:[%s2095 + $0x2c] sm:$0xf]
    %v2108 = vld [vmem:[%s2095 + $0x30] sm:$0xf]
    %v2109 = vld [vmem:[%s2095 + $0x34] sm:$0xf]
    %v2110 = vld [vmem:[%s2095 + $0x38] sm:$0xf]
    %v2111 = vld [vmem:[%s2095 + $0x3c] sm:$0xf]
    %v2112 = vld [vmem:[%s4 + $0x2] sm:$0x1]
    %v2113 = vlaneseq
    %v2114 = vshrl.u32 %v2113, 7
    %v2115 = vsub.s32 0, %v2114
    %v2116 = vrot.slane %v2112, %v2115
    %v2133 = vunpack.c.l.b16 %v2096
    %v2134 = vunpack.c.l.b16 %v2097
    %v2135 = vunpack.c.l.b16 %v2098
    %v2136 = vunpack.c.l.b16 %v2099
    %v2137 = vunpack.c.l.b16 %v2100
    %v2138 = vunpack.c.l.b16 %v2101
    %v2139 = vunpack.c.l.b16 %v2102
    %v2140 = vunpack.c.l.b16 %v2103
    %v2141 = vunpack.c.l.b16 %v2104
    %v2142 = vunpack.c.l.b16 %v2105
    %v2143 = vunpack.c.l.b16 %v2106
    %v2144 = vunpack.c.l.b16 %v2107
    %v2145 = vunpack.c.l.b16 %v2108
    %v2146 = vunpack.c.l.b16 %v2109
    %v2147 = vunpack.c.l.b16 %v2110
    %v2148 = vunpack.c.l.b16 %v2111
    %v2149 = vpack.c.b16 %v2134, %v2133
    %v2150 = vpack.c.b16 %v2136, %v2135
    %v2151 = vpack.c.b16 %v2138, %v2137
    %v2152 = vpack.c.b16 %v2140, %v2139
    %v2153 = vpack.c.b16 %v2142, %v2141
    %v2154 = vpack.c.b16 %v2144, %v2143
    %v2155 = vpack.c.b16 %v2146, %v2145
    %v2156 = vpack.c.b16 %v2148, %v2147
    %2165 = vmatprep.subr.bf16.mxu0 0
    %2166 = vmatpush1.bf16.msra.mxu0 %v2156
    %2167 = vmatprep.subr.bf16.mxu0 0
    %2168 = vmatpush1.bf16.msra.mxu0 %v2155
    %2169 = vmatprep.subr.bf16.mxu0 0
    %2170 = vmatpush1.bf16.msra.mxu0 %v2154
    %2171 = vmatprep.subr.bf16.mxu0 0
    %2172 = vmatpush1.bf16.msra.mxu0 %v2153
    %2173 = vmatprep.subr.bf16.mxu0 0
    %2174 = vmatpush1.bf16.msra.mxu0 %v2152
    %2175 = vmatprep.subr.bf16.mxu0 0
    %2176 = vmatpush1.bf16.msra.mxu0 %v2151
    %2177 = vmatprep.subr.bf16.mxu0 0
    %2178 = vmatpush1.bf16.msra.mxu0 %v2150
    %2179 = vmatprep.subr.bf16.mxu0 0
    %2180 = vmatpush1.bf16.msra.mxu0 %v2149
    %2181 = vmatprep.subr.bf16.mxu0 0
    %2182 = vmatpush2.bf16.msra.mxu0 0
    %2183 = vmatprep.subr.bf16.mxu0 0
    %2184 = vmatpush2.bf16.msra.mxu0 0
    %2185 = vmatprep.subr.bf16.mxu0 0
    %2186 = vmatpush2.bf16.msra.mxu0 0
    %2187 = vmatprep.subr.bf16.mxu0 0
    %2188 = vmatpush2.bf16.msra.mxu0 0
    %2189 = vmatprep.subr.bf16.mxu0 0
    %2190 = vmatpush2.bf16.msra.mxu0 0
    %2191 = vmatprep.subr.bf16.mxu0 0
    %2192 = vmatpush2.bf16.msra.mxu0 0
    %2193 = vmatprep.subr.bf16.mxu0 0
    %2194 = vmatpush2.bf16.msra.mxu0 0
    %2195 = vmatprep.subr.bf16.mxu0 0
    %2196 = vmatpush2.bf16.msra.mxu0 0
    %2197 = vmatprep.mubr.bf16.mxu0 0
    %2198 = vmatmul.mubr.bf16.gmra.mxu0 %v2093
    %v2199 = vpop.f32.mrf.mxu0
    %v2200 = vadd.f32 %v2116, %v2199
    %v2201 = vpop.f32.mrf.mxu0
    %v2202 = vpop.f32.mrf.mxu0
    %v2203 = vadd.f32 %v2116, %v2202
    %v2204 = vpop.f32.mrf.mxu0
    %2205 = vmatprep.mubr.bf16.mxu0 0
    %2206 = vmatmul.mubr.bf16.gmra.mxu0 %v2094
    %v2207 = vpop.f32.mrf.mxu0
    %v2208 = vadd.f32 %v2116, %v2207
    %v2209 = vpop.f32.mrf.mxu0
    %v2210 = vpop.f32.mrf.mxu0
    %v2211 = vadd.f32 %v2116, %v2210
    %v2212 = vpop.f32.mrf.mxu0
    %2213 = vdwg.mxu0
    %v2214 = vmax.f32 %v2200, 0.0
    %v2215 = vmax.f32 %v2203, 0.0
    %v2216 = vmax.f32 %v2208, 0.0
    %v2217 = vmax.f32 %v2211, 0.0
    %v2218 = vld [vmem:[#allocation2] sm:$0xf]
    %v2219 = vld [vmem:[#allocation2 + $0x4] sm:$0xf]
    %v2220 = vld [vmem:[#allocation2 + $0x8] sm:$0xf]
    %v2221 = vld [vmem:[#allocation2 + $0xc] sm:$0xf]
    %v2222 = vld [vmem:[#allocation2 + $0x10] sm:$0xf]
    %v2223 = vld [vmem:[#allocation2 + $0x14] sm:$0xf]
    %v2224 = vld [vmem:[#allocation2 + $0x18] sm:$0xf]
    %v2225 = vld [vmem:[#allocation2 + $0x1c] sm:$0xf]
    %v2226 = vld [vmem:[#allocation2 + $0x20] sm:$0xf]
    %v2227 = vld [vmem:[#allocation2 + $0x24] sm:$0xf]
    %v2228 = vld [vmem:[#allocation2 + $0x28] sm:$0xf]
    %v2229 = vld [vmem:[#allocation2 + $0x2c] sm:$0xf]
    %v2230 = vld [vmem:[#allocation2 + $0x30] sm:$0xf]
    %v2231 = vld [vmem:[#allocation2 + $0x34] sm:$0xf]
    %v2232 = vld [vmem:[#allocation2 + $0x38] sm:$0xf]
    %v2233 = vld [vmem:[#allocation2 + $0x3c] sm:$0xf]
    %v2234 = vpack.c.bf16 %v2215, %v2214
    %v2235 = vpack.c.bf16 %v2217, %v2216
    %v2252 = vunpack.c.l.b16 %v2218
    %v2253 = vunpack.c.l.b16 %v2219
    %v2254 = vunpack.c.l.b16 %v2220
    %v2255 = vunpack.c.l.b16 %v2221
    %v2256 = vunpack.c.l.b16 %v2222
    %v2257 = vunpack.c.l.b16 %v2223
    %v2258 = vunpack.c.l.b16 %v2224
    %v2259 = vunpack.c.l.b16 %v2225
    %v2260 = vunpack.c.l.b16 %v2226
    %v2261 = vunpack.c.l.b16 %v2227
    %v2262 = vunpack.c.l.b16 %v2228
    %v2263 = vunpack.c.l.b16 %v2229
    %v2264 = vunpack.c.l.b16 %v2230
    %v2265 = vunpack.c.l.b16 %v2231
    %v2266 = vunpack.c.l.b16 %v2232
    %v2267 = vunpack.c.l.b16 %v2233
    %v2268 = vpack.c.b16 %v2253, %v2252
    %v2269 = vpack.c.b16 %v2255, %v2254
    %v2270 = vpack.c.b16 %v2257, %v2256
    %v2271 = vpack.c.b16 %v2259, %v2258
    %v2272 = vpack.c.b16 %v2261, %v2260
    %v2273 = vpack.c.b16 %v2263, %v2262
    %v2274 = vpack.c.b16 %v2265, %v2264
    %v2275 = vpack.c.b16 %v2267, %v2266
    %v2277 = vsel %vm99, %v2268, 0
    %v2280 = vsel %vm99, %v2269, 0
    %v2283 = vsel %vm99, %v2270, 0
    %v2286 = vsel %vm99, %v2271, 0
    %v2289 = vsel %vm99, %v2272, 0
    %v2292 = vsel %vm99, %v2273, 0
    %v2295 = vsel %vm99, %v2274, 0
    %v2298 = vsel %vm99, %v2275, 0
    %2300 = vmatprep.subr.bf16.mxu0 0
    %2301 = vmatpush1.bf16.msra.mxu0 0
    %2302 = vmatprep.subr.bf16.mxu0 0
    %2303 = vmatpush1.bf16.msra.mxu0 0
    %2304 = vmatprep.subr.bf16.mxu0 0
    %2305 = vmatpush1.bf16.msra.mxu0 0
    %2306 = vmatprep.subr.bf16.mxu0 0
    %2307 = vmatpush1.bf16.msra.mxu0 0
    %2308 = vmatprep.subr.bf16.mxu0 0
    %2309 = vmatpush1.bf16.msra.mxu0 0
    %2310 = vmatprep.subr.bf16.mxu0 0
    %2311 = vmatpush1.bf16.msra.mxu0 0
    %2312 = vmatprep.subr.bf16.mxu0 0
    %2313 = vmatpush1.bf16.msra.mxu0 %v2235
    %2314 = vmatprep.subr.bf16.mxu0 0
    %2315 = vmatpush1.bf16.msra.mxu0 %v2234
    %2316 = vmatprep.subr.bf16.mxu0 0
    %2317 = vmatpush2.bf16.msra.mxu0 0
    %2318 = vmatprep.subr.bf16.mxu0 0
    %2319 = vmatpush2.bf16.msra.mxu0 0
    %2320 = vmatprep.subr.bf16.mxu0 0
    %2321 = vmatpush2.bf16.msra.mxu0 0
    %2322 = vmatprep.subr.bf16.mxu0 0
    %2323 = vmatpush2.bf16.msra.mxu0 0
    %2324 = vmatprep.subr.bf16.mxu0 0
    %2325 = vmatpush2.bf16.msra.mxu0 0
    %2326 = vmatprep.subr.bf16.mxu0 0
    %2327 = vmatpush2.bf16.msra.mxu0 0
    %2328 = vmatprep.subr.bf16.mxu0 0
    %2329 = vmatpush2.bf16.msra.mxu0 0
    %2330 = vmatprep.subr.bf16.mxu0 0
    %2331 = vmatpush2.bf16.msra.mxu0 0
    %2332 = vmatprep.mubr.bf16.mxu0 0
    %2333 = vmatmul.mubr.bf16.gmra.mxu0 %v2277
    %v2334 = vpop.f32.mrf.mxu0
    %v2335 = vadd.f32 0.0, %v2334
    %v2336 = vpop.f32.mrf.mxu0
    %v2337 = vpop.f32.mrf.mxu0
    %v2338 = vadd.f32 0.0, %v2337
    %v2339 = vpop.f32.mrf.mxu0
    %2340 = vmatprep.mubr.bf16.mxu0 0
    %2341 = vmatmul.mubr.bf16.gmra.mxu0 %v2280
    %v2342 = vpop.f32.mrf.mxu0
    %v2343 = vadd.f32 0.0, %v2342
    %v2344 = vpop.f32.mrf.mxu0
    %v2345 = vpop.f32.mrf.mxu0
    %v2346 = vadd.f32 0.0, %v2345
    %v2347 = vpop.f32.mrf.mxu0
    %2348 = vmatprep.mubr.bf16.mxu0 0
    %2349 = vmatmul.mubr.bf16.gmra.mxu0 %v2283
    %v2350 = vpop.f32.mrf.mxu0
    %v2351 = vadd.f32 0.0, %v2350
    %v2352 = vpop.f32.mrf.mxu0
    %v2353 = vpop.f32.mrf.mxu0
    %v2354 = vadd.f32 0.0, %v2353
    %v2355 = vpop.f32.mrf.mxu0
    %2356 = vmatprep.mubr.bf16.mxu0 0
    %2357 = vmatmul.mubr.bf16.gmra.mxu0 %v2286
    %v2358 = vpop.f32.mrf.mxu0
    %v2359 = vadd.f32 0.0, %v2358
    %v2360 = vpop.f32.mrf.mxu0
    %v2361 = vpop.f32.mrf.mxu0
    %v2362 = vadd.f32 0.0, %v2361
    %v2363 = vpop.f32.mrf.mxu0
    %2364 = vmatprep.mubr.bf16.mxu0 0
    %2365 = vmatmul.mubr.bf16.gmra.mxu0 %v2289
    %v2366 = vpop.f32.mrf.mxu0
    %v2367 = vadd.f32 0.0, %v2366
    %v2368 = vpop.f32.mrf.mxu0
    %v2369 = vpop.f32.mrf.mxu0
    %v2370 = vadd.f32 0.0, %v2369
    %v2371 = vpop.f32.mrf.mxu0
    %2372 = vmatprep.mubr.bf16.mxu0 0
    %2373 = vmatmul.mubr.bf16.gmra.mxu0 %v2292
    %v2374 = vpop.f32.mrf.mxu0
    %v2375 = vadd.f32 0.0, %v2374
    %v2376 = vpop.f32.mrf.mxu0
    %v2377 = vpop.f32.mrf.mxu0
    %v2378 = vadd.f32 0.0, %v2377
    %v2379 = vpop.f32.mrf.mxu0
    %2380 = vmatprep.mubr.bf16.mxu0 0
    %2381 = vmatmul.mubr.bf16.gmra.mxu0 %v2295
    %v2382 = vpop.f32.mrf.mxu0
    %v2383 = vadd.f32 0.0, %v2382
    %v2384 = vpop.f32.mrf.mxu0
    %v2385 = vpop.f32.mrf.mxu0
    %v2386 = vadd.f32 0.0, %v2385
    %v2387 = vpop.f32.mrf.mxu0
    %2388 = vmatprep.mubr.bf16.mxu0 0
    %2389 = vmatmul.mubr.bf16.gmra.mxu0 %v2298
    %v2390 = vpop.f32.mrf.mxu0
    %v2391 = vadd.f32 0.0, %v2390
    %v2392 = vpop.f32.mrf.mxu0
    %v2393 = vpop.f32.mrf.mxu0
    %v2394 = vadd.f32 0.0, %v2393
    %v2395 = vpop.f32.mrf.mxu0
    %2396 = vdwg.mxu0
    %v2397 = vsel %vm157, %v2335, 0.0
    %v2398 = vadd.f32 %v2397, 0.0
    %v2399 = vsel %vm238, %v2338, 0.0
    %v2400 = vadd.f32 %v2398, %v2399
    %v2401 = vsel %vm319, %v2343, 0.0
    %v2402 = vadd.f32 %v2400, %v2401
    %v2403 = vsel %vm400, %v2346, 0.0
    %v2404 = vadd.f32 %v2402, %v2403
    %v2405 = vsel %vm481, %v2351, 0.0
    %v2406 = vadd.f32 %v2404, %v2405
    %v2407 = vsel %vm562, %v2354, 0.0
    %v2408 = vadd.f32 %v2406, %v2407
    %v2409 = vsel %vm643, %v2359, 0.0
    %v2410 = vadd.f32 %v2408, %v2409
    %v2411 = vsel %vm724, %v2362, 0.0
    %v2412 = vadd.f32 %v2410, %v2411
    %v2413 = vsel %vm805, %v2367, 0.0
    %v2414 = vadd.f32 %v2412, %v2413
    %vm2415 = vcmp.ge.s32.totalorder %v78, 63
    %vm2416 = vcmp.lt.s32.totalorder %v78, 70
    %vm2417 = vmand %vm2415, %vm2416
    %v2418 = vsel %vm2417, %v2370, 0.0
    %v2419 = vadd.f32 %v2414, %v2418
    %vm2420 = vcmp.ge.s32.totalorder %v78, 70
    %vm2421 = vcmp.lt.s32.totalorder %v78, 77
    %vm2422 = vmand %vm2420, %vm2421
    %v2423 = vsel %vm2422, %v2375, 0.0
    %v2424 = vadd.f32 %v2419, %v2423
    %vm2425 = vcmp.ge.s32.totalorder %v78, 77
    %vm2426 = vcmp.lt.s32.totalorder %v78, 84
    %vm2427 = vmand %vm2425, %vm2426
    %v2428 = vsel %vm2427, %v2378, 0.0
    %v2429 = vadd.f32 %v2424, %v2428
    %vm2430 = vcmp.ge.s32.totalorder %v78, 84
    %vm2431 = vcmp.lt.s32.totalorder %v78, 91
    %vm2432 = vmand %vm2430, %vm2431
    %v2433 = vsel %vm2432, %v2383, 0.0
    %v2434 = vadd.f32 %v2429, %v2433
    %vm2435 = vcmp.ge.s32.totalorder %v78, 91
    %vm2436 = vcmp.lt.s32.totalorder %v78, 98
    %vm2437 = vmand %vm2435, %vm2436
    %v2438 = vsel %vm2437, %v2386, 0.0
    %v2439 = vadd.f32 %v2434, %v2438
    %vm2440 = vcmp.ge.s32.totalorder %v78, 98
    %vm2441 = vcmp.lt.s32.totalorder %v78, 105
    %vm2442 = vmand %vm2440, %vm2441
    %v2443 = vsel %vm2442, %v2391, 0.0
    %v2444 = vadd.f32 %v2439, %v2443
    %vm2445 = vcmp.ge.s32.totalorder %v78, 105
    %vm2446 = vcmp.lt.s32.totalorder %v78, 112
    %vm2447 = vmand %vm2445, %vm2446
    %v2448 = vsel %vm2447, %v2394, 0.0
    %v2449 = vadd.f32 %v2444, %v2448
    %v2450 = vpack.c.bf16 %v2449, %v2449
    %v2451 = vld [vmem:[%s5] sm:$0xff]
    %v2452 = vld [vmem:[%s5 + $0x8] sm:$0xff]
    %v2453 = vld [vmem:[%s5 + $0x10] sm:$0xff]
    %v2454 = vld [vmem:[%s5 + $0x18] sm:$0xff]
    %v2455 = vld [vmem:[%s5 + $0x20] sm:$0xff]
    %v2456 = vld [vmem:[%s5 + $0x28] sm:$0xff]
    %v2457 = vld [vmem:[%s5 + $0x30] sm:$0xff]
    %v2458 = vld [vmem:[%s5 + $0x38] sm:$0xff]
    %v2459 = vld [vmem:[%s5 + $0x40] sm:$0xff]
    %v2460 = vld [vmem:[%s5 + $0x48] sm:$0xff]
    %v2461 = vld [vmem:[%s5 + $0x50] sm:$0xff]
    %v2462 = vld [vmem:[%s5 + $0x58] sm:$0xff]
    %v2463 = vld [vmem:[%s5 + $0x60] sm:$0xff]
    %v2464 = vld [vmem:[%s5 + $0x68] sm:$0xff]
    %v2465 = vld [vmem:[%s5 + $0x70] sm:$0xff]
    %v2466 = vld [vmem:[%s5 + $0x78] sm:$0xff]
    %v2467 = vld [vmem:[%s9] ss:$8 sm:$0x3]
    %v2469 = vlaneseq
    %v2470 = vshrl.u32 %v2469, 7
    %v2471 = vsub.s32 0, %v2470
    %v2472 = vrot.slane %v2467, %v2471
    %v2473 = vlaneseq
    %v2474 = vshrl.u32 %v2473, 7
    %v2475 = vsub.s32 1, %v2474
    %v2476 = vrot.slane %v2467, %v2475
    %v2495 = vunpack.c.l.b16 %v2451
    %v2496 = vunpack.c.h.b16 %v2451
    %v2497 = vunpack.c.l.b16 %v2452
    %v2498 = vunpack.c.h.b16 %v2452
    %v2499 = vunpack.c.l.b16 %v2453
    %v2500 = vunpack.c.h.b16 %v2453
    %v2501 = vunpack.c.l.b16 %v2454
    %v2502 = vunpack.c.h.b16 %v2454
    %v2503 = vunpack.c.l.b16 %v2455
    %v2504 = vunpack.c.h.b16 %v2455
    %v2505 = vunpack.c.l.b16 %v2456
    %v2506 = vunpack.c.h.b16 %v2456
    %v2507 = vunpack.c.l.b16 %v2457
    %v2508 = vunpack.c.h.b16 %v2457
    %v2509 = vunpack.c.l.b16 %v2458
    %v2510 = vunpack.c.h.b16 %v2458
    %v2511 = vunpack.c.l.b16 %v2459
    %v2512 = vunpack.c.h.b16 %v2459
    %v2513 = vunpack.c.l.b16 %v2460
    %v2514 = vunpack.c.h.b16 %v2460
    %v2515 = vunpack.c.l.b16 %v2461
    %v2516 = vunpack.c.h.b16 %v2461
    %v2517 = vunpack.c.l.b16 %v2462
    %v2518 = vunpack.c.h.b16 %v2462
    %v2519 = vunpack.c.l.b16 %v2463
    %v2520 = vunpack.c.h.b16 %v2463
    %v2521 = vunpack.c.l.b16 %v2464
    %v2522 = vunpack.c.h.b16 %v2464
    %v2523 = vunpack.c.l.b16 %v2465
    %v2524 = vunpack.c.h.b16 %v2465
    %v2525 = vunpack.c.l.b16 %v2466
    %v2526 = vunpack.c.h.b16 %v2466
    %v2527 = vpack.c.b16 %v2497, %v2495
    %v2528 = vpack.c.b16 %v2498, %v2496
    %v2529 = vpack.c.b16 %v2501, %v2499
    %v2530 = vpack.c.b16 %v2502, %v2500
    %v2531 = vpack.c.b16 %v2505, %v2503
    %v2532 = vpack.c.b16 %v2506, %v2504
    %v2533 = vpack.c.b16 %v2509, %v2507
    %v2534 = vpack.c.b16 %v2510, %v2508
    %v2535 = vpack.c.b16 %v2513, %v2511
    %v2536 = vpack.c.b16 %v2514, %v2512
    %v2537 = vpack.c.b16 %v2517, %v2515
    %v2538 = vpack.c.b16 %v2518, %v2516
    %v2539 = vpack.c.b16 %v2521, %v2519
    %v2540 = vpack.c.b16 %v2522, %v2520
    %v2541 = vpack.c.b16 %v2525, %v2523
    %v2542 = vpack.c.b16 %v2526, %v2524
    %2559 = vmatprep.subr.bf16.mxu0 %v2542
    %2560 = vmatpush1.bf16.msra.mxu0 %v2541
    %2561 = vmatprep.subr.bf16.mxu0 %v2540
    %2562 = vmatpush1.bf16.msra.mxu0 %v2539
    %2563 = vmatprep.subr.bf16.mxu0 %v2538
    %2564 = vmatpush1.bf16.msra.mxu0 %v2537
    %2565 = vmatprep.subr.bf16.mxu0 %v2536
    %2566 = vmatpush1.bf16.msra.mxu0 %v2535
    %2567 = vmatprep.subr.bf16.mxu0 %v2534
    %2568 = vmatpush1.bf16.msra.mxu0 %v2533
    %2569 = vmatprep.subr.bf16.mxu0 %v2532
    %2570 = vmatpush1.bf16.msra.mxu0 %v2531
    %2571 = vmatprep.subr.bf16.mxu0 %v2530
    %2572 = vmatpush1.bf16.msra.mxu0 %v2529
    %2573 = vmatprep.subr.bf16.mxu0 %v2528
    %2574 = vmatpush1.bf16.msra.mxu0 %v2527
    %2575 = vmatprep.subr.bf16.mxu0 0
    %2576 = vmatpush2.bf16.msra.mxu0 0
    %2577 = vmatprep.subr.bf16.mxu0 0
    %2578 = vmatpush2.bf16.msra.mxu0 0
    %2579 = vmatprep.subr.bf16.mxu0 0
    %2580 = vmatpush2.bf16.msra.mxu0 0
    %2581 = vmatprep.subr.bf16.mxu0 0
    %2582 = vmatpush2.bf16.msra.mxu0 0
    %2583 = vmatprep.subr.bf16.mxu0 0
    %2584 = vmatpush2.bf16.msra.mxu0 0
    %2585 = vmatprep.subr.bf16.mxu0 0
    %2586 = vmatpush2.bf16.msra.mxu0 0
    %2587 = vmatprep.subr.bf16.mxu0 0
    %2588 = vmatpush2.bf16.msra.mxu0 0
    %2589 = vmatprep.subr.bf16.mxu0 0
    %2590 = vmatpush2.bf16.msra.mxu0 0
    %2591 = vmatprep.mubr.bf16.mxu0 0
    %2592 = vmatmul.mubr.bf16.gmra.mxu0 %v2450
    %v2593 = vpop.f32.mrf.mxu0
    %v2594 = vadd.f32 %v2472, %v2593
    %v2595 = vpop.f32.mrf.mxu0
    %v2596 = vadd.f32 %v2476, %v2595
    %v2597 = vpop.f32.mrf.mxu0
    %v2598 = vpop.f32.mrf.mxu0
    %2599 = vdwg.mxu0
    %v2600 = vmax.f32 %v2594, 0.0
    %v2601 = vmax.f32 %v2596, 0.0
    %v2602 = vpack.c.bf16 %v2600, %v2600
    %v2603 = vpack.c.bf16 %v2601, %v2601
    %v2604 = vld [vmem:[#allocation4] sm:$0xf]
    %v2605 = vld [vmem:[#allocation4 + $0x4] sm:$0xf]
    %v2606 = vld [vmem:[#allocation4 + $0x8] sm:$0xf]
    %v2607 = vld [vmem:[#allocation4 + $0xc] sm:$0xf]
    %v2608 = vld [vmem:[#allocation4 + $0x10] sm:$0xf]
    %v2609 = vld [vmem:[#allocation4 + $0x14] sm:$0xf]
    %v2610 = vld [vmem:[#allocation4 + $0x18] sm:$0xf]
    %v2611 = vld [vmem:[#allocation4 + $0x1c] sm:$0xf]
    %v2612 = vld [vmem:[#allocation4 + $0x20] sm:$0xf]
    %v2613 = vld [vmem:[#allocation4 + $0x24] sm:$0xf]
    %v2614 = vld [vmem:[#allocation4 + $0x28] sm:$0xf]
    %v2615 = vld [vmem:[#allocation4 + $0x2c] sm:$0xf]
    %v2616 = vld [vmem:[#allocation4 + $0x30] sm:$0xf]
    %v2617 = vld [vmem:[#allocation4 + $0x34] sm:$0xf]
    %v2618 = vld [vmem:[#allocation4 + $0x38] sm:$0xf]
    %v2619 = vld [vmem:[#allocation4 + $0x3c] sm:$0xf]
    %v2620 = vld [vmem:[#allocation4 + $0x40] sm:$0xf]
    %v2621 = vld [vmem:[#allocation4 + $0x44] sm:$0xf]
    %v2622 = vld [vmem:[#allocation4 + $0x48] sm:$0xf]
    %v2623 = vld [vmem:[#allocation4 + $0x4c] sm:$0xf]
    %v2624 = vld [vmem:[#allocation4 + $0x50] sm:$0xf]
    %v2625 = vld [vmem:[#allocation4 + $0x54] sm:$0xf]
    %v2626 = vld [vmem:[#allocation4 + $0x58] sm:$0xf]
    %v2627 = vld [vmem:[#allocation4 + $0x5c] sm:$0xf]
    %v2628 = vld [vmem:[#allocation4 + $0x60] sm:$0xf]
    %v2629 = vld [vmem:[#allocation4 + $0x64] sm:$0xf]
    %v2630 = vld [vmem:[#allocation4 + $0x68] sm:$0xf]
    %v2631 = vld [vmem:[#allocation4 + $0x6c] sm:$0xf]
    %v2632 = vld [vmem:[#allocation4 + $0x70] sm:$0xf]
    %v2633 = vld [vmem:[#allocation4 + $0x74] sm:$0xf]
    %v2634 = vld [vmem:[#allocation4 + $0x78] sm:$0xf]
    %v2635 = vld [vmem:[#allocation4 + $0x7c] sm:$0xf]
    %v2636 = vld [vmem:[%s9 + $0x1] ss:$0 sm:$0xff]
    %v2669 = vunpack.c.l.b16 %v2604
    %v2670 = vunpack.c.l.b16 %v2605
    %v2671 = vunpack.c.l.b16 %v2606
    %v2672 = vunpack.c.l.b16 %v2607
    %v2673 = vunpack.c.l.b16 %v2608
    %v2674 = vunpack.c.l.b16 %v2609
    %v2675 = vunpack.c.l.b16 %v2610
    %v2676 = vunpack.c.l.b16 %v2611
    %v2677 = vunpack.c.l.b16 %v2612
    %v2678 = vunpack.c.l.b16 %v2613
    %v2679 = vunpack.c.l.b16 %v2614
    %v2680 = vunpack.c.l.b16 %v2615
    %v2681 = vunpack.c.l.b16 %v2616
    %v2682 = vunpack.c.l.b16 %v2617
    %v2683 = vunpack.c.l.b16 %v2618
    %v2684 = vunpack.c.l.b16 %v2619
    %v2685 = vunpack.c.l.b16 %v2620
    %v2686 = vunpack.c.l.b16 %v2621
    %v2687 = vunpack.c.l.b16 %v2622
    %v2688 = vunpack.c.l.b16 %v2623
    %v2689 = vunpack.c.l.b16 %v2624
    %v2690 = vunpack.c.l.b16 %v2625
    %v2691 = vunpack.c.l.b16 %v2626
    %v2692 = vunpack.c.l.b16 %v2627
    %v2693 = vunpack.c.l.b16 %v2628
    %v2694 = vunpack.c.l.b16 %v2629
    %v2695 = vunpack.c.l.b16 %v2630
    %v2696 = vunpack.c.l.b16 %v2631
    %v2697 = vunpack.c.l.b16 %v2632
    %v2698 = vunpack.c.l.b16 %v2633
    %v2699 = vunpack.c.l.b16 %v2634
    %v2700 = vunpack.c.l.b16 %v2635
    %v2701 = vpack.c.b16 %v2670, %v2669
    %v2702 = vpack.c.b16 %v2672, %v2671
    %v2703 = vpack.c.b16 %v2674, %v2673
    %v2704 = vpack.c.b16 %v2676, %v2675
    %v2705 = vpack.c.b16 %v2678, %v2677
    %v2706 = vpack.c.b16 %v2680, %v2679
    %v2707 = vpack.c.b16 %v2682, %v2681
    %v2708 = vpack.c.b16 %v2684, %v2683
    %v2709 = vpack.c.b16 %v2686, %v2685
    %v2710 = vpack.c.b16 %v2688, %v2687
    %v2711 = vpack.c.b16 %v2690, %v2689
    %v2712 = vpack.c.b16 %v2692, %v2691
    %v2713 = vpack.c.b16 %v2694, %v2693
    %v2714 = vpack.c.b16 %v2696, %v2695
    %v2715 = vpack.c.b16 %v2698, %v2697
    %v2716 = vpack.c.b16 %v2700, %v2699
    %2733 = vmatprep.subr.bf16.mxu0 0
    %2734 = vmatpush1.bf16.msra.mxu0 %v2708
    %2735 = vmatprep.subr.bf16.mxu0 0
    %2736 = vmatpush1.bf16.msra.mxu0 %v2707
    %2737 = vmatprep.subr.bf16.mxu0 0
    %2738 = vmatpush1.bf16.msra.mxu0 %v2706
    %2739 = vmatprep.subr.bf16.mxu0 0
    %2740 = vmatpush1.bf16.msra.mxu0 %v2705
    %2741 = vmatprep.subr.bf16.mxu0 0
    %2742 = vmatpush1.bf16.msra.mxu0 %v2704
    %2743 = vmatprep.subr.bf16.mxu0 0
    %2744 = vmatpush1.bf16.msra.mxu0 %v2703
    %2745 = vmatprep.subr.bf16.mxu0 0
    %2746 = vmatpush1.bf16.msra.mxu0 %v2702
    %2747 = vmatprep.subr.bf16.mxu0 0
    %2748 = vmatpush1.bf16.msra.mxu0 %v2701
    %2749 = vmatprep.subr.bf16.mxu0 0
    %2750 = vmatpush2.bf16.msra.mxu0 %v2716
    %2751 = vmatprep.subr.bf16.mxu0 0
    %2752 = vmatpush2.bf16.msra.mxu0 %v2715
    %2753 = vmatprep.subr.bf16.mxu0 0
    %2754 = vmatpush2.bf16.msra.mxu0 %v2714
    %2755 = vmatprep.subr.bf16.mxu0 0
    %2756 = vmatpush2.bf16.msra.mxu0 %v2713
    %2757 = vmatprep.subr.bf16.mxu0 0
    %2758 = vmatpush2.bf16.msra.mxu0 %v2712
    %2759 = vmatprep.subr.bf16.mxu0 0
    %2760 = vmatpush2.bf16.msra.mxu0 %v2711
    %2761 = vmatprep.subr.bf16.mxu0 0
    %2762 = vmatpush2.bf16.msra.mxu0 %v2710
    %2763 = vmatprep.subr.bf16.mxu0 0
    %2764 = vmatpush2.bf16.msra.mxu0 %v2709
    %2765 = vmatprep.mubr.bf16.mxu0 %v2603
    %2766 = vmatmul.mubr.bf16.gmra.mxu0 %v2602
    %v2767 = vpop.f32.mrf.mxu0
    %v2768 = vadd.f32 %v2636, %v2767
    %v2769 = vpop.f32.mrf.mxu0
    %v2770 = vpop.f32.mrf.mxu0
    %v2771 = vpop.f32.mrf.mxu0
    %2772 = vdwg.mxu0
    %v2773 = vmax.f32 %v2768, 0.0
    %v2774 = vpack.c.bf16 %v2773, %v2773
    %v2775 = vld [vmem:[%s7] sm:$0xf]
    %v2776 = vld [vmem:[%s7 + $0x4] sm:$0xf]
    %v2777 = vld [vmem:[%s7 + $0x8] sm:$0xf]
    %v2778 = vld [vmem:[%s7 + $0xc] sm:$0xf]
    %v2779 = vld [vmem:[%s7 + $0x10] sm:$0xf]
    %v2780 = vld [vmem:[%s7 + $0x14] sm:$0xf]
    %v2781 = vld [vmem:[%s7 + $0x18] sm:$0xf]
    %v2782 = vld [vmem:[%s7 + $0x1c] sm:$0xf]
    %v2783 = vld [vmem:[%s7 + $0x20] sm:$0xf]
    %v2784 = vld [vmem:[%s7 + $0x24] sm:$0xf]
    %v2785 = vld [vmem:[%s7 + $0x28] sm:$0xf]
    %v2786 = vld [vmem:[%s7 + $0x2c] sm:$0xf]
    %v2787 = vld [vmem:[%s7 + $0x30] sm:$0xf]
    %v2788 = vld [vmem:[%s7 + $0x34] sm:$0xf]
    %v2789 = vld [vmem:[%s7 + $0x38] sm:$0xf]
    %v2790 = vld [vmem:[%s7 + $0x3c] sm:$0xf]
    %v2791 = vld [vmem:[%s9 + $0x2] ss:$0 sm:$0xff]
    %v2808 = vunpack.c.l.b16 %v2775
    %v2809 = vunpack.c.l.b16 %v2776
    %v2810 = vunpack.c.l.b16 %v2777
    %v2811 = vunpack.c.l.b16 %v2778
    %v2812 = vunpack.c.l.b16 %v2779
    %v2813 = vunpack.c.l.b16 %v2780
    %v2814 = vunpack.c.l.b16 %v2781
    %v2815 = vunpack.c.l.b16 %v2782
    %v2816 = vunpack.c.l.b16 %v2783
    %v2817 = vunpack.c.l.b16 %v2784
    %v2818 = vunpack.c.l.b16 %v2785
    %v2819 = vunpack.c.l.b16 %v2786
    %v2820 = vunpack.c.l.b16 %v2787
    %v2821 = vunpack.c.l.b16 %v2788
    %v2822 = vunpack.c.l.b16 %v2789
    %v2823 = vunpack.c.l.b16 %v2790
    %v2824 = vpack.c.b16 %v2809, %v2808
    %v2825 = vpack.c.b16 %v2811, %v2810
    %v2826 = vpack.c.b16 %v2813, %v2812
    %v2827 = vpack.c.b16 %v2815, %v2814
    %v2828 = vpack.c.b16 %v2817, %v2816
    %v2829 = vpack.c.b16 %v2819, %v2818
    %v2830 = vpack.c.b16 %v2821, %v2820
    %v2831 = vpack.c.b16 %v2823, %v2822
    %2840 = vmatprep.subr.bf16.mxu0 0
    %2841 = vmatpush1.bf16.msra.mxu0 %v2831
    %2842 = vmatprep.subr.bf16.mxu0 0
    %2843 = vmatpush1.bf16.msra.mxu0 %v2830
    %2844 = vmatprep.subr.bf16.mxu0 0
    %2845 = vmatpush1.bf16.msra.mxu0 %v2829
    %2846 = vmatprep.subr.bf16.mxu0 0
    %2847 = vmatpush1.bf16.msra.mxu0 %v2828
    %2848 = vmatprep.subr.bf16.mxu0 0
    %2849 = vmatpush1.bf16.msra.mxu0 %v2827
    %2850 = vmatprep.subr.bf16.mxu0 0
    %2851 = vmatpush1.bf16.msra.mxu0 %v2826
    %2852 = vmatprep.subr.bf16.mxu0 0
    %2853 = vmatpush1.bf16.msra.mxu0 %v2825
    %2854 = vmatprep.subr.bf16.mxu0 0
    %2855 = vmatpush1.bf16.msra.mxu0 %v2824
    %2856 = vmatprep.subr.bf16.mxu0 0
    %2857 = vmatpush2.bf16.msra.mxu0 0
    %2858 = vmatprep.subr.bf16.mxu0 0
    %2859 = vmatpush2.bf16.msra.mxu0 0
    %2860 = vmatprep.subr.bf16.mxu0 0
    %2861 = vmatpush2.bf16.msra.mxu0 0
    %2862 = vmatprep.subr.bf16.mxu0 0
    %2863 = vmatpush2.bf16.msra.mxu0 0
    %2864 = vmatprep.subr.bf16.mxu0 0
    %2865 = vmatpush2.bf16.msra.mxu0 0
    %2866 = vmatprep.subr.bf16.mxu0 0
    %2867 = vmatpush2.bf16.msra.mxu0 0
    %2868 = vmatprep.subr.bf16.mxu0 0
    %2869 = vmatpush2.bf16.msra.mxu0 0
    %2870 = vmatprep.subr.bf16.mxu0 0
    %2871 = vmatpush2.bf16.msra.mxu0 0
    %2872 = vmatprep.mubr.bf16.mxu0 0
    %2873 = vmatmul.mubr.bf16.gmra.mxu0 %v2774
    %v2874 = vpop.f32.mrf.mxu0
    %v2875 = vadd.f32 %v2791, %v2874
    %v2876 = vpop.f32.mrf.mxu0
    %v2877 = vpop.f32.mrf.mxu0
    %v2878 = vpop.f32.mrf.mxu0
    %2879 = vdwg.mxu0
    %v2880 = vmax.f32 %v2875, 0.0
    %v2881 = vpack.c.bf16 %v2880, %v2880
    %v2882 = vld [vmem:[#allocation6] sm:$0xf]
    %v2883 = vld [vmem:[#allocation6 + $0x4] sm:$0xf]
    %v2884 = vld [vmem:[#allocation6 + $0x8] sm:$0xf]
    %v2885 = vld [vmem:[#allocation6 + $0xc] sm:$0xf]
    %v2886 = vld [vmem:[#allocation6 + $0x10] sm:$0xf]
    %v2887 = vld [vmem:[#allocation6 + $0x14] sm:$0xf]
    %v2888 = vld [vmem:[#allocation6 + $0x18] sm:$0xf]
    %v2889 = vld [vmem:[#allocation6 + $0x1c] sm:$0xf]
    %v2890 = vld [vmem:[#allocation6 + $0x20] sm:$0xf]
    %v2891 = vld [vmem:[#allocation6 + $0x24] sm:$0xf]
    %v2892 = vld [vmem:[#allocation6 + $0x28] sm:$0xf]
    %v2893 = vld [vmem:[#allocation6 + $0x2c] sm:$0xf]
    %v2894 = vld [vmem:[#allocation6 + $0x30] sm:$0xf]
    %v2895 = vld [vmem:[#allocation6 + $0x34] sm:$0xf]
    %v2896 = vld [vmem:[#allocation6 + $0x38] sm:$0xf]
    %v2897 = vld [vmem:[#allocation6 + $0x3c] sm:$0xf]
    %v2898 = vld [vmem:[%s9 + $0x3] ss:$0 sm:$0xff]
    %v2915 = vunpack.c.l.b16 %v2882
    %v2916 = vunpack.c.l.b16 %v2883
    %v2917 = vunpack.c.l.b16 %v2884
    %v2918 = vunpack.c.l.b16 %v2885
    %v2919 = vunpack.c.l.b16 %v2886
    %v2920 = vunpack.c.l.b16 %v2887
    %v2921 = vunpack.c.l.b16 %v2888
    %v2922 = vunpack.c.l.b16 %v2889
    %v2923 = vunpack.c.l.b16 %v2890
    %v2924 = vunpack.c.l.b16 %v2891
    %v2925 = vunpack.c.l.b16 %v2892
    %v2926 = vunpack.c.l.b16 %v2893
    %v2927 = vunpack.c.l.b16 %v2894
    %v2928 = vunpack.c.l.b16 %v2895
    %v2929 = vunpack.c.l.b16 %v2896
    %v2930 = vunpack.c.l.b16 %v2897
    %v2931 = vpack.c.b16 %v2916, %v2915
    %v2932 = vpack.c.b16 %v2918, %v2917
    %v2933 = vpack.c.b16 %v2920, %v2919
    %v2934 = vpack.c.b16 %v2922, %v2921
    %v2935 = vpack.c.b16 %v2924, %v2923
    %v2936 = vpack.c.b16 %v2926, %v2925
    %v2937 = vpack.c.b16 %v2928, %v2927
    %v2938 = vpack.c.b16 %v2930, %v2929
    %2947 = vmatprep.subr.bf16.mxu0 0
    %2948 = vmatpush1.bf16.msra.mxu0 %v2938
    %2949 = vmatprep.subr.bf16.mxu0 0
    %2950 = vmatpush1.bf16.msra.mxu0 %v2937
    %2951 = vmatprep.subr.bf16.mxu0 0
    %2952 = vmatpush1.bf16.msra.mxu0 %v2936
    %2953 = vmatprep.subr.bf16.mxu0 0
    %2954 = vmatpush1.bf16.msra.mxu0 %v2935
    %2955 = vmatprep.subr.bf16.mxu0 0
    %2956 = vmatpush1.bf16.msra.mxu0 %v2934
    %2957 = vmatprep.subr.bf16.mxu0 0
    %2958 = vmatpush1.bf16.msra.mxu0 %v2933
    %2959 = vmatprep.subr.bf16.mxu0 0
    %2960 = vmatpush1.bf16.msra.mxu0 %v2932
    %2961 = vmatprep.subr.bf16.mxu0 0
    %2962 = vmatpush1.bf16.msra.mxu0 %v2931
    %2963 = vmatprep.subr.bf16.mxu0 0
    %2964 = vmatpush2.bf16.msra.mxu0 0
    %2965 = vmatprep.subr.bf16.mxu0 0
    %2966 = vmatpush2.bf16.msra.mxu0 0
    %2967 = vmatprep.subr.bf16.mxu0 0
    %2968 = vmatpush2.bf16.msra.mxu0 0
    %2969 = vmatprep.subr.bf16.mxu0 0
    %2970 = vmatpush2.bf16.msra.mxu0 0
    %2971 = vmatprep.subr.bf16.mxu0 0
    %2972 = vmatpush2.bf16.msra.mxu0 0
    %2973 = vmatprep.subr.bf16.mxu0 0
    %2974 = vmatpush2.bf16.msra.mxu0 0
    %2975 = vmatprep.subr.bf16.mxu0 0
    %2976 = vmatpush2.bf16.msra.mxu0 0
    %2977 = vmatprep.subr.bf16.mxu0 0
    %2978 = vmatpush2.bf16.msra.mxu0 0
    %2979 = vmatprep.mubr.bf16.mxu0 0
    %2980 = vmatmul.mubr.bf16.gmra.mxu0 %v2881
    %v2981 = vpop.f32.mrf.mxu0
    %v2982 = vadd.f32 %v2898, %v2981
    %v2983 = vpop.f32.mrf.mxu0
    %v2984 = vpop.f32.mrf.mxu0
    %v2985 = vpop.f32.mrf.mxu0
    %2986 = vdwg.mxu0
    %vm2987 = vcmp.lt.s32.totalorder %v78, 6
    %v2988 = vsel %vm2987, %v2982, -1e+30
    %2989 = vmax.xlane.f32.xlu0 %v2988
    %v2990 = vpop.xlane.xlu0 %2989
    %v2991 = vsub.f32 %v2988, %v2990
    %v2992 = vmul.f32 %v2991, 1.442695
    %v2993 = vpow.pop %v2992
    %2994 = vadd.xlane.f32.xlu0 %v2993
    %v2995 = vpop.xlane.xlu0 %2994
    %v2996 = vrcp.pop %v2995
    %v2997 = vmul.f32 %v2993, %v2996
    %v2998 = vmax.f32 %v2982, 0.0
    %v2999 = vsel %vm2987, %v2997, %v2998
    %3000 = vst [vmem:[%s10] sm:$0xff] %v2999
    // Predicated region
    $region54: #{cnn_forward.1} parent=1 // pred_check
      _
    $region55: #{cnn_forward.1} parent=1 // pred_check_branch
      %3002 = sbr.rel (0) target = $region57
    $region56: #{cnn_forward.1} parent=1 // pred_region
      _
    $region57: #{cnn_forward.1} parent=1 // pred_fallthru
      _
    // Predicated region
    $region58: #{cnn_forward.1} parent=1 // pred_check
      _
    $region59: #{cnn_forward.1} parent=1 // pred_check_branch
      %3004 = sbr.rel (0) target = $region61
    $region60: #{cnn_forward.1} parent=1 // pred_region
      _
    $region61: #{cnn_forward.1} parent=1 // pred_fallthru
      _
    %3005 = vsyncpa [#allocation3], 1
    %3006 = vsyncpa [#allocation5], 1

</llo_original>
